<compile_context>
chip_gen: v6e
topology: v6e:2x2x1
jax: 0.10.0
libtpu: 0.0.40
codegen_flags: <defaults>
</compile_context>

<pallas_src>
import functools
import math

import jax
import jax.numpy as jnp
from jax.experimental import pallas as pl
from jax.experimental.pallas import tpu as pltpu


def _round_up(x, m):
    return ((x + m - 1) // m) * m


def _pick_tile(total, candidates):
    for c in candidates:
        if c <= total and total % c == 0:
            return c
    return total


def _pick_batch_tile(b_pad):
    # Prefer a tile that yields >= 2 grid steps so both TensorCores (v7x) get work.
    for t in (512, 256, 128, 64, 32, 16, 8):
        if t <= b_pad and b_pad % t == 0 and b_pad // t >= 2:
            return t
    return b_pad


def _leaky_relu(x):
    # max(x, 0.2x): 2 VPU ops vs cmp+mul+select.
    return jnp.maximum(x, 0.2 * x)


# ---------------------------------------------------------------------------
# Shared backbone compute: Linear+LeakyReLU, then 3x (Linear+BN+LeakyReLU).
# Returns the f32 (b_pad, 1024) hidden activation.
# ---------------------------------------------------------------------------
def _backbone_compute(batch_real, bn_mode,
                      x_ref,
                      w1_ref, b1_ref,
                      w2_ref, b2_ref, g2_ref, be2_ref,
                      w3_ref, b3_ref, g3_ref, be3_ref,
                      w4_ref, b4_ref, g4_ref, be4_ref):
    eps = 1e-5
    inv_b = 1.0 / float(batch_real)
    b_pad = x_ref.shape[0]

    if bn_mode == "mask":
        # ragged batch: mask padded rows out of the BN statistics
        row = jax.lax.broadcasted_iota(jnp.int32, (b_pad, 1), 0)
        mask = (row < batch_real).astype(jnp.float32)
    else:
        mask = None

    # Block 1: Linear + LeakyReLU (no normalization). bf16 matmul, f32 acc.
    h = jnp.dot(x_ref[...], w1_ref[...], preferred_element_type=jnp.float32)
    h = _leaky_relu(h + b1_ref[...])

    def bn_block(h, w_ref, b_ref, g_ref, be_ref):
        h = jnp.dot(h.astype(jnp.bfloat16), w_ref[...],
                    preferred_element_type=jnp.float32) + b_ref[...]
        # Fused moments in one pass over h.
        if bn_mode == "full":
            s = jnp.sum(h, axis=0, keepdims=True)
            ss = jnp.sum(h * h, axis=0, keepdims=True)
        elif bn_mode == "slice":
            hv = h[:batch_real]                       # static, sublane-aligned slice
            s = jnp.sum(hv, axis=0, keepdims=True)
            ss = jnp.sum(hv * hv, axis=0, keepdims=True)
        else:                                          # "mask"
            hm = h * mask
            s = jnp.sum(hm, axis=0, keepdims=True)
            ss = jnp.sum(hm * h, axis=0, keepdims=True)
        mean = s * inv_b
        # biased variance (PyTorch training); clamp the E[x^2]-mean^2
        # cancellation so rsqrt never sees a negative value.
        var = jnp.maximum(ss * inv_b - mean * mean, 0.0)
        scale = g_ref[...] * jax.lax.rsqrt(var + eps)
        h = (h - mean) * scale + be_ref[...]
        return _leaky_relu(h)

    h = bn_block(h, w2_ref, b2_ref, g2_ref, be2_ref)
    h = bn_block(h, w3_ref, b3_ref, g3_ref, be3_ref)
    h = bn_block(h, w4_ref, b4_ref, g4_ref, be4_ref)
    return h


def _sigmoid(o):
    # exact sigmoid (EUP exp + divide); keeps outputs strictly in [0, 1]
    return 1.0 / (1.0 + jnp.exp(-o))


# ---------------------------------------------------------------------------
# Fused kernel: whole forward (backbone + head + sigmoid) in one call.
# ---------------------------------------------------------------------------
def _generator_fused_kernel(batch_real, bn_mode,
                            x_ref,
                            w1_ref, b1_ref,
                            w2_ref, b2_ref, g2_ref, be2_ref,
                            w3_ref, b3_ref, g3_ref, be3_ref,
                            w4_ref, b4_ref, g4_ref, be4_ref,
                            w5_ref, b5_ref,
                            out_ref):
    h = _backbone_compute(batch_real, bn_mode,
                          x_ref,
                          w1_ref, b1_ref,
                          w2_ref, b2_ref, g2_ref, be2_ref,
                          w3_ref, b3_ref, g3_ref, be3_ref,
                          w4_ref, b4_ref, g4_ref, be4_ref)
    o = jnp.dot(h.astype(jnp.bfloat16), w5_ref[...],
                preferred_element_type=jnp.float32) + b5_ref[...]
    out_ref[...] = _sigmoid(o)


# ---------------------------------------------------------------------------
# Fallback kernels: backbone only (whole batch) + gridded head.
# ---------------------------------------------------------------------------
def _backbone_kernel(batch_real, bn_mode,
                     x_ref,
                     w1_ref, b1_ref,
                     w2_ref, b2_ref, g2_ref, be2_ref,
                     w3_ref, b3_ref, g3_ref, be3_ref,
                     w4_ref, b4_ref, g4_ref, be4_ref,
                     h_ref):
    h = _backbone_compute(batch_real, bn_mode,
                          x_ref,
                          w1_ref, b1_ref,
                          w2_ref, b2_ref, g2_ref, be2_ref,
                          w3_ref, b3_ref, g3_ref, be3_ref,
                          w4_ref, b4_ref, g4_ref, be4_ref)
    h_ref[...] = h.astype(jnp.bfloat16)


def _head_kernel(h_ref, w_ref, b_ref, out_ref):
    o = jnp.dot(h_ref[...], w_ref[...],
                preferred_element_type=jnp.float32) + b_ref[...]
    out_ref[...] = _sigmoid(o)


# ---------------------------------------------------------------------------
# VMEM budgeting (generous working-set estimates, clamped under v7x 64 MiB)
# ---------------------------------------------------------------------------
_V7X_SAFE_CAP = 44 << 20    # leave ~20 MiB headroom under v7x's 64 MiB physical VMEM


def _clamp_vmem(need_bytes, cap=_V7X_SAFE_CAP):
    # never go below the default scoped limit (32 MiB) -> only raise when needed
    return int(min(max(int(need_bytes), 32 << 20), cap))


def _fused_vmem_need(b_pad, k_pad, out_pad):
    w = (k_pad * 128 + 128 * 256 + 256 * 512 + 512 * 1024 + 1024 * out_pad) * 2
    vecs = (128 + out_pad + 3 * (256 + 512 + 1024)) * 4 * 2
    x = b_pad * k_pad * 2
    acts = 6 * b_pad * 1024 * 4          # live f32 temporaries at the widest layer
    out = 2 * b_pad * out_pad * 4        # pre-sigmoid temp + output buffer
    return w + vecs + x + acts + out


def _backbone_vmem_need(b_pad, k_pad):
    w = (k_pad * 128 + 128 * 256 + 256 * 512 + 512 * 1024) * 2
    vecs = (128 + 3 * (256 + 512 + 1024)) * 4 * 2
    x = b_pad * k_pad * 2
    acts = 6 * b_pad * 1024 * 4
    out = 2 * b_pad * 1024 * 2
    return w + vecs + x + acts + out


# ---------------------------------------------------------------------------
# Parameters (zero-padded to tile-aligned shapes; numerically a no-op).
# ---------------------------------------------------------------------------
def init_generator_params(key, out_shape, dim_input=128, num_classes=10):
    out_prod = int(math.prod(out_shape))
    k_in = dim_input + num_classes
    k_pad = _round_up(k_in, 128)
    out_pad = _round_up(out_prod, 128)

    dims = [(k_in, 128), (128, 256), (256, 512), (512, 1024), (1024, out_prod)]
    padded = [(k_pad, 128), (128, 256), (256, 512), (512, 1024), (1024, out_pad)]

    params = {}
    keys = jax.random.split(key, 2 * len(dims) + 1)
    # label embedding table ~ N(0,1), like nn.Embedding default init
    params["emb"] = jax.random.normal(keys[0], (num_classes, num_classes),
                                      dtype=jnp.float32)
    for i, ((fin, fout), (pin, pout)) in enumerate(zip(dims, padded)):
        bound = 1.0 / math.sqrt(fin)
        # stored as (in, out) == transpose of PyTorch's (out, in)
        w = jax.random.uniform(keys[2 * i + 1], (fin, fout), jnp.float32,
                               -bound, bound)
        b = jax.random.uniform(keys[2 * i + 2], (1, fout), jnp.float32,
                               -bound, bound)
        w = jnp.pad(w, ((0, pin - fin), (0, pout - fout)))   # zero-pad: no-op
        b = jnp.pad(b, ((0, 0), (0, pout - fout)))
        params[f"w{i + 1}"] = w.astype(jnp.bfloat16)          # bf16 weights
        params[f"b{i + 1}"] = b                               # f32 bias
    for i, fout in zip((2, 3, 4), (256, 512, 1024)):
        params[f"g{i}"] = jnp.ones((1, fout), jnp.float32)
        params[f"be{i}"] = jnp.zeros((1, fout), jnp.float32)
    return params


# ---------------------------------------------------------------------------
# Forward
# ---------------------------------------------------------------------------
@functools.partial(jax.jit, static_argnames=("out_shape",))
def generator_forward(params, z, y, out_shape):
    """z: (B, dim_input) float32, y: (B,) int32 labels."""
    B = z.shape[0]
    out_prod = int(math.prod(out_shape))
    out_pad = params["w5"].shape[1]         # 128-padded at init
    k_pad = params["w1"].shape[0]           # 128-padded at init

    # glue: embedding lookup + concat + alignment padding
    y_emb = jnp.take(params["emb"], y, axis=0)             # (B, num_classes)
    x = jnp.concatenate([z, y_emb], axis=1)                # (B, dim_input + nc)
    k_in = x.shape[1]
    b_pad = _round_up(B, 8) if B <= 128 else _round_up(B, 128)
    x = jnp.pad(x, ((0, b_pad - B), (0, k_pad - k_in))).astype(jnp.bfloat16)

    # BN-statistic handling for the padded batch rows
    if B == b_pad:
        bn_mode = "full"      # no padding rows at all
    elif B % 8 == 0:
        bn_mode = "slice"     # sublane-aligned static slice, no mask multiplies
    else:
        bn_mode = "mask"      # ragged batch: mask padded rows out of the moments

    vmem = pl.BlockSpec(memory_space=pltpu.MemorySpace.VMEM)
    backbone_ops = (
        x,
        params["w1"], params["b1"],
        params["w2"], params["b2"], params["g2"], params["be2"],
        params["w3"], params["b3"], params["g3"], params["be3"],
        params["w4"], params["b4"], params["g4"], params["be4"],
    )

    fused_need = _fused_vmem_need(b_pad, k_pad, out_pad)
    if fused_need <= (36 << 20):
        # --- fused path: one launch, no h round-trip through HBM ---
        ops = backbone_ops + (params["w5"], params["b5"])
        flat = pl.pallas_call(
            functools.partial(_generator_fused_kernel, B, bn_mode),
            out_shape=jax.ShapeDtypeStruct((b_pad, out_pad), jnp.float32),
            in_specs=[vmem] * len(ops),
            out_specs=vmem,
            compiler_params=pltpu.CompilerParams(
                vmem_limit_bytes=_clamp_vmem(fused_need + (4 << 20))),
        )(*ops)
    else:
        # --- fallback: backbone (whole batch for BN stats) + gridded head ---
        # TODO(synk): batch-tile the backbone with a two-pass BN reduction for very
        # large b_pad so it also fits v7x's 64 MiB VMEM; whole-batch residency assumed here.
        bb_need = _backbone_vmem_need(b_pad, k_pad)
        h = pl.pallas_call(
            functools.partial(_backbone_kernel, B, bn_mode),
            out_shape=jax.ShapeDtypeStruct((b_pad, 1024), jnp.bfloat16),
            in_specs=[vmem] * len(backbone_ops),
            out_specs=vmem,
            compiler_params=pltpu.CompilerParams(
                vmem_limit_bytes=_clamp_vmem(bb_need + (4 << 20), cap=100 << 20)),
        )(*backbone_ops)

        tm = _pick_batch_tile(b_pad)
        w5_bytes = 1024 * out_pad * 2
        if w5_bytes <= (12 << 20):
            # w5 VMEM-resident: 1-D grid over batch; w5/b5 block index is constant,
            # so they are DMA'd once (per core) instead of once per batch tile.
            blk_need = (2 * tm * 1024 * 2 + 2 * w5_bytes + 2 * out_pad * 4
                        + 2 * tm * out_pad * 4 + (2 << 20))
            flat = pl.pallas_call(
                _head_kernel,
                out_shape=jax.ShapeDtypeStruct((b_pad, out_pad), jnp.float32),
                grid=(b_pad // tm,),
                in_specs=[
                    pl.BlockSpec((tm, 1024), lambda i: (i, 0)),
                    pl.BlockSpec((1024, out_pad), lambda i: (0, 0)),
                    pl.BlockSpec((1, out_pad), lambda i: (0, 0)),
                ],
                out_specs=pl.BlockSpec((tm, out_pad), lambda i: (i, 0)),
                compiler_params=pltpu.CompilerParams(
                    dimension_semantics=("parallel",),
                    vmem_limit_bytes=_clamp_vmem(blk_need)),
            )(h, params["w5"], params["b5"])
        else:
            # huge output layer: tile w5 columns; grid ordered (out outer, batch
            # inner) so the big w5 tile stays put and only the small h tile is re-fetched.
            tn = _pick_tile(out_pad, (2048, 1024, 512, 256, 128))
            blk_need = (2 * tm * 1024 * 2 + 2 * 1024 * tn * 2 + 2 * tn * 4
                        + 2 * tm * tn * 4 + (2 << 20))
            flat = pl.pallas_call(
                _head_kernel,
                out_shape=jax.ShapeDtypeStruct((b_pad, out_pad), jnp.float32),
                grid=(out_pad // tn, b_pad // tm),
                in_specs=[
                    pl.BlockSpec((tm, 1024), lambda j, i: (i, 0)),
                    pl.BlockSpec((1024, tn), lambda j, i: (0, j)),
                    pl.BlockSpec((1, tn), lambda j, i: (0, j)),
                ],
                out_specs=pl.BlockSpec((tm, tn), lambda j, i: (i, j)),
                compiler_params=pltpu.CompilerParams(
                    dimension_semantics=("parallel", "parallel"),
                    vmem_limit_bytes=_clamp_vmem(blk_need)),
            )(h, params["w5"], params["b5"])

    # glue: drop alignment padding (skipped entirely when it is a no-op),
    # then img.view(B, *out_shape).
    if B == b_pad and out_prod == out_pad:
        return flat.reshape((B,) + tuple(out_shape))
    return flat[:B, :out_prod].reshape((B,) + tuple(out_shape))


# ---------------------------------------------------------------------------
# Pure-JAX reference (same bf16 weights, f32 math) for a sanity check.
# ---------------------------------------------------------------------------
def generator_reference(params, z, y, out_shape):
    y_emb = jnp.take(params["emb"], y, axis=0)
    x = jnp.concatenate([z, y_emb], axis=1)
    k_in = x.shape[1]
    h = x @ params["w1"].astype(jnp.float32)[:k_in, :] + params["b1"]
    h = jnp.maximum(h, 0.2 * h)
    for i in (2, 3, 4):
        h = h @ params[f"w{i}"].astype(jnp.float32) + params[f"b{i}"]
        mean = jnp.mean(h, axis=0, keepdims=True)
        var = jnp.mean(jnp.square(h - mean), axis=0, keepdims=True)
        h = (h - mean) * jax.lax.rsqrt(var + 1e-5) * params[f"g{i}"] + params[f"be{i}"]
        h = jnp.maximum(h, 0.2 * h)
    out_prod = int(math.prod(out_shape))
    o = h @ params["w5"].astype(jnp.float32)[:, :out_prod] + params["b5"][:, :out_prod]
    return jax.nn.sigmoid(o).reshape((z.shape[0],) + tuple(out_shape))


if __name__ == "__main__":
    # small, forward-consistent shapes
    B = 4
    dim_input = 16
    num_classes = 10
    out_shape = (1, 8, 8)   # (C, H, W); prod = 64 (padded to 128 internally)

    key = jax.random.PRNGKey(0)
    k_param, k_z, k_y = jax.random.split(key, 3)

    params = init_generator_params(k_param, out_shape, dim_input, num_classes)
    z = jax.random.normal(k_z, (B, dim_input), dtype=jnp.float32)
    y = jax.random.randint(k_y, (B,), 0, num_classes, dtype=jnp.int32)

    img = generator_forward(params, z, y, out_shape)
    img = jax.block_until_ready(img)

    assert img.shape == (B,) + out_shape, img.shape
    assert img.dtype == jnp.float32
    assert bool(jnp.all(jnp.isfinite(img)))
    # exact sigmoid range
    assert bool(jnp.all((img >= 0.0) & (img <= 1.0)))

    # loose numerical check vs. pure-JAX reference (bf16 matmuls in the kernel)
    ref = generator_reference(params, z, y, out_shape)
    max_err = float(jnp.max(jnp.abs(img - ref)))
    assert max_err < 5e-2, f"max abs err vs reference: {max_err}"

    print("KERNEL_OK")
</pallas_src>

<mosaic_0001>
module attributes {stable_mosaic.version = 11 : i64} {
  func.func @_generator_fused_kernel(%arg0: memref<8x128xbf16, #tpu.memory_space<vmem>>, %arg1: memref<128x128xbf16, #tpu.memory_space<vmem>>, %arg2: memref<1x128xf32, #tpu.memory_space<vmem>>, %arg3: memref<128x256xbf16, #tpu.memory_space<vmem>>, %arg4: memref<1x256xf32, #tpu.memory_space<vmem>>, %arg5: memref<1x256xf32, #tpu.memory_space<vmem>>, %arg6: memref<1x256xf32, #tpu.memory_space<vmem>>, %arg7: memref<256x512xbf16, #tpu.memory_space<vmem>>, %arg8: memref<1x512xf32, #tpu.memory_space<vmem>>, %arg9: memref<1x512xf32, #tpu.memory_space<vmem>>, %arg10: memref<1x512xf32, #tpu.memory_space<vmem>>, %arg11: memref<512x1024xbf16, #tpu.memory_space<vmem>>, %arg12: memref<1x1024xf32, #tpu.memory_space<vmem>>, %arg13: memref<1x1024xf32, #tpu.memory_space<vmem>>, %arg14: memref<1x1024xf32, #tpu.memory_space<vmem>>, %arg15: memref<1024x128xbf16, #tpu.memory_space<vmem>>, %arg16: memref<1x128xf32, #tpu.memory_space<vmem>>, %arg17: memref<8x128xf32, #tpu.memory_space<vmem>>) attributes {dimension_semantics = [], scalar_prefetch = 0 : i64, scratch_operands = 0 : i64, tpu.core_type = #tpu.core_type<tc>} {
    %0 = tpu.iota {dimensions = array<i32: 0>} : vector<8x1xi32>
    %c4_i32 = arith.constant 4 : i32
    %1 = vector.broadcast %c4_i32 : i32 to vector<8x1xi32>
    %2 = arith.cmpi slt, %0, %1 : vector<8x1xi32>
    %3 = arith.extui %2 : vector<8x1xi1> to vector<8x1xi32>
    %4 = arith.sitofp %3 : vector<8x1xi32> to vector<8x1xf32>
    %c0 = arith.constant 0 : index
    %c0_0 = arith.constant 0 : index
    %5 = vector.load %arg0[%c0, %c0_0] : memref<8x128xbf16, #tpu.memory_space<vmem>>, vector<8x128xbf16>
    %c0_1 = arith.constant 0 : index
    %c0_2 = arith.constant 0 : index
    %6 = vector.load %arg1[%c0_1, %c0_2] : memref<128x128xbf16, #tpu.memory_space<vmem>>, vector<128x128xbf16>
    %cst = arith.constant dense<0.000000e+00> : vector<8x128xf32>
    %7 = tpu.matmul %5, %6, %cst {dimension_numbers = #tpu.dot_dimension_numbers<[1], [0], [0], [1], [0, 0, 1, 1], [], []>} : vector<8x128xbf16>, vector<128x128xbf16>, vector<8x128xf32> -> vector<8x128xf32>
    %c0_3 = arith.constant 0 : index
    %c0_4 = arith.constant 0 : index
    %8 = vector.load %arg2[%c0_3, %c0_4] : memref<1x128xf32, #tpu.memory_space<vmem>>, vector<1x128xf32>
    %9 = vector.broadcast %8 : vector<1x128xf32> to vector<8x128xf32>
    %10 = arith.addf %7, %9 : vector<8x128xf32>
    %cst_5 = arith.constant 2.000000e-01 : f32
    %11 = vector.broadcast %cst_5 : f32 to vector<8x128xf32>
    %12 = arith.mulf %11, %10 : vector<8x128xf32>
    %13 = arith.maximumf %10, %12 : vector<8x128xf32>
    %14 = arith.truncf %13 : vector<8x128xf32> to vector<8x128xbf16>
    %c0_6 = arith.constant 0 : index
    %c0_7 = arith.constant 0 : index
    %15 = vector.load %arg3[%c0_6, %c0_7] : memref<128x256xbf16, #tpu.memory_space<vmem>>, vector<128x256xbf16>
    %cst_8 = arith.constant dense<0.000000e+00> : vector<8x256xf32>
    %16 = tpu.matmul %14, %15, %cst_8 {dimension_numbers = #tpu.dot_dimension_numbers<[1], [0], [0], [1], [0, 0, 1, 1], [], []>} : vector<8x128xbf16>, vector<128x256xbf16>, vector<8x256xf32> -> vector<8x256xf32>
    %c0_9 = arith.constant 0 : index
    %c0_10 = arith.constant 0 : index
    %17 = vector.load %arg4[%c0_9, %c0_10] : memref<1x256xf32, #tpu.memory_space<vmem>>, vector<1x256xf32>
    %18 = vector.broadcast %17 : vector<1x256xf32> to vector<8x256xf32>
    %19 = arith.addf %16, %18 : vector<8x256xf32>
    %20 = vector.broadcast %4 : vector<8x1xf32> to vector<8x256xf32>
    %21 = arith.mulf %19, %20 : vector<8x256xf32>
    %cst_11 = arith.constant dense<0.000000e+00> : vector<256xf32>
    %22 = vector.multi_reduction <add>, %21, %cst_11 [0] : vector<8x256xf32> to vector<256xf32>
    %23 = vector.shape_cast %22 : vector<256xf32> to vector<1x256xf32>
    %24 = arith.mulf %21, %19 : vector<8x256xf32>
    %cst_12 = arith.constant dense<0.000000e+00> : vector<256xf32>
    %25 = vector.multi_reduction <add>, %24, %cst_12 [0] : vector<8x256xf32> to vector<256xf32>
    %26 = vector.shape_cast %25 : vector<256xf32> to vector<1x256xf32>
    %cst_13 = arith.constant 2.500000e-01 : f32
    %27 = vector.broadcast %cst_13 : f32 to vector<1x256xf32>
    %28 = arith.mulf %23, %27 : vector<1x256xf32>
    %cst_14 = arith.constant 2.500000e-01 : f32
    %29 = vector.broadcast %cst_14 : f32 to vector<1x256xf32>
    %30 = arith.mulf %26, %29 : vector<1x256xf32>
    %31 = arith.mulf %28, %28 : vector<1x256xf32>
    %32 = arith.subf %30, %31 : vector<1x256xf32>
    %cst_15 = arith.constant 0.000000e+00 : f32
    %33 = vector.broadcast %cst_15 : f32 to vector<1x256xf32>
    %34 = arith.maximumf %32, %33 : vector<1x256xf32>
    %c0_16 = arith.constant 0 : index
    %c0_17 = arith.constant 0 : index
    %35 = vector.load %arg5[%c0_16, %c0_17] : memref<1x256xf32, #tpu.memory_space<vmem>>, vector<1x256xf32>
    %cst_18 = arith.constant 9.99999974E-6 : f32
    %36 = vector.broadcast %cst_18 : f32 to vector<1x256xf32>
    %37 = arith.addf %34, %36 : vector<1x256xf32>
    %38 = math.rsqrt %37 : vector<1x256xf32>
    %39 = arith.mulf %35, %38 : vector<1x256xf32>
    %40 = vector.broadcast %28 : vector<1x256xf32> to vector<8x256xf32>
    %41 = arith.subf %19, %40 : vector<8x256xf32>
    %42 = vector.broadcast %39 : vector<1x256xf32> to vector<8x256xf32>
    %43 = arith.mulf %41, %42 : vector<8x256xf32>
    %c0_19 = arith.constant 0 : index
    %c0_20 = arith.constant 0 : index
    %44 = vector.load %arg6[%c0_19, %c0_20] : memref<1x256xf32, #tpu.memory_space<vmem>>, vector<1x256xf32>
    %45 = vector.broadcast %44 : vector<1x256xf32> to vector<8x256xf32>
    %46 = arith.addf %43, %45 : vector<8x256xf32>
    %cst_21 = arith.constant 2.000000e-01 : f32
    %47 = vector.broadcast %cst_21 : f32 to vector<8x256xf32>
    %48 = arith.mulf %47, %46 : vector<8x256xf32>
    %49 = arith.maximumf %46, %48 : vector<8x256xf32>
    %50 = arith.truncf %49 : vector<8x256xf32> to vector<8x256xbf16>
    %c0_22 = arith.constant 0 : index
    %c0_23 = arith.constant 0 : index
    %51 = vector.load %arg7[%c0_22, %c0_23] : memref<256x512xbf16, #tpu.memory_space<vmem>>, vector<256x512xbf16>
    %cst_24 = arith.constant dense<0.000000e+00> : vector<8x512xf32>
    %52 = tpu.matmul %50, %51, %cst_24 {dimension_numbers = #tpu.dot_dimension_numbers<[1], [0], [0], [1], [0, 0, 1, 1], [], []>} : vector<8x256xbf16>, vector<256x512xbf16>, vector<8x512xf32> -> vector<8x512xf32>
    %c0_25 = arith.constant 0 : index
    %c0_26 = arith.constant 0 : index
    %53 = vector.load %arg8[%c0_25, %c0_26] : memref<1x512xf32, #tpu.memory_space<vmem>>, vector<1x512xf32>
    %54 = vector.broadcast %53 : vector<1x512xf32> to vector<8x512xf32>
    %55 = arith.addf %52, %54 : vector<8x512xf32>
    %56 = vector.broadcast %4 : vector<8x1xf32> to vector<8x512xf32>
    %57 = arith.mulf %55, %56 : vector<8x512xf32>
    %cst_27 = arith.constant dense<0.000000e+00> : vector<512xf32>
    %58 = vector.multi_reduction <add>, %57, %cst_27 [0] : vector<8x512xf32> to vector<512xf32>
    %59 = vector.shape_cast %58 : vector<512xf32> to vector<1x512xf32>
    %60 = arith.mulf %57, %55 : vector<8x512xf32>
    %cst_28 = arith.constant dense<0.000000e+00> : vector<512xf32>
    %61 = vector.multi_reduction <add>, %60, %cst_28 [0] : vector<8x512xf32> to vector<512xf32>
    %62 = vector.shape_cast %61 : vector<512xf32> to vector<1x512xf32>
    %cst_29 = arith.constant 2.500000e-01 : f32
    %63 = vector.broadcast %cst_29 : f32 to vector<1x512xf32>
    %64 = arith.mulf %59, %63 : vector<1x512xf32>
    %cst_30 = arith.constant 2.500000e-01 : f32
    %65 = vector.broadcast %cst_30 : f32 to vector<1x512xf32>
    %66 = arith.mulf %62, %65 : vector<1x512xf32>
    %67 = arith.mulf %64, %64 : vector<1x512xf32>
    %68 = arith.subf %66, %67 : vector<1x512xf32>
    %cst_31 = arith.constant 0.000000e+00 : f32
    %69 = vector.broadcast %cst_31 : f32 to vector<1x512xf32>
    %70 = arith.maximumf %68, %69 : vector<1x512xf32>
    %c0_32 = arith.constant 0 : index
    %c0_33 = arith.constant 0 : index
    %71 = vector.load %arg9[%c0_32, %c0_33] : memref<1x512xf32, #tpu.memory_space<vmem>>, vector<1x512xf32>
    %cst_34 = arith.constant 9.99999974E-6 : f32
    %72 = vector.broadcast %cst_34 : f32 to vector<1x512xf32>
    %73 = arith.addf %70, %72 : vector<1x512xf32>
    %74 = math.rsqrt %73 : vector<1x512xf32>
    %75 = arith.mulf %71, %74 : vector<1x512xf32>
    %76 = vector.broadcast %64 : vector<1x512xf32> to vector<8x512xf32>
    %77 = arith.subf %55, %76 : vector<8x512xf32>
    %78 = vector.broadcast %75 : vector<1x512xf32> to vector<8x512xf32>
    %79 = arith.mulf %77, %78 : vector<8x512xf32>
    %c0_35 = arith.constant 0 : index
    %c0_36 = arith.constant 0 : index
    %80 = vector.load %arg10[%c0_35, %c0_36] : memref<1x512xf32, #tpu.memory_space<vmem>>, vector<1x512xf32>
    %81 = vector.broadcast %80 : vector<1x512xf32> to vector<8x512xf32>
    %82 = arith.addf %79, %81 : vector<8x512xf32>
    %cst_37 = arith.constant 2.000000e-01 : f32
    %83 = vector.broadcast %cst_37 : f32 to vector<8x512xf32>
    %84 = arith.mulf %83, %82 : vector<8x512xf32>
    %85 = arith.maximumf %82, %84 : vector<8x512xf32>
    %86 = arith.truncf %85 : vector<8x512xf32> to vector<8x512xbf16>
    %c0_38 = arith.constant 0 : index
    %c0_39 = arith.constant 0 : index
    %87 = vector.load %arg11[%c0_38, %c0_39] : memref<512x1024xbf16, #tpu.memory_space<vmem>>, vector<512x1024xbf16>
    %cst_40 = arith.constant dense<0.000000e+00> : vector<8x1024xf32>
    %88 = tpu.matmul %86, %87, %cst_40 {dimension_numbers = #tpu.dot_dimension_numbers<[1], [0], [0], [1], [0, 0, 1, 1], [], []>} : vector<8x512xbf16>, vector<512x1024xbf16>, vector<8x1024xf32> -> vector<8x1024xf32>
    %c0_41 = arith.constant 0 : index
    %c0_42 = arith.constant 0 : index
    %89 = vector.load %arg12[%c0_41, %c0_42] : memref<1x1024xf32, #tpu.memory_space<vmem>>, vector<1x1024xf32>
    %90 = vector.broadcast %89 : vector<1x1024xf32> to vector<8x1024xf32>
    %91 = arith.addf %88, %90 : vector<8x1024xf32>
    %92 = vector.broadcast %4 : vector<8x1xf32> to vector<8x1024xf32>
    %93 = arith.mulf %91, %92 : vector<8x1024xf32>
    %cst_43 = arith.constant dense<0.000000e+00> : vector<1024xf32>
    %94 = vector.multi_reduction <add>, %93, %cst_43 [0] : vector<8x1024xf32> to vector<1024xf32>
    %95 = vector.shape_cast %94 : vector<1024xf32> to vector<1x1024xf32>
    %96 = arith.mulf %93, %91 : vector<8x1024xf32>
    %cst_44 = arith.constant dense<0.000000e+00> : vector<1024xf32>
    %97 = vector.multi_reduction <add>, %96, %cst_44 [0] : vector<8x1024xf32> to vector<1024xf32>
    %98 = vector.shape_cast %97 : vector<1024xf32> to vector<1x1024xf32>
    %cst_45 = arith.constant 2.500000e-01 : f32
    %99 = vector.broadcast %cst_45 : f32 to vector<1x1024xf32>
    %100 = arith.mulf %95, %99 : vector<1x1024xf32>
    %cst_46 = arith.constant 2.500000e-01 : f32
    %101 = vector.broadcast %cst_46 : f32 to vector<1x1024xf32>
    %102 = arith.mulf %98, %101 : vector<1x1024xf32>
    %103 = arith.mulf %100, %100 : vector<1x1024xf32>
    %104 = arith.subf %102, %103 : vector<1x1024xf32>
    %cst_47 = arith.constant 0.000000e+00 : f32
    %105 = vector.broadcast %cst_47 : f32 to vector<1x1024xf32>
    %106 = arith.maximumf %104, %105 : vector<1x1024xf32>
    %c0_48 = arith.constant 0 : index
    %c0_49 = arith.constant 0 : index
    %107 = vector.load %arg13[%c0_48, %c0_49] : memref<1x1024xf32, #tpu.memory_space<vmem>>, vector<1x1024xf32>
    %cst_50 = arith.constant 9.99999974E-6 : f32
    %108 = vector.broadcast %cst_50 : f32 to vector<1x1024xf32>
    %109 = arith.addf %106, %108 : vector<1x1024xf32>
    %110 = math.rsqrt %109 : vector<1x1024xf32>
    %111 = arith.mulf %107, %110 : vector<1x1024xf32>
    %112 = vector.broadcast %100 : vector<1x1024xf32> to vector<8x1024xf32>
    %113 = arith.subf %91, %112 : vector<8x1024xf32>
    %114 = vector.broadcast %111 : vector<1x1024xf32> to vector<8x1024xf32>
    %115 = arith.mulf %113, %114 : vector<8x1024xf32>
    %c0_51 = arith.constant 0 : index
    %c0_52 = arith.constant 0 : index
    %116 = vector.load %arg14[%c0_51, %c0_52] : memref<1x1024xf32, #tpu.memory_space<vmem>>, vector<1x1024xf32>
    %117 = vector.broadcast %116 : vector<1x1024xf32> to vector<8x1024xf32>
    %118 = arith.addf %115, %117 : vector<8x1024xf32>
    %cst_53 = arith.constant 2.000000e-01 : f32
    %119 = vector.broadcast %cst_53 : f32 to vector<8x1024xf32>
    %120 = arith.mulf %119, %118 : vector<8x1024xf32>
    %121 = arith.maximumf %118, %120 : vector<8x1024xf32>
    %122 = arith.truncf %121 : vector<8x1024xf32> to vector<8x1024xbf16>
    %c0_54 = arith.constant 0 : index
    %c0_55 = arith.constant 0 : index
    %123 = vector.load %arg15[%c0_54, %c0_55] : memref<1024x128xbf16, #tpu.memory_space<vmem>>, vector<1024x128xbf16>
    %cst_56 = arith.constant dense<0.000000e+00> : vector<8x128xf32>
    %124 = tpu.matmul %122, %123, %cst_56 {dimension_numbers = #tpu.dot_dimension_numbers<[1], [0], [0], [1], [0, 0, 1, 1], [], []>} : vector<8x1024xbf16>, vector<1024x128xbf16>, vector<8x128xf32> -> vector<8x128xf32>
    %c0_57 = arith.constant 0 : index
    %c0_58 = arith.constant 0 : index
    %125 = vector.load %arg16[%c0_57, %c0_58] : memref<1x128xf32, #tpu.memory_space<vmem>>, vector<1x128xf32>
    %126 = vector.broadcast %125 : vector<1x128xf32> to vector<8x128xf32>
    %127 = arith.addf %124, %126 : vector<8x128xf32>
    %cst_59 = arith.constant 0.000000e+00 : f32
    %128 = vector.broadcast %cst_59 : f32 to vector<8x128xf32>
    %129 = arith.subf %128, %127 : vector<8x128xf32>
    %130 = math.exp %129 : vector<8x128xf32>
    %cst_60 = arith.constant 1.000000e+00 : f32
    %131 = vector.broadcast %cst_60 : f32 to vector<8x128xf32>
    %132 = arith.addf %131, %130 : vector<8x128xf32>
    %cst_61 = arith.constant 1.000000e+00 : f32
    %133 = vector.broadcast %cst_61 : f32 to vector<8x128xf32>
    %134 = arith.divf %133, %132 : vector<8x128xf32>
    %c0_62 = arith.constant 0 : index
    %c0_63 = arith.constant 0 : index
    %135 = vector.load %arg17[%c0_62, %c0_63] : memref<8x128xf32, #tpu.memory_space<vmem>>, vector<8x128xf32>
    tpu.vector_store %arg17[%c0_62, %c0_63], %134 {strides = array<i32>} : memref<8x128xf32, #tpu.memory_space<vmem>>, vector<8x128xf32>,
    return
  }
}

</mosaic_0001>

<llo_original>
// kernel: generator_forward.1
$region0: #{generator_forward.1}
  #allocation0 [shape = 'u32[]', space=smem, size = 0x4, offset = 0x4, fixed_abs, tag = 'smem constant byte address 0x4 - core index']
  #allocation1 [shape = 'u32[144,128]{1,0:T(1,128)}', space=vmem, size = 0x12000, scoped, tag = 'internal scratch']
  %s0 = inlined_call_operand.vmem [shape: bf16[8,128], index: 0, kind: input, shape index: {}]
  %s1 = inlined_call_operand.vmem [shape: bf16[128,128], index: 1, kind: input, shape index: {}]
  %s2 = inlined_call_operand.hbm [shape: f32[1,128], index: 2, kind: input, shape index: {}]
  %s3 = inlined_call_operand.hbm [shape: bf16[128,256], index: 3, kind: input, shape index: {}]
  %s4 = inlined_call_operand.hbm [shape: f32[1,256], index: 4, kind: input, shape index: {}]
  %s5 = inlined_call_operand.hbm [shape: f32[1,256], index: 5, kind: input, shape index: {}]
  %s6 = inlined_call_operand.hbm [shape: f32[1,256], index: 6, kind: input, shape index: {}]
  %s7 = inlined_call_operand.hbm [shape: bf16[256,512], index: 7, kind: input, shape index: {}]
  %s8 = inlined_call_operand.hbm [shape: f32[1,512], index: 8, kind: input, shape index: {}]
  %s9 = inlined_call_operand.hbm [shape: f32[1,512], index: 9, kind: input, shape index: {}]
  %s10 = inlined_call_operand.hbm [shape: f32[1,512], index: 10, kind: input, shape index: {}]
  %s11 = inlined_call_operand.hbm [shape: bf16[512,1024], index: 11, kind: input, shape index: {}]
  %s12 = inlined_call_operand.vmem [shape: f32[1,1024], index: 12, kind: input, shape index: {}]
  %s13 = inlined_call_operand.hbm [shape: f32[1,1024], index: 13, kind: input, shape index: {}]
  %s14 = inlined_call_operand.hbm [shape: f32[1,1024], index: 14, kind: input, shape index: {}]
  %s15 = inlined_call_operand.hbm [shape: bf16[1024,128], index: 15, kind: input, shape index: {}]
  %s16 = inlined_call_operand.hbm [shape: f32[1,128], index: 16, kind: input, shape index: {}]
  %s17 = inlined_call_operand.vmem [shape: f32[8,128], index: 17, kind: output, shape index: {}]
  %s18 = sld [smem:[#allocation0]]
  $region134: #{generator_forward.1} parent=0
    _
  %s20 = ssub.s32 1, %s18
  %s21 = scalar_select 0, %s20, %s18
  $region1: #{generator_forward.1} parent=0
    #allocation2 [shape = 'u8[512]{0}', space=vmem, size = 0x400, scoped, tag = 'input window, operand 2, single buffered']
    #allocation3 [shape = 's32[1]{0}', space=sflag, size = 0x4, scoped, tag = 'scoped memory for generator_forward.1']
    #allocation4 [shape = 'u8[65536]{0}', space=vmem, size = 0x10000, scoped, tag = 'input window, operand 3, single buffered']
    #allocation5 [shape = 's32[1]{0}', space=sflag, size = 0x4, scoped, tag = 'scoped memory for generator_forward.1']
    #allocation6 [shape = 'u8[1024]{0}', space=vmem, size = 0x400, scoped, tag = 'input window, operand 4, single buffered']
    #allocation7 [shape = 'u8[1024]{0}', space=vmem, size = 0x400, scoped, tag = 'input window, operand 5, single buffered']
    #allocation8 [shape = 's32[1]{0}', space=sflag, size = 0x4, scoped, tag = 'scoped memory for generator_forward.1']
    #allocation9 [shape = 'u8[1024]{0}', space=vmem, size = 0x400, scoped, tag = 'input window, operand 6, single buffered']
    #allocation10 [shape = 'u8[262144]{0}', space=vmem, size = 0x40000, scoped, tag = 'input window, operand 7, single buffered']
    #allocation11 [shape = 's32[1]{0}', space=sflag, size = 0x4, scoped, tag = 'scoped memory for generator_forward.1']
    #allocation12 [shape = 'u8[2048]{0}', space=vmem, size = 0x800, scoped, tag = 'input window, operand 8, single buffered']
    #allocation13 [shape = 'u8[2048]{0}', space=vmem, size = 0x800, scoped, tag = 'input window, operand 9, single buffered']
    #allocation14 [shape = 's32[1]{0}', space=sflag, size = 0x4, scoped, tag = 'scoped memory for generator_forward.1']
    #allocation15 [shape = 'u8[2048]{0}', space=vmem, size = 0x800, scoped, tag = 'input window, operand 10, single buffered']
    #allocation16 [shape = 'u8[1048576]{0}', space=vmem, size = 0x100000, scoped, tag = 'input window, operand 11, single buffered']
    #allocation17 [shape = 's32[1]{0}', space=sflag, size = 0x4, scoped, tag = 'scoped memory for generator_forward.1']
    #allocation18 [shape = 'u8[4096]{0}', space=vmem, size = 0x1000, scoped, tag = 'input window, operand 13, single buffered']
    #allocation19 [shape = 'u8[4096]{0}', space=vmem, size = 0x1000, scoped, tag = 'input window, operand 14, single buffered']
    #allocation20 [shape = 's32[1]{0}', space=sflag, size = 0x4, scoped, tag = 'scoped memory for generator_forward.1']
    #allocation21 [shape = 'u8[262144]{0}', space=vmem, size = 0x40000, scoped, tag = 'input window, operand 15, single buffered']
    #allocation22 [shape = 'u8[512]{0}', space=vmem, size = 0x400, scoped, tag = 'input window, operand 16, single buffered']
    #allocation23 [shape = 's32[1]{0}', space=sflag, size = 0x4, scoped, tag = 'scoped memory for generator_forward.1']
    %22 = vsyncpa [#allocation3], 0
    %23 = vsyncpa [#allocation5], 0
    %24 = vsyncpa [#allocation8], 0
    %25 = vsyncpa [#allocation11], 0
    %26 = vsyncpa [#allocation14], 0
    %27 = vsyncpa [#allocation17], 0
    %28 = vsyncpa [#allocation20], 0
    %29 = vsyncpa [#allocation23], 0
    // Predicated region
    $region2: #{generator_forward.1} parent=1 // pred_check
      _
    $region3: #{generator_forward.1} parent=1 // pred_check_branch
      %31 = sbr.rel (0) target = $region5
    $region4: #{generator_forward.1} parent=1 // pred_region
      _
    $region5: #{generator_forward.1} parent=1 // pred_fallthru
      _
    // Predicated region
    $region6: #{generator_forward.1} parent=1 // pred_check
      _
    $region7: #{generator_forward.1} parent=1 // pred_check_branch
      %33 = sbr.rel (0) target = $region9
    $region8: #{generator_forward.1} parent=1 // pred_region
      _
    $region9: #{generator_forward.1} parent=1 // pred_fallthru
      _
    // Predicated region
    $region10: #{generator_forward.1} parent=1 // pred_check
      _
    $region11: #{generator_forward.1} parent=1 // pred_check_branch
      %35 = sbr.rel (0) target = $region13
    $region12: #{generator_forward.1} parent=1 // pred_region
      %s37 = ssub.s32 16, 16
      %38 = vsyncadd [#allocation3], %s37
      %s40 = sshll.u32 [#allocation2], 4
      %s41 = int_to_ptr.vmem [resolvable:$true] %s40
      %43 = dma.hbm_to_vmem [thread:$0]  %s2, 16, %s41, [#allocation3]
    $region13: #{generator_forward.1} parent=1 // pred_fallthru
      _
    // Predicated region
    $region14: #{generator_forward.1} parent=1 // pred_check
      _
    $region15: #{generator_forward.1} parent=1 // pred_check_branch
      %45 = sbr.rel (0) target = $region17
    $region16: #{generator_forward.1} parent=1 // pred_region
      %s47 = ssub.s32 2048, 2048
      %48 = vsyncadd [#allocation5], %s47
      %s49 = sshll.u32 [#allocation4], 4
      %s50 = int_to_ptr.vmem [resolvable:$true] %s49
      %55 = dma.hbm_to_vmem [thread:$0]  %s3, 2048, %s50, [#allocation5], 128, 128, 8
    $region17: #{generator_forward.1} parent=1 // pred_fallthru
      _
    // Predicated region
    $region18: #{generator_forward.1} parent=1 // pred_check
      _
    $region19: #{generator_forward.1} parent=1 // pred_check_branch
      %57 = sbr.rel (0) target = $region21
    $region20: #{generator_forward.1} parent=1 // pred_region
      %s59 = ssub.s32 32, 32
      %60 = vsyncadd [#allocation5], %s59
      %s62 = sshll.u32 [#allocation6], 4
      %s63 = int_to_ptr.vmem [resolvable:$true] %s62
      %65 = dma.hbm_to_vmem [thread:$0]  %s4, 32, %s63, [#allocation5]
    $region21: #{generator_forward.1} parent=1 // pred_fallthru
      _
    // Predicated region
    $region22: #{generator_forward.1} parent=1 // pred_check
      _
    $region23: #{generator_forward.1} parent=1 // pred_check_branch
      %67 = sbr.rel (0) target = $region25
    $region24: #{generator_forward.1} parent=1 // pred_region
      %s69 = ssub.s32 32, 32
      %70 = vsyncadd [#allocation8], %s69
      %s72 = sshll.u32 [#allocation7], 4
      %s73 = int_to_ptr.vmem [resolvable:$true] %s72
      %75 = dma.hbm_to_vmem [thread:$0]  %s5, 32, %s73, [#allocation8]
    $region25: #{generator_forward.1} parent=1 // pred_fallthru
      _
    // Predicated region
    $region26: #{generator_forward.1} parent=1 // pred_check
      _
    $region27: #{generator_forward.1} parent=1 // pred_check_branch
      %77 = sbr.rel (0) target = $region29
    $region28: #{generator_forward.1} parent=1 // pred_region
      %s79 = ssub.s32 32, 32
      %80 = vsyncadd [#allocation8], %s79
      %s82 = sshll.u32 [#allocation9], 4
      %s83 = int_to_ptr.vmem [resolvable:$true] %s82
      %85 = dma.hbm_to_vmem [thread:$0]  %s6, 32, %s83, [#allocation8]
    $region29: #{generator_forward.1} parent=1 // pred_fallthru
      _
    // Predicated region
    $region30: #{generator_forward.1} parent=1 // pred_check
      _
    $region31: #{generator_forward.1} parent=1 // pred_check_branch
      %87 = sbr.rel (0) target = $region33
    $region32: #{generator_forward.1} parent=1 // pred_region
      %s89 = ssub.s32 8192, 8192
      %90 = vsyncadd [#allocation11], %s89
      %s91 = sshll.u32 [#allocation10], 4
      %s92 = int_to_ptr.vmem [resolvable:$true] %s91
      %97 = dma.hbm_to_vmem [thread:$0]  %s7, 8192, %s92, [#allocation11], 256, 256, 16
    $region33: #{generator_forward.1} parent=1 // pred_fallthru
      _
    // Predicated region
    $region34: #{generator_forward.1} parent=1 // pred_check
      _
    $region35: #{generator_forward.1} parent=1 // pred_check_branch
      %99 = sbr.rel (0) target = $region37
    $region36: #{generator_forward.1} parent=1 // pred_region
      %s101 = ssub.s32 64, 64
      %102 = vsyncadd [#allocation11], %s101
      %s104 = sshll.u32 [#allocation12], 4
      %s105 = int_to_ptr.vmem [resolvable:$true] %s104
      %107 = dma.hbm_to_vmem [thread:$0]  %s8, 64, %s105, [#allocation11]
    $region37: #{generator_forward.1} parent=1 // pred_fallthru
      _
    // Predicated region
    $region38: #{generator_forward.1} parent=1 // pred_check
      _
    $region39: #{generator_forward.1} parent=1 // pred_check_branch
      %109 = sbr.rel (0) target = $region41
    $region40: #{generator_forward.1} parent=1 // pred_region
      %s111 = ssub.s32 64, 64
      %112 = vsyncadd [#allocation14], %s111
      %s114 = sshll.u32 [#allocation13], 4
      %s115 = int_to_ptr.vmem [resolvable:$true] %s114
      %117 = dma.hbm_to_vmem [thread:$0]  %s9, 64, %s115, [#allocation14]
    $region41: #{generator_forward.1} parent=1 // pred_fallthru
      _
    // Predicated region
    $region42: #{generator_forward.1} parent=1 // pred_check
      _
    $region43: #{generator_forward.1} parent=1 // pred_check_branch
      %119 = sbr.rel (0) target = $region45
    $region44: #{generator_forward.1} parent=1 // pred_region
      %s121 = ssub.s32 64, 64
      %122 = vsyncadd [#allocation14], %s121
      %s124 = sshll.u32 [#allocation15], 4
      %s125 = int_to_ptr.vmem [resolvable:$true] %s124
      %127 = dma.hbm_to_vmem [thread:$0]  %s10, 64, %s125, [#allocation14]
    $region45: #{generator_forward.1} parent=1 // pred_fallthru
      _
    // Predicated region
    $region46: #{generator_forward.1} parent=1 // pred_check
      _
    $region47: #{generator_forward.1} parent=1 // pred_check_branch
      %129 = sbr.rel (0) target = $region49
    $region48: #{generator_forward.1} parent=1 // pred_region
      %s131 = ssub.s32 32768, 32768
      %132 = vsyncadd [#allocation17], %s131
      %s133 = sshll.u32 [#allocation16], 4
      %s134 = int_to_ptr.vmem [resolvable:$true] %s133
      %139 = dma.hbm_to_vmem [thread:$0]  %s11, 32768, %s134, [#allocation17], 512, 512, 32
    $region49: #{generator_forward.1} parent=1 // pred_fallthru
      _
    // Predicated region
    $region50: #{generator_forward.1} parent=1 // pred_check
      _
    $region51: #{generator_forward.1} parent=1 // pred_check_branch
      %141 = sbr.rel (0) target = $region53
    $region52: #{generator_forward.1} parent=1 // pred_region
      _
    $region53: #{generator_forward.1} parent=1 // pred_fallthru
      _
    // Predicated region
    $region54: #{generator_forward.1} parent=1 // pred_check
      _
    $region55: #{generator_forward.1} parent=1 // pred_check_branch
      %143 = sbr.rel (0) target = $region57
    $region56: #{generator_forward.1} parent=1 // pred_region
      %s145 = ssub.s32 128, 128
      %146 = vsyncadd [#allocation17], %s145
      %s148 = sshll.u32 [#allocation18], 4
      %s149 = int_to_ptr.vmem [resolvable:$true] %s148
      %151 = dma.hbm_to_vmem [thread:$0]  %s13, 128, %s149, [#allocation17]
    $region57: #{generator_forward.1} parent=1 // pred_fallthru
      _
    // Predicated region
    $region58: #{generator_forward.1} parent=1 // pred_check
      _
    $region59: #{generator_forward.1} parent=1 // pred_check_branch
      %153 = sbr.rel (0) target = $region61
    $region60: #{generator_forward.1} parent=1 // pred_region
      %s155 = ssub.s32 128, 128
      %156 = vsyncadd [#allocation20], %s155
      %s158 = sshll.u32 [#allocation19], 4
      %s159 = int_to_ptr.vmem [resolvable:$true] %s158
      %161 = dma.hbm_to_vmem [thread:$0]  %s14, 128, %s159, [#allocation20]
    $region61: #{generator_forward.1} parent=1 // pred_fallthru
      _
    // Predicated region
    $region62: #{generator_forward.1} parent=1 // pred_check
      _
    $region63: #{generator_forward.1} parent=1 // pred_check_branch
      %163 = sbr.rel (0) target = $region65
    $region64: #{generator_forward.1} parent=1 // pred_region
      %s165 = ssub.s32 8192, 8192
      %166 = vsyncadd [#allocation20], %s165
      %s167 = sshll.u32 [#allocation21], 4
      %s168 = int_to_ptr.vmem [resolvable:$true] %s167
      %173 = dma.hbm_to_vmem [thread:$0]  %s15, 8192, %s168, [#allocation20], 64, 64, 4
    $region65: #{generator_forward.1} parent=1 // pred_fallthru
      _
    // Predicated region
    $region66: #{generator_forward.1} parent=1 // pred_check
      _
    $region67: #{generator_forward.1} parent=1 // pred_check_branch
      %175 = sbr.rel (0) target = $region69
    $region68: #{generator_forward.1} parent=1 // pred_region
      %s177 = ssub.s32 16, 16
      %178 = vsyncadd [#allocation23], %s177
      %s180 = sshll.u32 [#allocation22], 4
      %s181 = int_to_ptr.vmem [resolvable:$true] %s180
      %183 = dma.hbm_to_vmem [thread:$0]  %s16, 16, %s181, [#allocation23]
    $region69: #{generator_forward.1} parent=1 // pred_fallthru
      _
    // Predicated region
    $region70: #{generator_forward.1} parent=1 // pred_check
      _
    $region71: #{generator_forward.1} parent=1 // pred_check_branch
      %185 = sbr.rel (0) target = $region73
    $region72: #{generator_forward.1} parent=1 // pred_region
      %186 = dma.done [#allocation3], 16
    $region73: #{generator_forward.1} parent=1 // pred_fallthru
      _
    // Predicated region
    $region74: #{generator_forward.1} parent=1 // pred_check
      _
    $region75: #{generator_forward.1} parent=1 // pred_check_branch
      %188 = sbr.rel (0) target = $region77
    $region76: #{generator_forward.1} parent=1 // pred_region
      %189 = dma.done [#allocation5], 2048
    $region77: #{generator_forward.1} parent=1 // pred_fallthru
      _
    // Predicated region
    $region78: #{generator_forward.1} parent=1 // pred_check
      _
    $region79: #{generator_forward.1} parent=1 // pred_check_branch
      %191 = sbr.rel (0) target = $region81
    $region80: #{generator_forward.1} parent=1 // pred_region
      %192 = dma.done [#allocation5], 32
    $region81: #{generator_forward.1} parent=1 // pred_fallthru
      _
    // Predicated region
    $region82: #{generator_forward.1} parent=1 // pred_check
      _
    $region83: #{generator_forward.1} parent=1 // pred_check_branch
      %194 = sbr.rel (0) target = $region85
    $region84: #{generator_forward.1} parent=1 // pred_region
      %195 = dma.done [#allocation8], 32
    $region85: #{generator_forward.1} parent=1 // pred_fallthru
      _
    // Predicated region
    $region86: #{generator_forward.1} parent=1 // pred_check
      _
    $region87: #{generator_forward.1} parent=1 // pred_check_branch
      %197 = sbr.rel (0) target = $region89
    $region88: #{generator_forward.1} parent=1 // pred_region
      %198 = dma.done [#allocation8], 32
    $region89: #{generator_forward.1} parent=1 // pred_fallthru
      _
    // Predicated region
    $region90: #{generator_forward.1} parent=1 // pred_check
      _
    $region91: #{generator_forward.1} parent=1 // pred_check_branch
      %200 = sbr.rel (0) target = $region93
    $region92: #{generator_forward.1} parent=1 // pred_region
      %201 = dma.done [#allocation11], 8192
    $region93: #{generator_forward.1} parent=1 // pred_fallthru
      _
    // Predicated region
    $region94: #{generator_forward.1} parent=1 // pred_check
      _
    $region95: #{generator_forward.1} parent=1 // pred_check_branch
      %203 = sbr.rel (0) target = $region97
    $region96: #{generator_forward.1} parent=1 // pred_region
      %204 = dma.done [#allocation11], 64
    $region97: #{generator_forward.1} parent=1 // pred_fallthru
      _
    // Predicated region
    $region98: #{generator_forward.1} parent=1 // pred_check
      _
    $region99: #{generator_forward.1} parent=1 // pred_check_branch
      %206 = sbr.rel (0) target = $region101
    $region100: #{generator_forward.1} parent=1 // pred_region
      %207 = dma.done [#allocation14], 64
    $region101: #{generator_forward.1} parent=1 // pred_fallthru
      _
    // Predicated region
    $region102: #{generator_forward.1} parent=1 // pred_check
      _
    $region103: #{generator_forward.1} parent=1 // pred_check_branch
      %209 = sbr.rel (0) target = $region105
    $region104: #{generator_forward.1} parent=1 // pred_region
      %210 = dma.done [#allocation14], 64
    $region105: #{generator_forward.1} parent=1 // pred_fallthru
      _
    // Predicated region
    $region106: #{generator_forward.1} parent=1 // pred_check
      _
    $region107: #{generator_forward.1} parent=1 // pred_check_branch
      %212 = sbr.rel (0) target = $region109
    $region108: #{generator_forward.1} parent=1 // pred_region
      %213 = dma.done [#allocation17], 32768
    $region109: #{generator_forward.1} parent=1 // pred_fallthru
      _
    // Predicated region
    $region110: #{generator_forward.1} parent=1 // pred_check
      _
    $region111: #{generator_forward.1} parent=1 // pred_check_branch
      %215 = sbr.rel (0) target = $region113
    $region112: #{generator_forward.1} parent=1 // pred_region
      %216 = dma.done [#allocation17], 128
    $region113: #{generator_forward.1} parent=1 // pred_fallthru
      _
    // Predicated region
    $region114: #{generator_forward.1} parent=1 // pred_check
      _
    $region115: #{generator_forward.1} parent=1 // pred_check_branch
      %218 = sbr.rel (0) target = $region117
    $region116: #{generator_forward.1} parent=1 // pred_region
      %219 = dma.done [#allocation20], 128
    $region117: #{generator_forward.1} parent=1 // pred_fallthru
      _
    // Predicated region
    $region118: #{generator_forward.1} parent=1 // pred_check
      _
    $region119: #{generator_forward.1} parent=1 // pred_check_branch
      %221 = sbr.rel (0) target = $region121
    $region120: #{generator_forward.1} parent=1 // pred_region
      %222 = dma.done [#allocation20], 8192
    $region121: #{generator_forward.1} parent=1 // pred_fallthru
      _
    // Predicated region
    $region122: #{generator_forward.1} parent=1 // pred_check
      _
    $region123: #{generator_forward.1} parent=1 // pred_check_branch
      %224 = sbr.rel (0) target = $region125
    $region124: #{generator_forward.1} parent=1 // pred_region
      %225 = dma.done [#allocation23], 16
    $region125: #{generator_forward.1} parent=1 // pred_fallthru
      _
    %v227 = vlaneseq
    %v228 = vshrl.u32 %v227, 7
    %vm229 = vcmp.lt.s32.totalorder %v228, 4
    %v230 = vsel %vm229, 1, 0
    %v231 = vcvt.s32.f32 %v230
    %v232 = vld [vmem:[%s0] sm:$0xf]
    %v233 = vld [vmem:[%s1] sm:$0xf]
    %v234 = vld [vmem:[%s1 + $0x4] sm:$0xf]
    %v235 = vld [vmem:[%s1 + $0x8] sm:$0xf]
    %v236 = vld [vmem:[%s1 + $0xc] sm:$0xf]
    %v237 = vld [vmem:[%s1 + $0x10] sm:$0xf]
    %v238 = vld [vmem:[%s1 + $0x14] sm:$0xf]
    %v239 = vld [vmem:[%s1 + $0x18] sm:$0xf]
    %v240 = vld [vmem:[%s1 + $0x1c] sm:$0xf]
    %v241 = vld [vmem:[%s1 + $0x20] sm:$0xf]
    %v242 = vld [vmem:[%s1 + $0x24] sm:$0xf]
    %v243 = vld [vmem:[%s1 + $0x28] sm:$0xf]
    %v244 = vld [vmem:[%s1 + $0x2c] sm:$0xf]
    %v245 = vld [vmem:[%s1 + $0x30] sm:$0xf]
    %v246 = vld [vmem:[%s1 + $0x34] sm:$0xf]
    %v247 = vld [vmem:[%s1 + $0x38] sm:$0xf]
    %v248 = vld [vmem:[%s1 + $0x3c] sm:$0xf]
    %v249 = vld [vmem:[#allocation2] sm:$0x1]
    %v251 = vlaneseq
    %v252 = vshrl.u32 %v251, 7
    %v253 = vsub.s32 0, %v252
    %v254 = vrot.slane %v249, %v253
    %v272 = vunpack.c.l.b16 %v233
    %v273 = vunpack.c.l.b16 %v234
    %v274 = vunpack.c.l.b16 %v235
    %v275 = vunpack.c.l.b16 %v236
    %v276 = vunpack.c.l.b16 %v237
    %v277 = vunpack.c.l.b16 %v238
    %v278 = vunpack.c.l.b16 %v239
    %v279 = vunpack.c.l.b16 %v240
    %v280 = vunpack.c.l.b16 %v241
    %v281 = vunpack.c.l.b16 %v242
    %v282 = vunpack.c.l.b16 %v243
    %v283 = vunpack.c.l.b16 %v244
    %v284 = vunpack.c.l.b16 %v245
    %v285 = vunpack.c.l.b16 %v246
    %v286 = vunpack.c.l.b16 %v247
    %v287 = vunpack.c.l.b16 %v248
    %v288 = vpack.c.b16 %v273, %v272
    %v289 = vpack.c.b16 %v275, %v274
    %v290 = vpack.c.b16 %v277, %v276
    %v291 = vpack.c.b16 %v279, %v278
    %v292 = vpack.c.b16 %v281, %v280
    %v293 = vpack.c.b16 %v283, %v282
    %v294 = vpack.c.b16 %v285, %v284
    %v295 = vpack.c.b16 %v287, %v286
    %304 = vmatprep.subr.bf16.mxu0 0
    %305 = vmatpush1.bf16.msra.mxu0 %v295
    %306 = vmatprep.subr.bf16.mxu0 0
    %307 = vmatpush1.bf16.msra.mxu0 %v294
    %308 = vmatprep.subr.bf16.mxu0 0
    %309 = vmatpush1.bf16.msra.mxu0 %v293
    %310 = vmatprep.subr.bf16.mxu0 0
    %311 = vmatpush1.bf16.msra.mxu0 %v292
    %312 = vmatprep.subr.bf16.mxu0 0
    %313 = vmatpush1.bf16.msra.mxu0 %v291
    %314 = vmatprep.subr.bf16.mxu0 0
    %315 = vmatpush1.bf16.msra.mxu0 %v290
    %316 = vmatprep.subr.bf16.mxu0 0
    %317 = vmatpush1.bf16.msra.mxu0 %v289
    %318 = vmatprep.subr.bf16.mxu0 0
    %319 = vmatpush1.bf16.msra.mxu0 %v288
    %320 = vmatprep.subr.bf16.mxu0 0
    %321 = vmatpush2.bf16.msra.mxu0 0
    %322 = vmatprep.subr.bf16.mxu0 0
    %323 = vmatpush2.bf16.msra.mxu0 0
    %324 = vmatprep.subr.bf16.mxu0 0
    %325 = vmatpush2.bf16.msra.mxu0 0
    %326 = vmatprep.subr.bf16.mxu0 0
    %327 = vmatpush2.bf16.msra.mxu0 0
    %328 = vmatprep.subr.bf16.mxu0 0
    %329 = vmatpush2.bf16.msra.mxu0 0
    %330 = vmatprep.subr.bf16.mxu0 0
    %331 = vmatpush2.bf16.msra.mxu0 0
    %332 = vmatprep.subr.bf16.mxu0 0
    %333 = vmatpush2.bf16.msra.mxu0 0
    %334 = vmatprep.subr.bf16.mxu0 0
    %335 = vmatpush2.bf16.msra.mxu0 0
    %336 = vmatprep.mubr.bf16.mxu0 0
    %337 = vmatmul.mubr.bf16.gmra.mxu0 %v232
    %v338 = vpop.f32.mrf.mxu0
    %v339 = vadd.f32 %v254, %v338
    %v340 = vpop.f32.mrf.mxu0
    %v341 = vpop.f32.mrf.mxu0
    %v342 = vpop.f32.mrf.mxu0
    %343 = vdwg.mxu0
    %v344 = vmul.f32 %v339, 0.2
    %v345 = vmax.f32 %v339, %v344
    %v346 = vpack.c.bf16 %v345, %v345
    %v347 = vld [vmem:[#allocation4] sm:$0xff]
    %v348 = vld [vmem:[#allocation4 + $0x8] sm:$0xff]
    %v349 = vld [vmem:[#allocation4 + $0x10] sm:$0xff]
    %v350 = vld [vmem:[#allocation4 + $0x18] sm:$0xff]
    %v351 = vld [vmem:[#allocation4 + $0x20] sm:$0xff]
    %v352 = vld [vmem:[#allocation4 + $0x28] sm:$0xff]
    %v353 = vld [vmem:[#allocation4 + $0x30] sm:$0xff]
    %v354 = vld [vmem:[#allocation4 + $0x38] sm:$0xff]
    %v355 = vld [vmem:[#allocation4 + $0x40] sm:$0xff]
    %v356 = vld [vmem:[#allocation4 + $0x48] sm:$0xff]
    %v357 = vld [vmem:[#allocation4 + $0x50] sm:$0xff]
    %v358 = vld [vmem:[#allocation4 + $0x58] sm:$0xff]
    %v359 = vld [vmem:[#allocation4 + $0x60] sm:$0xff]
    %v360 = vld [vmem:[#allocation4 + $0x68] sm:$0xff]
    %v361 = vld [vmem:[#allocation4 + $0x70] sm:$0xff]
    %v362 = vld [vmem:[#allocation4 + $0x78] sm:$0xff]
    %v363 = vld [vmem:[#allocation6] sm:$0x3]
    %v365 = vlaneseq
    %v366 = vshrl.u32 %v365, 7
    %v367 = vsub.s32 0, %v366
    %v368 = vrot.slane %v363, %v367
    %v369 = vlaneseq
    %v370 = vshrl.u32 %v369, 7
    %v371 = vsub.s32 1, %v370
    %v372 = vrot.slane %v363, %v371
    %v391 = vunpack.c.l.b16 %v347
    %v392 = vunpack.c.h.b16 %v347
    %v393 = vunpack.c.l.b16 %v348
    %v394 = vunpack.c.h.b16 %v348
    %v395 = vunpack.c.l.b16 %v349
    %v396 = vunpack.c.h.b16 %v349
    %v397 = vunpack.c.l.b16 %v350
    %v398 = vunpack.c.h.b16 %v350
    %v399 = vunpack.c.l.b16 %v351
    %v400 = vunpack.c.h.b16 %v351
    %v401 = vunpack.c.l.b16 %v352
    %v402 = vunpack.c.h.b16 %v352
    %v403 = vunpack.c.l.b16 %v353
    %v404 = vunpack.c.h.b16 %v353
    %v405 = vunpack.c.l.b16 %v354
    %v406 = vunpack.c.h.b16 %v354
    %v407 = vunpack.c.l.b16 %v355
    %v408 = vunpack.c.h.b16 %v355
    %v409 = vunpack.c.l.b16 %v356
    %v410 = vunpack.c.h.b16 %v356
    %v411 = vunpack.c.l.b16 %v357
    %v412 = vunpack.c.h.b16 %v357
    %v413 = vunpack.c.l.b16 %v358
    %v414 = vunpack.c.h.b16 %v358
    %v415 = vunpack.c.l.b16 %v359
    %v416 = vunpack.c.h.b16 %v359
    %v417 = vunpack.c.l.b16 %v360
    %v418 = vunpack.c.h.b16 %v360
    %v419 = vunpack.c.l.b16 %v361
    %v420 = vunpack.c.h.b16 %v361
    %v421 = vunpack.c.l.b16 %v362
    %v422 = vunpack.c.h.b16 %v362
    %v423 = vpack.c.b16 %v393, %v391
    %v424 = vpack.c.b16 %v394, %v392
    %v425 = vpack.c.b16 %v397, %v395
    %v426 = vpack.c.b16 %v398, %v396
    %v427 = vpack.c.b16 %v401, %v399
    %v428 = vpack.c.b16 %v402, %v400
    %v429 = vpack.c.b16 %v405, %v403
    %v430 = vpack.c.b16 %v406, %v404
    %v431 = vpack.c.b16 %v409, %v407
    %v432 = vpack.c.b16 %v410, %v408
    %v433 = vpack.c.b16 %v413, %v411
    %v434 = vpack.c.b16 %v414, %v412
    %v435 = vpack.c.b16 %v417, %v415
    %v436 = vpack.c.b16 %v418, %v416
    %v437 = vpack.c.b16 %v421, %v419
    %v438 = vpack.c.b16 %v422, %v420
    %455 = vmatprep.subr.bf16.mxu0 %v438
    %456 = vmatpush1.bf16.msra.mxu0 %v437
    %457 = vmatprep.subr.bf16.mxu0 %v436
    %458 = vmatpush1.bf16.msra.mxu0 %v435
    %459 = vmatprep.subr.bf16.mxu0 %v434
    %460 = vmatpush1.bf16.msra.mxu0 %v433
    %461 = vmatprep.subr.bf16.mxu0 %v432
    %462 = vmatpush1.bf16.msra.mxu0 %v431
    %463 = vmatprep.subr.bf16.mxu0 %v430
    %464 = vmatpush1.bf16.msra.mxu0 %v429
    %465 = vmatprep.subr.bf16.mxu0 %v428
    %466 = vmatpush1.bf16.msra.mxu0 %v427
    %467 = vmatprep.subr.bf16.mxu0 %v426
    %468 = vmatpush1.bf16.msra.mxu0 %v425
    %469 = vmatprep.subr.bf16.mxu0 %v424
    %470 = vmatpush1.bf16.msra.mxu0 %v423
    %471 = vmatprep.subr.bf16.mxu0 0
    %472 = vmatpush2.bf16.msra.mxu0 0
    %473 = vmatprep.subr.bf16.mxu0 0
    %474 = vmatpush2.bf16.msra.mxu0 0
    %475 = vmatprep.subr.bf16.mxu0 0
    %476 = vmatpush2.bf16.msra.mxu0 0
    %477 = vmatprep.subr.bf16.mxu0 0
    %478 = vmatpush2.bf16.msra.mxu0 0
    %479 = vmatprep.subr.bf16.mxu0 0
    %480 = vmatpush2.bf16.msra.mxu0 0
    %481 = vmatprep.subr.bf16.mxu0 0
    %482 = vmatpush2.bf16.msra.mxu0 0
    %483 = vmatprep.subr.bf16.mxu0 0
    %484 = vmatpush2.bf16.msra.mxu0 0
    %485 = vmatprep.subr.bf16.mxu0 0
    %486 = vmatpush2.bf16.msra.mxu0 0
    %487 = vmatprep.mubr.bf16.mxu0 0
    %488 = vmatmul.mubr.bf16.gmra.mxu0 %v346
    %v489 = vpop.f32.mrf.mxu0
    %v490 = vadd.f32 %v368, %v489
    %v491 = vpop.f32.mrf.mxu0
    %v492 = vadd.f32 %v372, %v491
    %v493 = vpop.f32.mrf.mxu0
    %v494 = vpop.f32.mrf.mxu0
    %495 = vdwg.mxu0
    %v496 = vmul.f32 %v490, %v231
    %v497 = vmul.f32 %v492, %v231
    %v498 = vrot.slane %v496, 4
    %v499 = vadd.f32 %v496, %v498
    %v500 = vrot.slane %v499, 2
    %v501 = vadd.f32 %v499, %v500
    %v502 = vrot.slane %v501, 1
    %v503 = vadd.f32 %v501, %v502
    %v504 = vrot.slane %v497, 4
    %v505 = vadd.f32 %v497, %v504
    %v506 = vrot.slane %v505, 2
    %v507 = vadd.f32 %v505, %v506
    %v508 = vrot.slane %v507, 1
    %v509 = vadd.f32 %v507, %v508
    %v510 = vmul.f32 %v496, %v490
    %v511 = vmul.f32 %v497, %v492
    %v512 = vrot.slane %v510, 4
    %v513 = vadd.f32 %v510, %v512
    %v514 = vrot.slane %v513, 2
    %v515 = vadd.f32 %v513, %v514
    %v516 = vrot.slane %v515, 1
    %v517 = vadd.f32 %v515, %v516
    %v518 = vrot.slane %v511, 4
    %v519 = vadd.f32 %v511, %v518
    %v520 = vrot.slane %v519, 2
    %v521 = vadd.f32 %v519, %v520
    %v522 = vrot.slane %v521, 1
    %v523 = vadd.f32 %v521, %v522
    %v524 = vmul.f32 %v503, 0.25
    %v525 = vmul.f32 %v509, 0.25
    %v526 = vmul.f32 %v517, 0.25
    %v527 = vmul.f32 %v523, 0.25
    %v528 = vmul.f32 %v524, %v524
    %v529 = vmul.f32 %v525, %v525
    %v530 = vsub.f32 %v526, %v528
    %v531 = vsub.f32 %v527, %v529
    %v532 = vmax.f32 %v530, 0.0
    %v533 = vmax.f32 %v531, 0.0
    %v534 = vld [vmem:[#allocation7] sm:$0x3]
    %v535 = vadd.f32 %v532, 1e-05
    %v536 = vadd.f32 %v533, 1e-05
    %v537 = vrsqrt.pop %v535
    %v538 = vrsqrt.pop %v536
    %v541 = vcombine.low %v537, %v538
    %v543 = vunpack.c.l.s4 1966171168
    %v544 = vunpack.c.0.s8 %v543
    %v545 = vlaneseq
    %v546 = vshrl.u32 %v545, 7
    %v547 = vsub.s32 %v544, %v546
    %v548 = vrot.slane %v541, %v547
    %v550 = vunpack.c.l.s4 1966171168
    %v551 = vunpack.c.0.s8 %v550
    %v552 = vlaneseq
    %v553 = vshrl.u32 %v552, 7
    %v554 = vsub.s32 %v551, %v553
    %v555 = vrot.slane %v548, %v554
    %v557 = vmul.f32 %v534, %v555
    %v558 = vsub.f32 %v490, %v524
    %v559 = vsub.f32 %v492, %v525
    %v561 = vlaneseq
    %v562 = vshrl.u32 %v561, 7
    %v563 = vsub.s32 0, %v562
    %v564 = vrot.slane %v557, %v563
    %v565 = vlaneseq
    %v566 = vshrl.u32 %v565, 7
    %v567 = vsub.s32 1, %v566
    %v568 = vrot.slane %v557, %v567
    %v571 = vmul.f32 %v558, %v564
    %v572 = vmul.f32 %v559, %v568
    %v573 = vld [vmem:[#allocation9] sm:$0x3]
    %v575 = vlaneseq
    %v576 = vshrl.u32 %v575, 7
    %v577 = vsub.s32 0, %v576
    %v578 = vrot.slane %v573, %v577
    %v579 = vlaneseq
    %v580 = vshrl.u32 %v579, 7
    %v581 = vsub.s32 1, %v580
    %v582 = vrot.slane %v573, %v581
    %v585 = vadd.f32 %v571, %v578
    %v586 = vadd.f32 %v572, %v582
    %v587 = vmul.f32 %v585, 0.2
    %v588 = vmul.f32 %v586, 0.2
    %v589 = vmax.f32 %v585, %v587
    %v590 = vmax.f32 %v586, %v588
    %v591 = vpack.c.bf16 %v589, %v589
    %v592 = vpack.c.bf16 %v590, %v590
    %v593 = vld [vmem:[#allocation10] sm:$0xff]
    %v594 = vld [vmem:[#allocation10 + $0x8] sm:$0xff]
    %v595 = vld [vmem:[#allocation10 + $0x10] sm:$0xff]
    %v596 = vld [vmem:[#allocation10 + $0x18] sm:$0xff]
    %v597 = vld [vmem:[#allocation10 + $0x20] sm:$0xff]
    %v598 = vld [vmem:[#allocation10 + $0x28] sm:$0xff]
    %v599 = vld [vmem:[#allocation10 + $0x30] sm:$0xff]
    %v600 = vld [vmem:[#allocation10 + $0x38] sm:$0xff]
    %v601 = vld [vmem:[#allocation10 + $0x40] sm:$0xff]
    %v602 = vld [vmem:[#allocation10 + $0x48] sm:$0xff]
    %v603 = vld [vmem:[#allocation10 + $0x50] sm:$0xff]
    %v604 = vld [vmem:[#allocation10 + $0x58] sm:$0xff]
    %v605 = vld [vmem:[#allocation10 + $0x60] sm:$0xff]
    %v606 = vld [vmem:[#allocation10 + $0x68] sm:$0xff]
    %v607 = vld [vmem:[#allocation10 + $0x70] sm:$0xff]
    %v608 = vld [vmem:[#allocation10 + $0x78] sm:$0xff]
    %v609 = vld [vmem:[#allocation10 + $0x80] sm:$0xff]
    %v610 = vld [vmem:[#allocation10 + $0x88] sm:$0xff]
    %v611 = vld [vmem:[#allocation10 + $0x90] sm:$0xff]
    %v612 = vld [vmem:[#allocation10 + $0x98] sm:$0xff]
    %v613 = vld [vmem:[#allocation10 + $0xa0] sm:$0xff]
    %v614 = vld [vmem:[#allocation10 + $0xa8] sm:$0xff]
    %v615 = vld [vmem:[#allocation10 + $0xb0] sm:$0xff]
    %v616 = vld [vmem:[#allocation10 + $0xb8] sm:$0xff]
    %v617 = vld [vmem:[#allocation10 + $0xc0] sm:$0xff]
    %v618 = vld [vmem:[#allocation10 + $0xc8] sm:$0xff]
    %v619 = vld [vmem:[#allocation10 + $0xd0] sm:$0xff]
    %v620 = vld [vmem:[#allocation10 + $0xd8] sm:$0xff]
    %v621 = vld [vmem:[#allocation10 + $0xe0] sm:$0xff]
    %v622 = vld [vmem:[#allocation10 + $0xe8] sm:$0xff]
    %v623 = vld [vmem:[#allocation10 + $0xf0] sm:$0xff]
    %v624 = vld [vmem:[#allocation10 + $0xf8] sm:$0xff]
    %v625 = vld [vmem:[#allocation10 + $0x100] sm:$0xff]
    %v626 = vld [vmem:[#allocation10 + $0x108] sm:$0xff]
    %v627 = vld [vmem:[#allocation10 + $0x110] sm:$0xff]
    %v628 = vld [vmem:[#allocation10 + $0x118] sm:$0xff]
    %v629 = vld [vmem:[#allocation10 + $0x120] sm:$0xff]
    %v630 = vld [vmem:[#allocation10 + $0x128] sm:$0xff]
    %v631 = vld [vmem:[#allocation10 + $0x130] sm:$0xff]
    %v632 = vld [vmem:[#allocation10 + $0x138] sm:$0xff]
    %v633 = vld [vmem:[#allocation10 + $0x140] sm:$0xff]
    %v634 = vld [vmem:[#allocation10 + $0x148] sm:$0xff]
    %v635 = vld [vmem:[#allocation10 + $0x150] sm:$0xff]
    %v636 = vld [vmem:[#allocation10 + $0x158] sm:$0xff]
    %v637 = vld [vmem:[#allocation10 + $0x160] sm:$0xff]
    %v638 = vld [vmem:[#allocation10 + $0x168] sm:$0xff]
    %v639 = vld [vmem:[#allocation10 + $0x170] sm:$0xff]
    %v640 = vld [vmem:[#allocation10 + $0x178] sm:$0xff]
    %v641 = vld [vmem:[#allocation10 + $0x180] sm:$0xff]
    %v642 = vld [vmem:[#allocation10 + $0x188] sm:$0xff]
    %v643 = vld [vmem:[#allocation10 + $0x190] sm:$0xff]
    %v644 = vld [vmem:[#allocation10 + $0x198] sm:$0xff]
    %v645 = vld [vmem:[#allocation10 + $0x1a0] sm:$0xff]
    %v646 = vld [vmem:[#allocation10 + $0x1a8] sm:$0xff]
    %v647 = vld [vmem:[#allocation10 + $0x1b0] sm:$0xff]
    %v648 = vld [vmem:[#allocation10 + $0x1b8] sm:$0xff]
    %v649 = vld [vmem:[#allocation10 + $0x1c0] sm:$0xff]
    %v650 = vld [vmem:[#allocation10 + $0x1c8] sm:$0xff]
    %v651 = vld [vmem:[#allocation10 + $0x1d0] sm:$0xff]
    %v652 = vld [vmem:[#allocation10 + $0x1d8] sm:$0xff]
    %v653 = vld [vmem:[#allocation10 + $0x1e0] sm:$0xff]
    %v654 = vld [vmem:[#allocation10 + $0x1e8] sm:$0xff]
    %v655 = vld [vmem:[#allocation10 + $0x1f0] sm:$0xff]
    %v656 = vld [vmem:[#allocation10 + $0x1f8] sm:$0xff]
    %v657 = vld [vmem:[#allocation12] sm:$0xf]
    %v659 = vlaneseq
    %v660 = vshrl.u32 %v659, 7
    %v661 = vsub.s32 0, %v660
    %v662 = vrot.slane %v657, %v661
    %v663 = vlaneseq
    %v664 = vshrl.u32 %v663, 7
    %v665 = vsub.s32 1, %v664
    %v666 = vrot.slane %v657, %v665
    %v667 = vlaneseq
    %v668 = vshrl.u32 %v667, 7
    %v669 = vsub.s32 2, %v668
    %v670 = vrot.slane %v657, %v669
    %v671 = vlaneseq
    %v672 = vshrl.u32 %v671, 7
    %v673 = vsub.s32 3, %v672
    %v674 = vrot.slane %v657, %v673
    %v743 = vunpack.c.l.b16 %v593
    %v744 = vunpack.c.h.b16 %v593
    %v745 = vunpack.c.l.b16 %v594
    %v746 = vunpack.c.h.b16 %v594
    %v747 = vunpack.c.l.b16 %v595
    %v748 = vunpack.c.h.b16 %v595
    %v749 = vunpack.c.l.b16 %v596
    %v750 = vunpack.c.h.b16 %v596
    %v751 = vunpack.c.l.b16 %v597
    %v752 = vunpack.c.h.b16 %v597
    %v753 = vunpack.c.l.b16 %v598
    %v754 = vunpack.c.h.b16 %v598
    %v755 = vunpack.c.l.b16 %v599
    %v756 = vunpack.c.h.b16 %v599
    %v757 = vunpack.c.l.b16 %v600
    %v758 = vunpack.c.h.b16 %v600
    %v759 = vunpack.c.l.b16 %v601
    %v760 = vunpack.c.h.b16 %v601
    %v761 = vunpack.c.l.b16 %v602
    %v762 = vunpack.c.h.b16 %v602
    %v763 = vunpack.c.l.b16 %v603
    %v764 = vunpack.c.h.b16 %v603
    %v765 = vunpack.c.l.b16 %v604
    %v766 = vunpack.c.h.b16 %v604
    %v767 = vunpack.c.l.b16 %v605
    %v768 = vunpack.c.h.b16 %v605
    %v769 = vunpack.c.l.b16 %v606
    %v770 = vunpack.c.h.b16 %v606
    %v771 = vunpack.c.l.b16 %v607
    %v772 = vunpack.c.h.b16 %v607
    %v773 = vunpack.c.l.b16 %v608
    %v774 = vunpack.c.h.b16 %v608
    %v775 = vunpack.c.l.b16 %v609
    %v776 = vunpack.c.h.b16 %v609
    %v777 = vunpack.c.l.b16 %v610
    %v778 = vunpack.c.h.b16 %v610
    %v779 = vunpack.c.l.b16 %v611
    %v780 = vunpack.c.h.b16 %v611
    %v781 = vunpack.c.l.b16 %v612
    %v782 = vunpack.c.h.b16 %v612
    %v783 = vunpack.c.l.b16 %v613
    %v784 = vunpack.c.h.b16 %v613
    %v785 = vunpack.c.l.b16 %v614
    %v786 = vunpack.c.h.b16 %v614
    %v787 = vunpack.c.l.b16 %v615
    %v788 = vunpack.c.h.b16 %v615
    %v789 = vunpack.c.l.b16 %v616
    %v790 = vunpack.c.h.b16 %v616
    %v791 = vunpack.c.l.b16 %v617
    %v792 = vunpack.c.h.b16 %v617
    %v793 = vunpack.c.l.b16 %v618
    %v794 = vunpack.c.h.b16 %v618
    %v795 = vunpack.c.l.b16 %v619
    %v796 = vunpack.c.h.b16 %v619
    %v797 = vunpack.c.l.b16 %v620
    %v798 = vunpack.c.h.b16 %v620
    %v799 = vunpack.c.l.b16 %v621
    %v800 = vunpack.c.h.b16 %v621
    %v801 = vunpack.c.l.b16 %v622
    %v802 = vunpack.c.h.b16 %v622
    %v803 = vunpack.c.l.b16 %v623
    %v804 = vunpack.c.h.b16 %v623
    %v805 = vunpack.c.l.b16 %v624
    %v806 = vunpack.c.h.b16 %v624
    %v807 = vunpack.c.l.b16 %v625
    %v808 = vunpack.c.h.b16 %v625
    %v809 = vunpack.c.l.b16 %v626
    %v810 = vunpack.c.h.b16 %v626
    %v811 = vunpack.c.l.b16 %v627
    %v812 = vunpack.c.h.b16 %v627
    %v813 = vunpack.c.l.b16 %v628
    %v814 = vunpack.c.h.b16 %v628
    %v815 = vunpack.c.l.b16 %v629
    %v816 = vunpack.c.h.b16 %v629
    %v817 = vunpack.c.l.b16 %v630
    %v818 = vunpack.c.h.b16 %v630
    %v819 = vunpack.c.l.b16 %v631
    %v820 = vunpack.c.h.b16 %v631
    %v821 = vunpack.c.l.b16 %v632
    %v822 = vunpack.c.h.b16 %v632
    %v823 = vunpack.c.l.b16 %v633
    %v824 = vunpack.c.h.b16 %v633
    %v825 = vunpack.c.l.b16 %v634
    %v826 = vunpack.c.h.b16 %v634
    %v827 = vunpack.c.l.b16 %v635
    %v828 = vunpack.c.h.b16 %v635
    %v829 = vunpack.c.l.b16 %v636
    %v830 = vunpack.c.h.b16 %v636
    %v831 = vunpack.c.l.b16 %v637
    %v832 = vunpack.c.h.b16 %v637
    %v833 = vunpack.c.l.b16 %v638
    %v834 = vunpack.c.h.b16 %v638
    %v835 = vunpack.c.l.b16 %v639
    %v836 = vunpack.c.h.b16 %v639
    %v837 = vunpack.c.l.b16 %v640
    %v838 = vunpack.c.h.b16 %v640
    %v839 = vunpack.c.l.b16 %v641
    %v840 = vunpack.c.h.b16 %v641
    %v841 = vunpack.c.l.b16 %v642
    %v842 = vunpack.c.h.b16 %v642
    %v843 = vunpack.c.l.b16 %v643
    %v844 = vunpack.c.h.b16 %v643
    %v845 = vunpack.c.l.b16 %v644
    %v846 = vunpack.c.h.b16 %v644
    %v847 = vunpack.c.l.b16 %v645
    %v848 = vunpack.c.h.b16 %v645
    %v849 = vunpack.c.l.b16 %v646
    %v850 = vunpack.c.h.b16 %v646
    %v851 = vunpack.c.l.b16 %v647
    %v852 = vunpack.c.h.b16 %v647
    %v853 = vunpack.c.l.b16 %v648
    %v854 = vunpack.c.h.b16 %v648
    %v855 = vunpack.c.l.b16 %v649
    %v856 = vunpack.c.h.b16 %v649
    %v857 = vunpack.c.l.b16 %v650
    %v858 = vunpack.c.h.b16 %v650
    %v859 = vunpack.c.l.b16 %v651
    %v860 = vunpack.c.h.b16 %v651
    %v861 = vunpack.c.l.b16 %v652
    %v862 = vunpack.c.h.b16 %v652
    %v863 = vunpack.c.l.b16 %v653
    %v864 = vunpack.c.h.b16 %v653
    %v865 = vunpack.c.l.b16 %v654
    %v866 = vunpack.c.h.b16 %v654
    %v867 = vunpack.c.l.b16 %v655
    %v868 = vunpack.c.h.b16 %v655
    %v869 = vunpack.c.l.b16 %v656
    %v870 = vunpack.c.h.b16 %v656
    %v871 = vpack.c.b16 %v747, %v743
    %v872 = vpack.c.b16 %v748, %v744
    %v873 = vpack.c.b16 %v749, %v745
    %v874 = vpack.c.b16 %v750, %v746
    %v875 = vpack.c.b16 %v755, %v751
    %v876 = vpack.c.b16 %v756, %v752
    %v877 = vpack.c.b16 %v757, %v753
    %v878 = vpack.c.b16 %v758, %v754
    %v879 = vpack.c.b16 %v763, %v759
    %v880 = vpack.c.b16 %v764, %v760
    %v881 = vpack.c.b16 %v765, %v761
    %v882 = vpack.c.b16 %v766, %v762
    %v883 = vpack.c.b16 %v771, %v767
    %v884 = vpack.c.b16 %v772, %v768
    %v885 = vpack.c.b16 %v773, %v769
    %v886 = vpack.c.b16 %v774, %v770
    %v887 = vpack.c.b16 %v779, %v775
    %v888 = vpack.c.b16 %v780, %v776
    %v889 = vpack.c.b16 %v781, %v777
    %v890 = vpack.c.b16 %v782, %v778
    %v891 = vpack.c.b16 %v787, %v783
    %v892 = vpack.c.b16 %v788, %v784
    %v893 = vpack.c.b16 %v789, %v785
    %v894 = vpack.c.b16 %v790, %v786
    %v895 = vpack.c.b16 %v795, %v791
    %v896 = vpack.c.b16 %v796, %v792
    %v897 = vpack.c.b16 %v797, %v793
    %v898 = vpack.c.b16 %v798, %v794
    %v899 = vpack.c.b16 %v803, %v799
    %v900 = vpack.c.b16 %v804, %v800
    %v901 = vpack.c.b16 %v805, %v801
    %v902 = vpack.c.b16 %v806, %v802
    %v903 = vpack.c.b16 %v811, %v807
    %v904 = vpack.c.b16 %v812, %v808
    %v905 = vpack.c.b16 %v813, %v809
    %v906 = vpack.c.b16 %v814, %v810
    %v907 = vpack.c.b16 %v819, %v815
    %v908 = vpack.c.b16 %v820, %v816
    %v909 = vpack.c.b16 %v821, %v817
    %v910 = vpack.c.b16 %v822, %v818
    %v911 = vpack.c.b16 %v827, %v823
    %v912 = vpack.c.b16 %v828, %v824
    %v913 = vpack.c.b16 %v829, %v825
    %v914 = vpack.c.b16 %v830, %v826
    %v915 = vpack.c.b16 %v835, %v831
    %v916 = vpack.c.b16 %v836, %v832
    %v917 = vpack.c.b16 %v837, %v833
    %v918 = vpack.c.b16 %v838, %v834
    %v919 = vpack.c.b16 %v843, %v839
    %v920 = vpack.c.b16 %v844, %v840
    %v921 = vpack.c.b16 %v845, %v841
    %v922 = vpack.c.b16 %v846, %v842
    %v923 = vpack.c.b16 %v851, %v847
    %v924 = vpack.c.b16 %v852, %v848
    %v925 = vpack.c.b16 %v853, %v849
    %v926 = vpack.c.b16 %v854, %v850
    %v927 = vpack.c.b16 %v859, %v855
    %v928 = vpack.c.b16 %v860, %v856
    %v929 = vpack.c.b16 %v861, %v857
    %v930 = vpack.c.b16 %v862, %v858
    %v931 = vpack.c.b16 %v867, %v863
    %v932 = vpack.c.b16 %v868, %v864
    %v933 = vpack.c.b16 %v869, %v865
    %v934 = vpack.c.b16 %v870, %v866
    %999 = vmatprep.subr.bf16.mxu0 %v900
    %1000 = vmatpush1.bf16.msra.mxu0 %v899
    %1001 = vmatprep.subr.bf16.mxu0 %v896
    %1002 = vmatpush1.bf16.msra.mxu0 %v895
    %1003 = vmatprep.subr.bf16.mxu0 %v892
    %1004 = vmatpush1.bf16.msra.mxu0 %v891
    %1005 = vmatprep.subr.bf16.mxu0 %v888
    %1006 = vmatpush1.bf16.msra.mxu0 %v887
    %1007 = vmatprep.subr.bf16.mxu0 %v884
    %1008 = vmatpush1.bf16.msra.mxu0 %v883
    %1009 = vmatprep.subr.bf16.mxu0 %v880
    %1010 = vmatpush1.bf16.msra.mxu0 %v879
    %1011 = vmatprep.subr.bf16.mxu0 %v876
    %1012 = vmatpush1.bf16.msra.mxu0 %v875
    %1013 = vmatprep.subr.bf16.mxu0 %v872
    %1014 = vmatpush1.bf16.msra.mxu0 %v871
    %1015 = vmatprep.subr.bf16.mxu0 %v932
    %1016 = vmatpush2.bf16.msra.mxu0 %v931
    %1017 = vmatprep.subr.bf16.mxu0 %v928
    %1018 = vmatpush2.bf16.msra.mxu0 %v927
    %1019 = vmatprep.subr.bf16.mxu0 %v924
    %1020 = vmatpush2.bf16.msra.mxu0 %v923
    %1021 = vmatprep.subr.bf16.mxu0 %v920
    %1022 = vmatpush2.bf16.msra.mxu0 %v919
    %1023 = vmatprep.subr.bf16.mxu0 %v916
    %1024 = vmatpush2.bf16.msra.mxu0 %v915
    %1025 = vmatprep.subr.bf16.mxu0 %v912
    %1026 = vmatpush2.bf16.msra.mxu0 %v911
    %1027 = vmatprep.subr.bf16.mxu0 %v908
    %1028 = vmatpush2.bf16.msra.mxu0 %v907
    %1029 = vmatprep.subr.bf16.mxu0 %v904
    %1030 = vmatpush2.bf16.msra.mxu0 %v903
    %1031 = vmatprep.mubr.bf16.mxu0 %v592
    %1032 = vmatmul.mubr.bf16.gmra.mxu0 %v591
    %v1033 = vpop.f32.mrf.mxu0
    %v1034 = vadd.f32 %v662, %v1033
    %v1035 = vpop.f32.mrf.mxu0
    %v1036 = vadd.f32 %v666, %v1035
    %v1037 = vpop.f32.mrf.mxu0
    %v1038 = vpop.f32.mrf.mxu0
    %1039 = vdwg.mxu0
    %1040 = vmatprep.subr.bf16.mxu0 %v902
    %1041 = vmatpush1.bf16.msra.mxu0 %v901
    %1042 = vmatprep.subr.bf16.mxu0 %v898
    %1043 = vmatpush1.bf16.msra.mxu0 %v897
    %1044 = vmatprep.subr.bf16.mxu0 %v894
    %1045 = vmatpush1.bf16.msra.mxu0 %v893
    %1046 = vmatprep.subr.bf16.mxu0 %v890
    %1047 = vmatpush1.bf16.msra.mxu0 %v889
    %1048 = vmatprep.subr.bf16.mxu0 %v886
    %1049 = vmatpush1.bf16.msra.mxu0 %v885
    %1050 = vmatprep.subr.bf16.mxu0 %v882
    %1051 = vmatpush1.bf16.msra.mxu0 %v881
    %1052 = vmatprep.subr.bf16.mxu0 %v878
    %1053 = vmatpush1.bf16.msra.mxu0 %v877
    %1054 = vmatprep.subr.bf16.mxu0 %v874
    %1055 = vmatpush1.bf16.msra.mxu0 %v873
    %1056 = vmatprep.subr.bf16.mxu0 %v934
    %1057 = vmatpush2.bf16.msra.mxu0 %v933
    %1058 = vmatprep.subr.bf16.mxu0 %v930
    %1059 = vmatpush2.bf16.msra.mxu0 %v929
    %1060 = vmatprep.subr.bf16.mxu0 %v926
    %1061 = vmatpush2.bf16.msra.mxu0 %v925
    %1062 = vmatprep.subr.bf16.mxu0 %v922
    %1063 = vmatpush2.bf16.msra.mxu0 %v921
    %1064 = vmatprep.subr.bf16.mxu0 %v918
    %1065 = vmatpush2.bf16.msra.mxu0 %v917
    %1066 = vmatprep.subr.bf16.mxu0 %v914
    %1067 = vmatpush2.bf16.msra.mxu0 %v913
    %1068 = vmatprep.subr.bf16.mxu0 %v910
    %1069 = vmatpush2.bf16.msra.mxu0 %v909
    %1070 = vmatprep.subr.bf16.mxu0 %v906
    %1071 = vmatpush2.bf16.msra.mxu0 %v905
    %1072 = vmatprep.mubr.bf16.mxu0 %v592
    %1073 = vmatmul.mubr.bf16.gmra.mxu0 %v591
    %v1074 = vpop.f32.mrf.mxu0
    %v1075 = vadd.f32 %v670, %v1074
    %v1076 = vpop.f32.mrf.mxu0
    %v1077 = vadd.f32 %v674, %v1076
    %v1078 = vpop.f32.mrf.mxu0
    %v1079 = vpop.f32.mrf.mxu0
    %1080 = vdwg.mxu0
    %v1081 = vmul.f32 %v1034, %v231
    %v1082 = vmul.f32 %v1036, %v231
    %v1083 = vmul.f32 %v1075, %v231
    %v1084 = vmul.f32 %v1077, %v231
    %v1085 = vrot.slane %v1081, 4
    %v1086 = vadd.f32 %v1081, %v1085
    %v1087 = vrot.slane %v1086, 2
    %v1088 = vadd.f32 %v1086, %v1087
    %v1089 = vrot.slane %v1088, 1
    %v1090 = vadd.f32 %v1088, %v1089
    %v1091 = vrot.slane %v1082, 4
    %v1092 = vadd.f32 %v1082, %v1091
    %v1093 = vrot.slane %v1092, 2
    %v1094 = vadd.f32 %v1092, %v1093
    %v1095 = vrot.slane %v1094, 1
    %v1096 = vadd.f32 %v1094, %v1095
    %v1097 = vrot.slane %v1083, 4
    %v1098 = vadd.f32 %v1083, %v1097
    %v1099 = vrot.slane %v1098, 2
    %v1100 = vadd.f32 %v1098, %v1099
    %v1101 = vrot.slane %v1100, 1
    %v1102 = vadd.f32 %v1100, %v1101
    %v1103 = vrot.slane %v1084, 4
    %v1104 = vadd.f32 %v1084, %v1103
    %v1105 = vrot.slane %v1104, 2
    %v1106 = vadd.f32 %v1104, %v1105
    %v1107 = vrot.slane %v1106, 1
    %v1108 = vadd.f32 %v1106, %v1107
    %v1109 = vmul.f32 %v1081, %v1034
    %v1110 = vmul.f32 %v1082, %v1036
    %v1111 = vmul.f32 %v1083, %v1075
    %v1112 = vmul.f32 %v1084, %v1077
    %v1113 = vrot.slane %v1109, 4
    %v1114 = vadd.f32 %v1109, %v1113
    %v1115 = vrot.slane %v1114, 2
    %v1116 = vadd.f32 %v1114, %v1115
    %v1117 = vrot.slane %v1116, 1
    %v1118 = vadd.f32 %v1116, %v1117
    %v1119 = vrot.slane %v1110, 4
    %v1120 = vadd.f32 %v1110, %v1119
    %v1121 = vrot.slane %v1120, 2
    %v1122 = vadd.f32 %v1120, %v1121
    %v1123 = vrot.slane %v1122, 1
    %v1124 = vadd.f32 %v1122, %v1123
    %v1125 = vrot.slane %v1111, 4
    %v1126 = vadd.f32 %v1111, %v1125
    %v1127 = vrot.slane %v1126, 2
    %v1128 = vadd.f32 %v1126, %v1127
    %v1129 = vrot.slane %v1128, 1
    %v1130 = vadd.f32 %v1128, %v1129
    %v1131 = vrot.slane %v1112, 4
    %v1132 = vadd.f32 %v1112, %v1131
    %v1133 = vrot.slane %v1132, 2
    %v1134 = vadd.f32 %v1132, %v1133
    %v1135 = vrot.slane %v1134, 1
    %v1136 = vadd.f32 %v1134, %v1135
    %v1137 = vmul.f32 %v1090, 0.25
    %v1138 = vmul.f32 %v1096, 0.25
    %v1139 = vmul.f32 %v1102, 0.25
    %v1140 = vmul.f32 %v1108, 0.25
    %v1141 = vmul.f32 %v1118, 0.25
    %v1142 = vmul.f32 %v1124, 0.25
    %v1143 = vmul.f32 %v1130, 0.25
    %v1144 = vmul.f32 %v1136, 0.25
    %v1145 = vmul.f32 %v1137, %v1137
    %v1146 = vmul.f32 %v1138, %v1138
    %v1147 = vmul.f32 %v1139, %v1139
    %v1148 = vmul.f32 %v1140, %v1140
    %v1149 = vsub.f32 %v1141, %v1145
    %v1150 = vsub.f32 %v1142, %v1146
    %v1151 = vsub.f32 %v1143, %v1147
    %v1152 = vsub.f32 %v1144, %v1148
    %v1153 = vmax.f32 %v1149, 0.0
    %v1154 = vmax.f32 %v1150, 0.0
    %v1155 = vmax.f32 %v1151, 0.0
    %v1156 = vmax.f32 %v1152, 0.0
    %v1157 = vld [vmem:[#allocation13] sm:$0xf]
    %v1158 = vadd.f32 %v1153, 1e-05
    %v1159 = vadd.f32 %v1154, 1e-05
    %v1160 = vadd.f32 %v1155, 1e-05
    %v1161 = vadd.f32 %v1156, 1e-05
    %v1162 = vrsqrt.pop %v1158
    %v1163 = vrsqrt.pop %v1159
    %v1164 = vrsqrt.pop %v1160
    %v1165 = vrsqrt.pop %v1161
    %v1170 = vcombine.low %v1162, %v1163
    %v1171 = vcombine.low %v1164, %v1165
    %v1173 = vunpack.c.l.s4 1966171168
    %v1174 = vunpack.c.0.s8 %v1173
    %v1175 = vlaneseq
    %v1176 = vshrl.u32 %v1175, 7
    %v1177 = vsub.s32 %v1174, %v1176
    %v1178 = vrot.slane %v1170, %v1177
    %v1180 = vunpack.c.l.s4 1966171168
    %v1181 = vunpack.c.0.s8 %v1180
    %v1182 = vlaneseq
    %v1183 = vshrl.u32 %v1182, 7
    %v1184 = vsub.s32 %v1181, %v1183
    %v1185 = vrot.slane %v1171, %v1184
    %v1186 = vcombine.low %v1178, %v1185
    %v1188 = vunpack.c.l.s4 1966171168
    %v1189 = vunpack.c.0.s8 %v1188
    %v1190 = vlaneseq
    %v1191 = vshrl.u32 %v1190, 7
    %v1192 = vsub.s32 %v1189, %v1191
    %v1193 = vrot.slane %v1186, %v1192
    %v1195 = vmul.f32 %v1157, %v1193
    %v1196 = vsub.f32 %v1034, %v1137
    %v1197 = vsub.f32 %v1036, %v1138
    %v1198 = vsub.f32 %v1075, %v1139
    %v1199 = vsub.f32 %v1077, %v1140
    %v1201 = vlaneseq
    %v1202 = vshrl.u32 %v1201, 7
    %v1203 = vsub.s32 0, %v1202
    %v1204 = vrot.slane %v1195, %v1203
    %v1205 = vlaneseq
    %v1206 = vshrl.u32 %v1205, 7
    %v1207 = vsub.s32 1, %v1206
    %v1208 = vrot.slane %v1195, %v1207
    %v1209 = vlaneseq
    %v1210 = vshrl.u32 %v1209, 7
    %v1211 = vsub.s32 2, %v1210
    %v1212 = vrot.slane %v1195, %v1211
    %v1213 = vlaneseq
    %v1214 = vshrl.u32 %v1213, 7
    %v1215 = vsub.s32 3, %v1214
    %v1216 = vrot.slane %v1195, %v1215
    %v1221 = vmul.f32 %v1196, %v1204
    %v1222 = vmul.f32 %v1197, %v1208
    %v1223 = vmul.f32 %v1198, %v1212
    %v1224 = vmul.f32 %v1199, %v1216
    %v1225 = vld [vmem:[#allocation15] sm:$0xf]
    %v1227 = vlaneseq
    %v1228 = vshrl.u32 %v1227, 7
    %v1229 = vsub.s32 0, %v1228
    %v1230 = vrot.slane %v1225, %v1229
    %v1231 = vlaneseq
    %v1232 = vshrl.u32 %v1231, 7
    %v1233 = vsub.s32 1, %v1232
    %v1234 = vrot.slane %v1225, %v1233
    %v1235 = vlaneseq
    %v1236 = vshrl.u32 %v1235, 7
    %v1237 = vsub.s32 2, %v1236
    %v1238 = vrot.slane %v1225, %v1237
    %v1239 = vlaneseq
    %v1240 = vshrl.u32 %v1239, 7
    %v1241 = vsub.s32 3, %v1240
    %v1242 = vrot.slane %v1225, %v1241
    %v1247 = vadd.f32 %v1221, %v1230
    %v1248 = vadd.f32 %v1222, %v1234
    %v1249 = vadd.f32 %v1223, %v1238
    %v1250 = vadd.f32 %v1224, %v1242
    %v1251 = vmul.f32 %v1247, 0.2
    %v1252 = vmul.f32 %v1248, 0.2
    %v1253 = vmul.f32 %v1249, 0.2
    %v1254 = vmul.f32 %v1250, 0.2
    %v1255 = vmax.f32 %v1247, %v1251
    %v1256 = vmax.f32 %v1248, %v1252
    %v1257 = vmax.f32 %v1249, %v1253
    %v1258 = vmax.f32 %v1250, %v1254
    %v1259 = vpack.c.bf16 %v1255, %v1255
    %v1260 = vpack.c.bf16 %v1256, %v1256
    %v1261 = vpack.c.bf16 %v1257, %v1257
    %v1262 = vpack.c.bf16 %v1258, %v1258
    %v1263 = vld [vmem:[#allocation16] sm:$0xff]
    %v1264 = vld [vmem:[#allocation16 + $0x8] sm:$0xff]
    %v1265 = vld [vmem:[#allocation16 + $0x10] sm:$0xff]
    %v1266 = vld [vmem:[#allocation16 + $0x18] sm:$0xff]
    %v1267 = vld [vmem:[#allocation16 + $0x20] sm:$0xff]
    %v1268 = vld [vmem:[#allocation16 + $0x28] sm:$0xff]
    %v1269 = vld [vmem:[#allocation16 + $0x30] sm:$0xff]
    %v1270 = vld [vmem:[#allocation16 + $0x38] sm:$0xff]
    %v1271 = vld [vmem:[#allocation16 + $0x40] sm:$0xff]
    %v1272 = vld [vmem:[#allocation16 + $0x48] sm:$0xff]
    %v1273 = vld [vmem:[#allocation16 + $0x50] sm:$0xff]
    %v1274 = vld [vmem:[#allocation16 + $0x58] sm:$0xff]
    %v1275 = vld [vmem:[#allocation16 + $0x60] sm:$0xff]
    %v1276 = vld [vmem:[#allocation16 + $0x68] sm:$0xff]
    %v1277 = vld [vmem:[#allocation16 + $0x70] sm:$0xff]
    %v1278 = vld [vmem:[#allocation16 + $0x78] sm:$0xff]
    %v1279 = vld [vmem:[#allocation16 + $0x80] sm:$0xff]
    %v1280 = vld [vmem:[#allocation16 + $0x88] sm:$0xff]
    %v1281 = vld [vmem:[#allocation16 + $0x90] sm:$0xff]
    %v1282 = vld [vmem:[#allocation16 + $0x98] sm:$0xff]
    %v1283 = vld [vmem:[#allocation16 + $0xa0] sm:$0xff]
    %v1284 = vld [vmem:[#allocation16 + $0xa8] sm:$0xff]
    %v1285 = vld [vmem:[#allocation16 + $0xb0] sm:$0xff]
    %v1286 = vld [vmem:[#allocation16 + $0xb8] sm:$0xff]
    %v1287 = vld [vmem:[#allocation16 + $0xc0] sm:$0xff]
    %v1288 = vld [vmem:[#allocation16 + $0xc8] sm:$0xff]
    %v1289 = vld [vmem:[#allocation16 + $0xd0] sm:$0xff]
    %v1290 = vld [vmem:[#allocation16 + $0xd8] sm:$0xff]
    %v1291 = vld [vmem:[#allocation16 + $0xe0] sm:$0xff]
    %v1292 = vld [vmem:[#allocation16 + $0xe8] sm:$0xff]
    %v1293 = vld [vmem:[#allocation16 + $0xf0] sm:$0xff]
    %v1294 = vld [vmem:[#allocation16 + $0xf8] sm:$0xff]
    %v1295 = vld [vmem:[#allocation16 + $0x100] sm:$0xff]
    %v1296 = vld [vmem:[#allocation16 + $0x108] sm:$0xff]
    %v1297 = vld [vmem:[#allocation16 + $0x110] sm:$0xff]
    %v1298 = vld [vmem:[#allocation16 + $0x118] sm:$0xff]
    %v1299 = vld [vmem:[#allocation16 + $0x120] sm:$0xff]
    %v1300 = vld [vmem:[#allocation16 + $0x128] sm:$0xff]
    %v1301 = vld [vmem:[#allocation16 + $0x130] sm:$0xff]
    %v1302 = vld [vmem:[#allocation16 + $0x138] sm:$0xff]
    %v1303 = vld [vmem:[#allocation16 + $0x140] sm:$0xff]
    %v1304 = vld [vmem:[#allocation16 + $0x148] sm:$0xff]
    %v1305 = vld [vmem:[#allocation16 + $0x150] sm:$0xff]
    %v1306 = vld [vmem:[#allocation16 + $0x158] sm:$0xff]
    %v1307 = vld [vmem:[#allocation16 + $0x160] sm:$0xff]
    %v1308 = vld [vmem:[#allocation16 + $0x168] sm:$0xff]
    %v1309 = vld [vmem:[#allocation16 + $0x170] sm:$0xff]
    %v1310 = vld [vmem:[#allocation16 + $0x178] sm:$0xff]
    %v1311 = vld [vmem:[#allocation16 + $0x180] sm:$0xff]
    %v1312 = vld [vmem:[#allocation16 + $0x188] sm:$0xff]
    %v1313 = vld [vmem:[#allocation16 + $0x190] sm:$0xff]
    %v1314 = vld [vmem:[#allocation16 + $0x198] sm:$0xff]
    %v1315 = vld [vmem:[#allocation16 + $0x1a0] sm:$0xff]
    %v1316 = vld [vmem:[#allocation16 + $0x1a8] sm:$0xff]
    %v1317 = vld [vmem:[#allocation16 + $0x1b0] sm:$0xff]
    %v1318 = vld [vmem:[#allocation16 + $0x1b8] sm:$0xff]
    %v1319 = vld [vmem:[#allocation16 + $0x1c0] sm:$0xff]
    %v1320 = vld [vmem:[#allocation16 + $0x1c8] sm:$0xff]
    %v1321 = vld [vmem:[#allocation16 + $0x1d0] sm:$0xff]
    %v1322 = vld [vmem:[#allocation16 + $0x1d8] sm:$0xff]
    %v1323 = vld [vmem:[#allocation16 + $0x1e0] sm:$0xff]
    %v1324 = vld [vmem:[#allocation16 + $0x1e8] sm:$0xff]
    %v1325 = vld [vmem:[#allocation16 + $0x1f0] sm:$0xff]
    %v1326 = vld [vmem:[#allocation16 + $0x1f8] sm:$0xff]
    %v1327 = vld [vmem:[#allocation16 + $0x200] sm:$0xff]
    %v1328 = vld [vmem:[#allocation16 + $0x208] sm:$0xff]
    %v1329 = vld [vmem:[#allocation16 + $0x210] sm:$0xff]
    %v1330 = vld [vmem:[#allocation16 + $0x218] sm:$0xff]
    %v1331 = vld [vmem:[#allocation16 + $0x220] sm:$0xff]
    %v1332 = vld [vmem:[#allocation16 + $0x228] sm:$0xff]
    %v1333 = vld [vmem:[#allocation16 + $0x230] sm:$0xff]
    %v1334 = vld [vmem:[#allocation16 + $0x238] sm:$0xff]
    %v1335 = vld [vmem:[#allocation16 + $0x240] sm:$0xff]
    %v1336 = vld [vmem:[#allocation16 + $0x248] sm:$0xff]
    %v1337 = vld [vmem:[#allocation16 + $0x250] sm:$0xff]
    %v1338 = vld [vmem:[#allocation16 + $0x258] sm:$0xff]
    %v1339 = vld [vmem:[#allocation16 + $0x260] sm:$0xff]
    %v1340 = vld [vmem:[#allocation16 + $0x268] sm:$0xff]
    %v1341 = vld [vmem:[#allocation16 + $0x270] sm:$0xff]
    %v1342 = vld [vmem:[#allocation16 + $0x278] sm:$0xff]
    %v1343 = vld [vmem:[#allocation16 + $0x280] sm:$0xff]
    %v1344 = vld [vmem:[#allocation16 + $0x288] sm:$0xff]
    %v1345 = vld [vmem:[#allocation16 + $0x290] sm:$0xff]
    %v1346 = vld [vmem:[#allocation16 + $0x298] sm:$0xff]
    %v1347 = vld [vmem:[#allocation16 + $0x2a0] sm:$0xff]
    %v1348 = vld [vmem:[#allocation16 + $0x2a8] sm:$0xff]
    %v1349 = vld [vmem:[#allocation16 + $0x2b0] sm:$0xff]
    %v1350 = vld [vmem:[#allocation16 + $0x2b8] sm:$0xff]
    %v1351 = vld [vmem:[#allocation16 + $0x2c0] sm:$0xff]
    %v1352 = vld [vmem:[#allocation16 + $0x2c8] sm:$0xff]
    %v1353 = vld [vmem:[#allocation16 + $0x2d0] sm:$0xff]
    %v1354 = vld [vmem:[#allocation16 + $0x2d8] sm:$0xff]
    %v1355 = vld [vmem:[#allocation16 + $0x2e0] sm:$0xff]
    %v1356 = vld [vmem:[#allocation16 + $0x2e8] sm:$0xff]
    %v1357 = vld [vmem:[#allocation16 + $0x2f0] sm:$0xff]
    %v1358 = vld [vmem:[#allocation16 + $0x2f8] sm:$0xff]
    %v1359 = vld [vmem:[#allocation16 + $0x300] sm:$0xff]
    %v1360 = vld [vmem:[#allocation16 + $0x308] sm:$0xff]
    %v1361 = vld [vmem:[#allocation16 + $0x310] sm:$0xff]
    %v1362 = vld [vmem:[#allocation16 + $0x318] sm:$0xff]
    %v1363 = vld [vmem:[#allocation16 + $0x320] sm:$0xff]
    %v1364 = vld [vmem:[#allocation16 + $0x328] sm:$0xff]
    %v1365 = vld [vmem:[#allocation16 + $0x330] sm:$0xff]
    %v1366 = vld [vmem:[#allocation16 + $0x338] sm:$0xff]
    %v1367 = vld [vmem:[#allocation16 + $0x340] sm:$0xff]
    %v1368 = vld [vmem:[#allocation16 + $0x348] sm:$0xff]
    %v1369 = vld [vmem:[#allocation16 + $0x350] sm:$0xff]
    %v1370 = vld [vmem:[#allocation16 + $0x358] sm:$0xff]
    %v1371 = vld [vmem:[#allocation16 + $0x360] sm:$0xff]
    %v1372 = vld [vmem:[#allocation16 + $0x368] sm:$0xff]
    %v1373 = vld [vmem:[#allocation16 + $0x370] sm:$0xff]
    %v1374 = vld [vmem:[#allocation16 + $0x378] sm:$0xff]
    %v1375 = vld [vmem:[#allocation16 + $0x380] sm:$0xff]
    %v1376 = vld [vmem:[#allocation16 + $0x388] sm:$0xff]
    %v1377 = vld [vmem:[#allocation16 + $0x390] sm:$0xff]
    %v1378 = vld [vmem:[#allocation16 + $0x398] sm:$0xff]
    %v1379 = vld [vmem:[#allocation16 + $0x3a0] sm:$0xff]
    %v1380 = vld [vmem:[#allocation16 + $0x3a8] sm:$0xff]
    %v1381 = vld [vmem:[#allocation16 + $0x3b0] sm:$0xff]
    %v1382 = vld [vmem:[#allocation16 + $0x3b8] sm:$0xff]
    %v1383 = vld [vmem:[#allocation16 + $0x3c0] sm:$0xff]
    %v1384 = vld [vmem:[#allocation16 + $0x3c8] sm:$0xff]
    %v1385 = vld [vmem:[#allocation16 + $0x3d0] sm:$0xff]
    %v1386 = vld [vmem:[#allocation16 + $0x3d8] sm:$0xff]
    %v1387 = vld [vmem:[#allocation16 + $0x3e0] sm:$0xff]
    %v1388 = vld [vmem:[#allocation16 + $0x3e8] sm:$0xff]
    %v1389 = vld [vmem:[#allocation16 + $0x3f0] sm:$0xff]
    %v1390 = vld [vmem:[#allocation16 + $0x3f8] sm:$0xff]
    %v1391 = vld [vmem:[#allocation16 + $0x400] sm:$0xff]
    %v1392 = vld [vmem:[#allocation16 + $0x408] sm:$0xff]
    %v1393 = vld [vmem:[#allocation16 + $0x410] sm:$0xff]
    %v1394 = vld [vmem:[#allocation16 + $0x418] sm:$0xff]
    %v1395 = vld [vmem:[#allocation16 + $0x420] sm:$0xff]
    %v1396 = vld [vmem:[#allocation16 + $0x428] sm:$0xff]
    %v1397 = vld [vmem:[#allocation16 + $0x430] sm:$0xff]
    %v1398 = vld [vmem:[#allocation16 + $0x438] sm:$0xff]
    %v1399 = vld [vmem:[#allocation16 + $0x440] sm:$0xff]
    %v1400 = vld [vmem:[#allocation16 + $0x448] sm:$0xff]
    %v1401 = vld [vmem:[#allocation16 + $0x450] sm:$0xff]
    %v1402 = vld [vmem:[#allocation16 + $0x458] sm:$0xff]
    %v1403 = vld [vmem:[#allocation16 + $0x460] sm:$0xff]
    %v1404 = vld [vmem:[#allocation16 + $0x468] sm:$0xff]
    %v1405 = vld [vmem:[#allocation16 + $0x470] sm:$0xff]
    %v1406 = vld [vmem:[#allocation16 + $0x478] sm:$0xff]
    %v1407 = vld [vmem:[#allocation16 + $0x480] sm:$0xff]
    %v1408 = vld [vmem:[#allocation16 + $0x488] sm:$0xff]
    %v1409 = vld [vmem:[#allocation16 + $0x490] sm:$0xff]
    %v1410 = vld [vmem:[#allocation16 + $0x498] sm:$0xff]
    %v1411 = vld [vmem:[#allocation16 + $0x4a0] sm:$0xff]
    %v1412 = vld [vmem:[#allocation16 + $0x4a8] sm:$0xff]
    %v1413 = vld [vmem:[#allocation16 + $0x4b0] sm:$0xff]
    %v1414 = vld [vmem:[#allocation16 + $0x4b8] sm:$0xff]
    %v1415 = vld [vmem:[#allocation16 + $0x4c0] sm:$0xff]
    %v1416 = vld [vmem:[#allocation16 + $0x4c8] sm:$0xff]
    %v1417 = vld [vmem:[#allocation16 + $0x4d0] sm:$0xff]
    %v1418 = vld [vmem:[#allocation16 + $0x4d8] sm:$0xff]
    %v1419 = vld [vmem:[#allocation16 + $0x4e0] sm:$0xff]
    %v1420 = vld [vmem:[#allocation16 + $0x4e8] sm:$0xff]
    %v1421 = vld [vmem:[#allocation16 + $0x4f0] sm:$0xff]
    %v1422 = vld [vmem:[#allocation16 + $0x4f8] sm:$0xff]
    %v1423 = vld [vmem:[#allocation16 + $0x500] sm:$0xff]
    %v1424 = vld [vmem:[#allocation16 + $0x508] sm:$0xff]
    %v1425 = vld [vmem:[#allocation16 + $0x510] sm:$0xff]
    %v1426 = vld [vmem:[#allocation16 + $0x518] sm:$0xff]
    %v1427 = vld [vmem:[#allocation16 + $0x520] sm:$0xff]
    %v1428 = vld [vmem:[#allocation16 + $0x528] sm:$0xff]
    %v1429 = vld [vmem:[#allocation16 + $0x530] sm:$0xff]
    %v1430 = vld [vmem:[#allocation16 + $0x538] sm:$0xff]
    %v1431 = vld [vmem:[#allocation16 + $0x540] sm:$0xff]
    %v1432 = vld [vmem:[#allocation16 + $0x548] sm:$0xff]
    %v1433 = vld [vmem:[#allocation16 + $0x550] sm:$0xff]
    %v1434 = vld [vmem:[#allocation16 + $0x558] sm:$0xff]
    %v1435 = vld [vmem:[#allocation16 + $0x560] sm:$0xff]
    %v1436 = vld [vmem:[#allocation16 + $0x568] sm:$0xff]
    %v1437 = vld [vmem:[#allocation16 + $0x570] sm:$0xff]
    %v1438 = vld [vmem:[#allocation16 + $0x578] sm:$0xff]
    %v1439 = vld [vmem:[#allocation16 + $0x580] sm:$0xff]
    %v1440 = vld [vmem:[#allocation16 + $0x588] sm:$0xff]
    %v1441 = vld [vmem:[#allocation16 + $0x590] sm:$0xff]
    %v1442 = vld [vmem:[#allocation16 + $0x598] sm:$0xff]
    %v1443 = vld [vmem:[#allocation16 + $0x5a0] sm:$0xff]
    %v1444 = vld [vmem:[#allocation16 + $0x5a8] sm:$0xff]
    %v1445 = vld [vmem:[#allocation16 + $0x5b0] sm:$0xff]
    %v1446 = vld [vmem:[#allocation16 + $0x5b8] sm:$0xff]
    %v1447 = vld [vmem:[#allocation16 + $0x5c0] sm:$0xff]
    %v1448 = vld [vmem:[#allocation16 + $0x5c8] sm:$0xff]
    %v1449 = vld [vmem:[#allocation16 + $0x5d0] sm:$0xff]
    %v1450 = vld [vmem:[#allocation16 + $0x5d8] sm:$0xff]
    %v1451 = vld [vmem:[#allocation16 + $0x5e0] sm:$0xff]
    %v1452 = vld [vmem:[#allocation16 + $0x5e8] sm:$0xff]
    %v1453 = vld [vmem:[#allocation16 + $0x5f0] sm:$0xff]
    %v1454 = vld [vmem:[#allocation16 + $0x5f8] sm:$0xff]
    %v1455 = vld [vmem:[#allocation16 + $0x600] sm:$0xff]
    %v1456 = vld [vmem:[#allocation16 + $0x608] sm:$0xff]
    %v1457 = vld [vmem:[#allocation16 + $0x610] sm:$0xff]
    %v1458 = vld [vmem:[#allocation16 + $0x618] sm:$0xff]
    %v1459 = vld [vmem:[#allocation16 + $0x620] sm:$0xff]
    %v1460 = vld [vmem:[#allocation16 + $0x628] sm:$0xff]
    %v1461 = vld [vmem:[#allocation16 + $0x630] sm:$0xff]
    %v1462 = vld [vmem:[#allocation16 + $0x638] sm:$0xff]
    %v1463 = vld [vmem:[#allocation16 + $0x640] sm:$0xff]
    %v1464 = vld [vmem:[#allocation16 + $0x648] sm:$0xff]
    %v1465 = vld [vmem:[#allocation16 + $0x650] sm:$0xff]
    %v1466 = vld [vmem:[#allocation16 + $0x658] sm:$0xff]
    %v1467 = vld [vmem:[#allocation16 + $0x660] sm:$0xff]
    %v1468 = vld [vmem:[#allocation16 + $0x668] sm:$0xff]
    %v1469 = vld [vmem:[#allocation16 + $0x670] sm:$0xff]
    %v1470 = vld [vmem:[#allocation16 + $0x678] sm:$0xff]
    %v1471 = vld [vmem:[#allocation16 + $0x680] sm:$0xff]
    %v1472 = vld [vmem:[#allocation16 + $0x688] sm:$0xff]
    %v1473 = vld [vmem:[#allocation16 + $0x690] sm:$0xff]
    %v1474 = vld [vmem:[#allocation16 + $0x698] sm:$0xff]
    %v1475 = vld [vmem:[#allocation16 + $0x6a0] sm:$0xff]
    %v1476 = vld [vmem:[#allocation16 + $0x6a8] sm:$0xff]
    %v1477 = vld [vmem:[#allocation16 + $0x6b0] sm:$0xff]
    %v1478 = vld [vmem:[#allocation16 + $0x6b8] sm:$0xff]
    %v1479 = vld [vmem:[#allocation16 + $0x6c0] sm:$0xff]
    %v1480 = vld [vmem:[#allocation16 + $0x6c8] sm:$0xff]
    %v1481 = vld [vmem:[#allocation16 + $0x6d0] sm:$0xff]
    %v1482 = vld [vmem:[#allocation16 + $0x6d8] sm:$0xff]
    %v1483 = vld [vmem:[#allocation16 + $0x6e0] sm:$0xff]
    %v1484 = vld [vmem:[#allocation16 + $0x6e8] sm:$0xff]
    %v1485 = vld [vmem:[#allocation16 + $0x6f0] sm:$0xff]
    %v1486 = vld [vmem:[#allocation16 + $0x6f8] sm:$0xff]
    %v1487 = vld [vmem:[#allocation16 + $0x700] sm:$0xff]
    %v1488 = vld [vmem:[#allocation16 + $0x708] sm:$0xff]
    %v1489 = vld [vmem:[#allocation16 + $0x710] sm:$0xff]
    %v1490 = vld [vmem:[#allocation16 + $0x718] sm:$0xff]
    %v1491 = vld [vmem:[#allocation16 + $0x720] sm:$0xff]
    %v1492 = vld [vmem:[#allocation16 + $0x728] sm:$0xff]
    %v1493 = vld [vmem:[#allocation16 + $0x730] sm:$0xff]
    %v1494 = vld [vmem:[#allocation16 + $0x738] sm:$0xff]
    %v1495 = vld [vmem:[#allocation16 + $0x740] sm:$0xff]
    %v1496 = vld [vmem:[#allocation16 + $0x748] sm:$0xff]
    %v1497 = vld [vmem:[#allocation16 + $0x750] sm:$0xff]
    %v1498 = vld [vmem:[#allocation16 + $0x758] sm:$0xff]
    %v1499 = vld [vmem:[#allocation16 + $0x760] sm:$0xff]
    %v1500 = vld [vmem:[#allocation16 + $0x768] sm:$0xff]
    %v1501 = vld [vmem:[#allocation16 + $0x770] sm:$0xff]
    %v1502 = vld [vmem:[#allocation16 + $0x778] sm:$0xff]
    %v1503 = vld [vmem:[#allocation16 + $0x780] sm:$0xff]
    %v1504 = vld [vmem:[#allocation16 + $0x788] sm:$0xff]
    %v1505 = vld [vmem:[#allocation16 + $0x790] sm:$0xff]
    %v1506 = vld [vmem:[#allocation16 + $0x798] sm:$0xff]
    %v1507 = vld [vmem:[#allocation16 + $0x7a0] sm:$0xff]
    %v1508 = vld [vmem:[#allocation16 + $0x7a8] sm:$0xff]
    %v1509 = vld [vmem:[#allocation16 + $0x7b0] sm:$0xff]
    %v1510 = vld [vmem:[#allocation16 + $0x7b8] sm:$0xff]
    %v1511 = vld [vmem:[#allocation16 + $0x7c0] sm:$0xff]
    %v1512 = vld [vmem:[#allocation16 + $0x7c8] sm:$0xff]
    %v1513 = vld [vmem:[#allocation16 + $0x7d0] sm:$0xff]
    %v1514 = vld [vmem:[#allocation16 + $0x7d8] sm:$0xff]
    %v1515 = vld [vmem:[#allocation16 + $0x7e0] sm:$0xff]
    %v1516 = vld [vmem:[#allocation16 + $0x7e8] sm:$0xff]
    %v1517 = vld [vmem:[#allocation16 + $0x7f0] sm:$0xff]
    %v1518 = vld [vmem:[#allocation16 + $0x7f8] sm:$0xff]
    %v1519 = vld [vmem:[%s12] sm:$0xff]
    %v1521 = vlaneseq
    %v1522 = vshrl.u32 %v1521, 7
    %v1523 = vsub.s32 0, %v1522
    %v1524 = vrot.slane %v1519, %v1523
    %v1525 = vlaneseq
    %v1526 = vshrl.u32 %v1525, 7
    %v1527 = vsub.s32 1, %v1526
    %v1528 = vrot.slane %v1519, %v1527
    %v1529 = vlaneseq
    %v1530 = vshrl.u32 %v1529, 7
    %v1531 = vsub.s32 2, %v1530
    %v1532 = vrot.slane %v1519, %v1531
    %v1533 = vlaneseq
    %v1534 = vshrl.u32 %v1533, 7
    %v1535 = vsub.s32 3, %v1534
    %v1536 = vrot.slane %v1519, %v1535
    %v1537 = vlaneseq
    %v1538 = vshrl.u32 %v1537, 7
    %v1539 = vsub.s32 4, %v1538
    %v1540 = vrot.slane %v1519, %v1539
    %v1541 = vlaneseq
    %v1542 = vshrl.u32 %v1541, 7
    %v1543 = vsub.s32 5, %v1542
    %v1544 = vrot.slane %v1519, %v1543
    %v1545 = vlaneseq
    %v1546 = vshrl.u32 %v1545, 7
    %v1547 = vsub.s32 6, %v1546
    %v1548 = vrot.slane %v1519, %v1547
    %v1549 = vlaneseq
    %v1550 = vshrl.u32 %v1549, 7
    %v1551 = vsub.s32 7, %v1550
    %v1552 = vrot.slane %v1519, %v1551
    %v1817 = vunpack.c.l.b16 %v1263
    %v1818 = vunpack.c.h.b16 %v1263
    %v1819 = vunpack.c.l.b16 %v1264
    %v1820 = vunpack.c.h.b16 %v1264
    %v1821 = vunpack.c.l.b16 %v1265
    %v1822 = vunpack.c.h.b16 %v1265
    %v1823 = vunpack.c.l.b16 %v1266
    %v1824 = vunpack.c.h.b16 %v1266
    %v1825 = vunpack.c.l.b16 %v1267
    %v1826 = vunpack.c.h.b16 %v1267
    %v1827 = vunpack.c.l.b16 %v1268
    %v1828 = vunpack.c.h.b16 %v1268
    %v1829 = vunpack.c.l.b16 %v1269
    %v1830 = vunpack.c.h.b16 %v1269
    %v1831 = vunpack.c.l.b16 %v1270
    %v1832 = vunpack.c.h.b16 %v1270
    %v1833 = vunpack.c.l.b16 %v1271
    %v1834 = vunpack.c.h.b16 %v1271
    %v1835 = vunpack.c.l.b16 %v1272
    %v1836 = vunpack.c.h.b16 %v1272
    %v1837 = vunpack.c.l.b16 %v1273
    %v1838 = vunpack.c.h.b16 %v1273
    %v1839 = vunpack.c.l.b16 %v1274
    %v1840 = vunpack.c.h.b16 %v1274
    %v1841 = vunpack.c.l.b16 %v1275
    %v1842 = vunpack.c.h.b16 %v1275
    %v1843 = vunpack.c.l.b16 %v1276
    %v1844 = vunpack.c.h.b16 %v1276
    %v1845 = vunpack.c.l.b16 %v1277
    %v1846 = vunpack.c.h.b16 %v1277
    %v1847 = vunpack.c.l.b16 %v1278
    %v1848 = vunpack.c.h.b16 %v1278
    %v1849 = vunpack.c.l.b16 %v1279
    %v1850 = vunpack.c.h.b16 %v1279
    %v1851 = vunpack.c.l.b16 %v1280
    %v1852 = vunpack.c.h.b16 %v1280
    %v1853 = vunpack.c.l.b16 %v1281
    %v1854 = vunpack.c.h.b16 %v1281
    %v1855 = vunpack.c.l.b16 %v1282
    %v1856 = vunpack.c.h.b16 %v1282
    %v1857 = vunpack.c.l.b16 %v1283
    %v1858 = vunpack.c.h.b16 %v1283
    %v1859 = vunpack.c.l.b16 %v1284
    %v1860 = vunpack.c.h.b16 %v1284
    %v1861 = vunpack.c.l.b16 %v1285
    %v1862 = vunpack.c.h.b16 %v1285
    %v1863 = vunpack.c.l.b16 %v1286
    %v1864 = vunpack.c.h.b16 %v1286
    %v1865 = vunpack.c.l.b16 %v1287
    %v1866 = vunpack.c.h.b16 %v1287
    %v1867 = vunpack.c.l.b16 %v1288
    %v1868 = vunpack.c.h.b16 %v1288
    %v1869 = vunpack.c.l.b16 %v1289
    %v1870 = vunpack.c.h.b16 %v1289
    %v1871 = vunpack.c.l.b16 %v1290
    %v1872 = vunpack.c.h.b16 %v1290
    %v1873 = vunpack.c.l.b16 %v1291
    %v1874 = vunpack.c.h.b16 %v1291
    %v1875 = vunpack.c.l.b16 %v1292
    %v1876 = vunpack.c.h.b16 %v1292
    %v1877 = vunpack.c.l.b16 %v1293
    %v1878 = vunpack.c.h.b16 %v1293
    %v1879 = vunpack.c.l.b16 %v1294
    %v1880 = vunpack.c.h.b16 %v1294
    %v1881 = vunpack.c.l.b16 %v1295
    %v1882 = vunpack.c.h.b16 %v1295
    %v1883 = vunpack.c.l.b16 %v1296
    %v1884 = vunpack.c.h.b16 %v1296
    %v1885 = vunpack.c.l.b16 %v1297
    %v1886 = vunpack.c.h.b16 %v1297
    %v1887 = vunpack.c.l.b16 %v1298
    %v1888 = vunpack.c.h.b16 %v1298
    %v1889 = vunpack.c.l.b16 %v1299
    %v1890 = vunpack.c.h.b16 %v1299
    %v1891 = vunpack.c.l.b16 %v1300
    %v1892 = vunpack.c.h.b16 %v1300
    %v1893 = vunpack.c.l.b16 %v1301
    %v1894 = vunpack.c.h.b16 %v1301
    %v1895 = vunpack.c.l.b16 %v1302
    %v1896 = vunpack.c.h.b16 %v1302
    %v1897 = vunpack.c.l.b16 %v1303
    %v1898 = vunpack.c.h.b16 %v1303
    %v1899 = vunpack.c.l.b16 %v1304
    %v1900 = vunpack.c.h.b16 %v1304
    %v1901 = vunpack.c.l.b16 %v1305
    %v1902 = vunpack.c.h.b16 %v1305
    %v1903 = vunpack.c.l.b16 %v1306
    %v1904 = vunpack.c.h.b16 %v1306
    %v1905 = vunpack.c.l.b16 %v1307
    %v1906 = vunpack.c.h.b16 %v1307
    %v1907 = vunpack.c.l.b16 %v1308
    %v1908 = vunpack.c.h.b16 %v1308
    %v1909 = vunpack.c.l.b16 %v1309
    %v1910 = vunpack.c.h.b16 %v1309
    %v1911 = vunpack.c.l.b16 %v1310
    %v1912 = vunpack.c.h.b16 %v1310
    %v1913 = vunpack.c.l.b16 %v1311
    %v1914 = vunpack.c.h.b16 %v1311
    %v1915 = vunpack.c.l.b16 %v1312
    %v1916 = vunpack.c.h.b16 %v1312
    %v1917 = vunpack.c.l.b16 %v1313
    %v1918 = vunpack.c.h.b16 %v1313
    %v1919 = vunpack.c.l.b16 %v1314
    %v1920 = vunpack.c.h.b16 %v1314
    %v1921 = vunpack.c.l.b16 %v1315
    %v1922 = vunpack.c.h.b16 %v1315
    %v1923 = vunpack.c.l.b16 %v1316
    %v1924 = vunpack.c.h.b16 %v1316
    %v1925 = vunpack.c.l.b16 %v1317
    %v1926 = vunpack.c.h.b16 %v1317
    %v1927 = vunpack.c.l.b16 %v1318
    %v1928 = vunpack.c.h.b16 %v1318
    %v1929 = vunpack.c.l.b16 %v1319
    %v1930 = vunpack.c.h.b16 %v1319
    %v1931 = vunpack.c.l.b16 %v1320
    %v1932 = vunpack.c.h.b16 %v1320
    %v1933 = vunpack.c.l.b16 %v1321
    %v1934 = vunpack.c.h.b16 %v1321
    %v1935 = vunpack.c.l.b16 %v1322
    %v1936 = vunpack.c.h.b16 %v1322
    %v1937 = vunpack.c.l.b16 %v1323
    %v1938 = vunpack.c.h.b16 %v1323
    %v1939 = vunpack.c.l.b16 %v1324
    %v1940 = vunpack.c.h.b16 %v1324
    %v1941 = vunpack.c.l.b16 %v1325
    %v1942 = vunpack.c.h.b16 %v1325
    %v1943 = vunpack.c.l.b16 %v1326
    %v1944 = vunpack.c.h.b16 %v1326
    %v1945 = vunpack.c.l.b16 %v1327
    %v1946 = vunpack.c.h.b16 %v1327
    %v1947 = vunpack.c.l.b16 %v1328
    %v1948 = vunpack.c.h.b16 %v1328
    %v1949 = vunpack.c.l.b16 %v1329
    %v1950 = vunpack.c.h.b16 %v1329
    %v1951 = vunpack.c.l.b16 %v1330
    %v1952 = vunpack.c.h.b16 %v1330
    %v1953 = vunpack.c.l.b16 %v1331
    %v1954 = vunpack.c.h.b16 %v1331
    %v1955 = vunpack.c.l.b16 %v1332
    %v1956 = vunpack.c.h.b16 %v1332
    %v1957 = vunpack.c.l.b16 %v1333
    %v1958 = vunpack.c.h.b16 %v1333
    %v1959 = vunpack.c.l.b16 %v1334
    %v1960 = vunpack.c.h.b16 %v1334
    %v1961 = vunpack.c.l.b16 %v1335
    %v1962 = vunpack.c.h.b16 %v1335
    %v1963 = vunpack.c.l.b16 %v1336
    %v1964 = vunpack.c.h.b16 %v1336
    %v1965 = vunpack.c.l.b16 %v1337
    %v1966 = vunpack.c.h.b16 %v1337
    %v1967 = vunpack.c.l.b16 %v1338
    %v1968 = vunpack.c.h.b16 %v1338
    %v1969 = vunpack.c.l.b16 %v1339
    %v1970 = vunpack.c.h.b16 %v1339
    %v1971 = vunpack.c.l.b16 %v1340
    %v1972 = vunpack.c.h.b16 %v1340
    %v1973 = vunpack.c.l.b16 %v1341
    %v1974 = vunpack.c.h.b16 %v1341
    %v1975 = vunpack.c.l.b16 %v1342
    %v1976 = vunpack.c.h.b16 %v1342
    %v1977 = vunpack.c.l.b16 %v1343
    %v1978 = vunpack.c.h.b16 %v1343
    %v1979 = vunpack.c.l.b16 %v1344
    %v1980 = vunpack.c.h.b16 %v1344
    %v1981 = vunpack.c.l.b16 %v1345
    %v1982 = vunpack.c.h.b16 %v1345
    %v1983 = vunpack.c.l.b16 %v1346
    %v1984 = vunpack.c.h.b16 %v1346
    %v1985 = vunpack.c.l.b16 %v1347
    %v1986 = vunpack.c.h.b16 %v1347
    %v1987 = vunpack.c.l.b16 %v1348
    %v1988 = vunpack.c.h.b16 %v1348
    %v1989 = vunpack.c.l.b16 %v1349
    %v1990 = vunpack.c.h.b16 %v1349
    %v1991 = vunpack.c.l.b16 %v1350
    %v1992 = vunpack.c.h.b16 %v1350
    %v1993 = vunpack.c.l.b16 %v1351
    %v1994 = vunpack.c.h.b16 %v1351
    %v1995 = vunpack.c.l.b16 %v1352
    %v1996 = vunpack.c.h.b16 %v1352
    %v1997 = vunpack.c.l.b16 %v1353
    %v1998 = vunpack.c.h.b16 %v1353
    %v1999 = vunpack.c.l.b16 %v1354
    %v2000 = vunpack.c.h.b16 %v1354
    %v2001 = vunpack.c.l.b16 %v1355
    %v2002 = vunpack.c.h.b16 %v1355
    %v2003 = vunpack.c.l.b16 %v1356
    %v2004 = vunpack.c.h.b16 %v1356
    %v2005 = vunpack.c.l.b16 %v1357
    %v2006 = vunpack.c.h.b16 %v1357
    %v2007 = vunpack.c.l.b16 %v1358
    %v2008 = vunpack.c.h.b16 %v1358
    %v2009 = vunpack.c.l.b16 %v1359
    %v2010 = vunpack.c.h.b16 %v1359
    %v2011 = vunpack.c.l.b16 %v1360
    %v2012 = vunpack.c.h.b16 %v1360
    %v2013 = vunpack.c.l.b16 %v1361
    %v2014 = vunpack.c.h.b16 %v1361
    %v2015 = vunpack.c.l.b16 %v1362
    %v2016 = vunpack.c.h.b16 %v1362
    %v2017 = vunpack.c.l.b16 %v1363
    %v2018 = vunpack.c.h.b16 %v1363
    %v2019 = vunpack.c.l.b16 %v1364
    %v2020 = vunpack.c.h.b16 %v1364
    %v2021 = vunpack.c.l.b16 %v1365
    %v2022 = vunpack.c.h.b16 %v1365
    %v2023 = vunpack.c.l.b16 %v1366
    %v2024 = vunpack.c.h.b16 %v1366
    %v2025 = vunpack.c.l.b16 %v1367
    %v2026 = vunpack.c.h.b16 %v1367
    %v2027 = vunpack.c.l.b16 %v1368
    %v2028 = vunpack.c.h.b16 %v1368
    %v2029 = vunpack.c.l.b16 %v1369
    %v2030 = vunpack.c.h.b16 %v1369
    %v2031 = vunpack.c.l.b16 %v1370
    %v2032 = vunpack.c.h.b16 %v1370
    %v2033 = vunpack.c.l.b16 %v1371
    %v2034 = vunpack.c.h.b16 %v1371
    %v2035 = vunpack.c.l.b16 %v1372
    %v2036 = vunpack.c.h.b16 %v1372
    %v2037 = vunpack.c.l.b16 %v1373
    %v2038 = vunpack.c.h.b16 %v1373
    %v2039 = vunpack.c.l.b16 %v1374
    %v2040 = vunpack.c.h.b16 %v1374
    %v2041 = vunpack.c.l.b16 %v1375
    %v2042 = vunpack.c.h.b16 %v1375
    %v2043 = vunpack.c.l.b16 %v1376
    %v2044 = vunpack.c.h.b16 %v1376
    %v2045 = vunpack.c.l.b16 %v1377
    %v2046 = vunpack.c.h.b16 %v1377
    %v2047 = vunpack.c.l.b16 %v1378
    %v2048 = vunpack.c.h.b16 %v1378
    %v2049 = vunpack.c.l.b16 %v1379
    %v2050 = vunpack.c.h.b16 %v1379
    %v2051 = vunpack.c.l.b16 %v1380
    %v2052 = vunpack.c.h.b16 %v1380
    %v2053 = vunpack.c.l.b16 %v1381
    %v2054 = vunpack.c.h.b16 %v1381
    %v2055 = vunpack.c.l.b16 %v1382
    %v2056 = vunpack.c.h.b16 %v1382
    %v2057 = vunpack.c.l.b16 %v1383
    %v2058 = vunpack.c.h.b16 %v1383
    %v2059 = vunpack.c.l.b16 %v1384
    %v2060 = vunpack.c.h.b16 %v1384
    %v2061 = vunpack.c.l.b16 %v1385
    %v2062 = vunpack.c.h.b16 %v1385
    %v2063 = vunpack.c.l.b16 %v1386
    %v2064 = vunpack.c.h.b16 %v1386
    %v2065 = vunpack.c.l.b16 %v1387
    %v2066 = vunpack.c.h.b16 %v1387
    %v2067 = vunpack.c.l.b16 %v1388
    %v2068 = vunpack.c.h.b16 %v1388
    %v2069 = vunpack.c.l.b16 %v1389
    %v2070 = vunpack.c.h.b16 %v1389
    %v2071 = vunpack.c.l.b16 %v1390
    %v2072 = vunpack.c.h.b16 %v1390
    %v2073 = vunpack.c.l.b16 %v1391
    %v2074 = vunpack.c.h.b16 %v1391
    %v2075 = vunpack.c.l.b16 %v1392
    %v2076 = vunpack.c.h.b16 %v1392
    %v2077 = vunpack.c.l.b16 %v1393
    %v2078 = vunpack.c.h.b16 %v1393
    %v2079 = vunpack.c.l.b16 %v1394
    %v2080 = vunpack.c.h.b16 %v1394
    %v2081 = vunpack.c.l.b16 %v1395
    %v2082 = vunpack.c.h.b16 %v1395
    %v2083 = vunpack.c.l.b16 %v1396
    %v2084 = vunpack.c.h.b16 %v1396
    %v2085 = vunpack.c.l.b16 %v1397
    %v2086 = vunpack.c.h.b16 %v1397
    %v2087 = vunpack.c.l.b16 %v1398
    %v2088 = vunpack.c.h.b16 %v1398
    %v2089 = vunpack.c.l.b16 %v1399
    %v2090 = vunpack.c.h.b16 %v1399
    %v2091 = vunpack.c.l.b16 %v1400
    %v2092 = vunpack.c.h.b16 %v1400
    %v2093 = vunpack.c.l.b16 %v1401
    %v2094 = vunpack.c.h.b16 %v1401
    %v2095 = vunpack.c.l.b16 %v1402
    %v2096 = vunpack.c.h.b16 %v1402
    %v2097 = vunpack.c.l.b16 %v1403
    %v2098 = vunpack.c.h.b16 %v1403
    %v2099 = vunpack.c.l.b16 %v1404
    %v2100 = vunpack.c.h.b16 %v1404
    %v2101 = vunpack.c.l.b16 %v1405
    %v2102 = vunpack.c.h.b16 %v1405
    %v2103 = vunpack.c.l.b16 %v1406
    %v2104 = vunpack.c.h.b16 %v1406
    %v2105 = vunpack.c.l.b16 %v1407
    %v2106 = vunpack.c.h.b16 %v1407
    %v2107 = vunpack.c.l.b16 %v1408
    %v2108 = vunpack.c.h.b16 %v1408
    %v2109 = vunpack.c.l.b16 %v1409
    %v2110 = vunpack.c.h.b16 %v1409
    %v2111 = vunpack.c.l.b16 %v1410
    %v2112 = vunpack.c.h.b16 %v1410
    %v2113 = vunpack.c.l.b16 %v1411
    %v2114 = vunpack.c.h.b16 %v1411
    %v2115 = vunpack.c.l.b16 %v1412
    %v2116 = vunpack.c.h.b16 %v1412
    %v2117 = vunpack.c.l.b16 %v1413
    %v2118 = vunpack.c.h.b16 %v1413
    %v2119 = vunpack.c.l.b16 %v1414
    %v2120 = vunpack.c.h.b16 %v1414
    %v2121 = vunpack.c.l.b16 %v1415
    %v2122 = vunpack.c.h.b16 %v1415
    %v2123 = vunpack.c.l.b16 %v1416
    %v2124 = vunpack.c.h.b16 %v1416
    %v2125 = vunpack.c.l.b16 %v1417
    %v2126 = vunpack.c.h.b16 %v1417
    %v2127 = vunpack.c.l.b16 %v1418
    %v2128 = vunpack.c.h.b16 %v1418
    %v2129 = vunpack.c.l.b16 %v1419
    %v2130 = vunpack.c.h.b16 %v1419
    %v2131 = vunpack.c.l.b16 %v1420
    %v2132 = vunpack.c.h.b16 %v1420
    %v2133 = vunpack.c.l.b16 %v1421
    %v2134 = vunpack.c.h.b16 %v1421
    %v2135 = vunpack.c.l.b16 %v1422
    %v2136 = vunpack.c.h.b16 %v1422
    %v2137 = vunpack.c.l.b16 %v1423
    %v2138 = vunpack.c.h.b16 %v1423
    %v2139 = vunpack.c.l.b16 %v1424
    %v2140 = vunpack.c.h.b16 %v1424
    %v2141 = vunpack.c.l.b16 %v1425
    %v2142 = vunpack.c.h.b16 %v1425
    %v2143 = vunpack.c.l.b16 %v1426
    %v2144 = vunpack.c.h.b16 %v1426
    %v2145 = vunpack.c.l.b16 %v1427
    %v2146 = vunpack.c.h.b16 %v1427
    %v2147 = vunpack.c.l.b16 %v1428
    %v2148 = vunpack.c.h.b16 %v1428
    %v2149 = vunpack.c.l.b16 %v1429
    %v2150 = vunpack.c.h.b16 %v1429
    %v2151 = vunpack.c.l.b16 %v1430
    %v2152 = vunpack.c.h.b16 %v1430
    %v2153 = vunpack.c.l.b16 %v1431
    %v2154 = vunpack.c.h.b16 %v1431
    %v2155 = vunpack.c.l.b16 %v1432
    %v2156 = vunpack.c.h.b16 %v1432
    %v2157 = vunpack.c.l.b16 %v1433
    %v2158 = vunpack.c.h.b16 %v1433
    %v2159 = vunpack.c.l.b16 %v1434
    %v2160 = vunpack.c.h.b16 %v1434
    %v2161 = vunpack.c.l.b16 %v1435
    %v2162 = vunpack.c.h.b16 %v1435
    %v2163 = vunpack.c.l.b16 %v1436
    %v2164 = vunpack.c.h.b16 %v1436
    %v2165 = vunpack.c.l.b16 %v1437
    %v2166 = vunpack.c.h.b16 %v1437
    %v2167 = vunpack.c.l.b16 %v1438
    %v2168 = vunpack.c.h.b16 %v1438
    %v2169 = vunpack.c.l.b16 %v1439
    %v2170 = vunpack.c.h.b16 %v1439
    %v2171 = vunpack.c.l.b16 %v1440
    %v2172 = vunpack.c.h.b16 %v1440
    %v2173 = vunpack.c.l.b16 %v1441
    %v2174 = vunpack.c.h.b16 %v1441
    %v2175 = vunpack.c.l.b16 %v1442
    %v2176 = vunpack.c.h.b16 %v1442
    %v2177 = vunpack.c.l.b16 %v1443
    %v2178 = vunpack.c.h.b16 %v1443
    %v2179 = vunpack.c.l.b16 %v1444
    %v2180 = vunpack.c.h.b16 %v1444
    %v2181 = vunpack.c.l.b16 %v1445
    %v2182 = vunpack.c.h.b16 %v1445
    %v2183 = vunpack.c.l.b16 %v1446
    %v2184 = vunpack.c.h.b16 %v1446
    %v2185 = vunpack.c.l.b16 %v1447
    %v2186 = vunpack.c.h.b16 %v1447
    %v2187 = vunpack.c.l.b16 %v1448
    %v2188 = vunpack.c.h.b16 %v1448
    %v2189 = vunpack.c.l.b16 %v1449
    %v2190 = vunpack.c.h.b16 %v1449
    %v2191 = vunpack.c.l.b16 %v1450
    %v2192 = vunpack.c.h.b16 %v1450
    %v2193 = vunpack.c.l.b16 %v1451
    %v2194 = vunpack.c.h.b16 %v1451
    %v2195 = vunpack.c.l.b16 %v1452
    %v2196 = vunpack.c.h.b16 %v1452
    %v2197 = vunpack.c.l.b16 %v1453
    %v2198 = vunpack.c.h.b16 %v1453
    %v2199 = vunpack.c.l.b16 %v1454
    %v2200 = vunpack.c.h.b16 %v1454
    %v2201 = vunpack.c.l.b16 %v1455
    %v2202 = vunpack.c.h.b16 %v1455
    %v2203 = vunpack.c.l.b16 %v1456
    %v2204 = vunpack.c.h.b16 %v1456
    %v2205 = vunpack.c.l.b16 %v1457
    %v2206 = vunpack.c.h.b16 %v1457
    %v2207 = vunpack.c.l.b16 %v1458
    %v2208 = vunpack.c.h.b16 %v1458
    %v2209 = vunpack.c.l.b16 %v1459
    %v2210 = vunpack.c.h.b16 %v1459
    %v2211 = vunpack.c.l.b16 %v1460
    %v2212 = vunpack.c.h.b16 %v1460
    %v2213 = vunpack.c.l.b16 %v1461
    %v2214 = vunpack.c.h.b16 %v1461
    %v2215 = vunpack.c.l.b16 %v1462
    %v2216 = vunpack.c.h.b16 %v1462
    %v2217 = vunpack.c.l.b16 %v1463
    %v2218 = vunpack.c.h.b16 %v1463
    %v2219 = vunpack.c.l.b16 %v1464
    %v2220 = vunpack.c.h.b16 %v1464
    %v2221 = vunpack.c.l.b16 %v1465
    %v2222 = vunpack.c.h.b16 %v1465
    %v2223 = vunpack.c.l.b16 %v1466
    %v2224 = vunpack.c.h.b16 %v1466
    %v2225 = vunpack.c.l.b16 %v1467
    %v2226 = vunpack.c.h.b16 %v1467
    %v2227 = vunpack.c.l.b16 %v1468
    %v2228 = vunpack.c.h.b16 %v1468
    %v2229 = vunpack.c.l.b16 %v1469
    %v2230 = vunpack.c.h.b16 %v1469
    %v2231 = vunpack.c.l.b16 %v1470
    %v2232 = vunpack.c.h.b16 %v1470
    %v2233 = vunpack.c.l.b16 %v1471
    %v2234 = vunpack.c.h.b16 %v1471
    %v2235 = vunpack.c.l.b16 %v1472
    %v2236 = vunpack.c.h.b16 %v1472
    %v2237 = vunpack.c.l.b16 %v1473
    %v2238 = vunpack.c.h.b16 %v1473
    %v2239 = vunpack.c.l.b16 %v1474
    %v2240 = vunpack.c.h.b16 %v1474
    %v2241 = vunpack.c.l.b16 %v1475
    %v2242 = vunpack.c.h.b16 %v1475
    %v2243 = vunpack.c.l.b16 %v1476
    %v2244 = vunpack.c.h.b16 %v1476
    %v2245 = vunpack.c.l.b16 %v1477
    %v2246 = vunpack.c.h.b16 %v1477
    %v2247 = vunpack.c.l.b16 %v1478
    %v2248 = vunpack.c.h.b16 %v1478
    %v2249 = vunpack.c.l.b16 %v1479
    %v2250 = vunpack.c.h.b16 %v1479
    %v2251 = vunpack.c.l.b16 %v1480
    %v2252 = vunpack.c.h.b16 %v1480
    %v2253 = vunpack.c.l.b16 %v1481
    %v2254 = vunpack.c.h.b16 %v1481
    %v2255 = vunpack.c.l.b16 %v1482
    %v2256 = vunpack.c.h.b16 %v1482
    %v2257 = vunpack.c.l.b16 %v1483
    %v2258 = vunpack.c.h.b16 %v1483
    %v2259 = vunpack.c.l.b16 %v1484
    %v2260 = vunpack.c.h.b16 %v1484
    %v2261 = vunpack.c.l.b16 %v1485
    %v2262 = vunpack.c.h.b16 %v1485
    %v2263 = vunpack.c.l.b16 %v1486
    %v2264 = vunpack.c.h.b16 %v1486
    %v2265 = vunpack.c.l.b16 %v1487
    %v2266 = vunpack.c.h.b16 %v1487
    %v2267 = vunpack.c.l.b16 %v1488
    %v2268 = vunpack.c.h.b16 %v1488
    %v2269 = vunpack.c.l.b16 %v1489
    %v2270 = vunpack.c.h.b16 %v1489
    %v2271 = vunpack.c.l.b16 %v1490
    %v2272 = vunpack.c.h.b16 %v1490
    %v2273 = vunpack.c.l.b16 %v1491
    %v2274 = vunpack.c.h.b16 %v1491
    %v2275 = vunpack.c.l.b16 %v1492
    %v2276 = vunpack.c.h.b16 %v1492
    %v2277 = vunpack.c.l.b16 %v1493
    %v2278 = vunpack.c.h.b16 %v1493
    %v2279 = vunpack.c.l.b16 %v1494
    %v2280 = vunpack.c.h.b16 %v1494
    %v2281 = vunpack.c.l.b16 %v1495
    %v2282 = vunpack.c.h.b16 %v1495
    %v2283 = vunpack.c.l.b16 %v1496
    %v2284 = vunpack.c.h.b16 %v1496
    %v2285 = vunpack.c.l.b16 %v1497
    %v2286 = vunpack.c.h.b16 %v1497
    %v2287 = vunpack.c.l.b16 %v1498
    %v2288 = vunpack.c.h.b16 %v1498
    %v2289 = vunpack.c.l.b16 %v1499
    %v2290 = vunpack.c.h.b16 %v1499
    %v2291 = vunpack.c.l.b16 %v1500
    %v2292 = vunpack.c.h.b16 %v1500
    %v2293 = vunpack.c.l.b16 %v1501
    %v2294 = vunpack.c.h.b16 %v1501
    %v2295 = vunpack.c.l.b16 %v1502
    %v2296 = vunpack.c.h.b16 %v1502
    %v2297 = vunpack.c.l.b16 %v1503
    %v2298 = vunpack.c.h.b16 %v1503
    %v2299 = vunpack.c.l.b16 %v1504
    %v2300 = vunpack.c.h.b16 %v1504
    %v2301 = vunpack.c.l.b16 %v1505
    %v2302 = vunpack.c.h.b16 %v1505
    %v2303 = vunpack.c.l.b16 %v1506
    %v2304 = vunpack.c.h.b16 %v1506
    %v2305 = vunpack.c.l.b16 %v1507
    %v2306 = vunpack.c.h.b16 %v1507
    %v2307 = vunpack.c.l.b16 %v1508
    %v2308 = vunpack.c.h.b16 %v1508
    %v2309 = vunpack.c.l.b16 %v1509
    %v2310 = vunpack.c.h.b16 %v1509
    %v2311 = vunpack.c.l.b16 %v1510
    %v2312 = vunpack.c.h.b16 %v1510
    %v2313 = vunpack.c.l.b16 %v1511
    %v2314 = vunpack.c.h.b16 %v1511
    %v2315 = vunpack.c.l.b16 %v1512
    %v2316 = vunpack.c.h.b16 %v1512
    %v2317 = vunpack.c.l.b16 %v1513
    %v2318 = vunpack.c.h.b16 %v1513
    %v2319 = vunpack.c.l.b16 %v1514
    %v2320 = vunpack.c.h.b16 %v1514
    %v2321 = vunpack.c.l.b16 %v1515
    %v2322 = vunpack.c.h.b16 %v1515
    %v2323 = vunpack.c.l.b16 %v1516
    %v2324 = vunpack.c.h.b16 %v1516
    %v2325 = vunpack.c.l.b16 %v1517
    %v2326 = vunpack.c.h.b16 %v1517
    %v2327 = vunpack.c.l.b16 %v1518
    %v2328 = vunpack.c.h.b16 %v1518
    %v2329 = vpack.c.b16 %v1825, %v1817
    %v2330 = vpack.c.b16 %v1826, %v1818
    %v2331 = vpack.c.b16 %v1827, %v1819
    %v2332 = vpack.c.b16 %v1828, %v1820
    %v2333 = vpack.c.b16 %v1829, %v1821
    %v2334 = vpack.c.b16 %v1830, %v1822
    %v2335 = vpack.c.b16 %v1831, %v1823
    %v2336 = vpack.c.b16 %v1832, %v1824
    %v2337 = vpack.c.b16 %v1841, %v1833
    %v2338 = vpack.c.b16 %v1842, %v1834
    %v2339 = vpack.c.b16 %v1843, %v1835
    %v2340 = vpack.c.b16 %v1844, %v1836
    %v2341 = vpack.c.b16 %v1845, %v1837
    %v2342 = vpack.c.b16 %v1846, %v1838
    %v2343 = vpack.c.b16 %v1847, %v1839
    %v2344 = vpack.c.b16 %v1848, %v1840
    %v2345 = vpack.c.b16 %v1857, %v1849
    %v2346 = vpack.c.b16 %v1858, %v1850
    %v2347 = vpack.c.b16 %v1859, %v1851
    %v2348 = vpack.c.b16 %v1860, %v1852
    %v2349 = vpack.c.b16 %v1861, %v1853
    %v2350 = vpack.c.b16 %v1862, %v1854
    %v2351 = vpack.c.b16 %v1863, %v1855
    %v2352 = vpack.c.b16 %v1864, %v1856
    %v2353 = vpack.c.b16 %v1873, %v1865
    %v2354 = vpack.c.b16 %v1874, %v1866
    %v2355 = vpack.c.b16 %v1875, %v1867
    %v2356 = vpack.c.b16 %v1876, %v1868
    %v2357 = vpack.c.b16 %v1877, %v1869
    %v2358 = vpack.c.b16 %v1878, %v1870
    %v2359 = vpack.c.b16 %v1879, %v1871
    %v2360 = vpack.c.b16 %v1880, %v1872
    %v2361 = vpack.c.b16 %v1889, %v1881
    %v2362 = vpack.c.b16 %v1890, %v1882
    %v2363 = vpack.c.b16 %v1891, %v1883
    %v2364 = vpack.c.b16 %v1892, %v1884
    %v2365 = vpack.c.b16 %v1893, %v1885
    %v2366 = vpack.c.b16 %v1894, %v1886
    %v2367 = vpack.c.b16 %v1895, %v1887
    %v2368 = vpack.c.b16 %v1896, %v1888
    %v2369 = vpack.c.b16 %v1905, %v1897
    %v2370 = vpack.c.b16 %v1906, %v1898
    %v2371 = vpack.c.b16 %v1907, %v1899
    %v2372 = vpack.c.b16 %v1908, %v1900
    %v2373 = vpack.c.b16 %v1909, %v1901
    %v2374 = vpack.c.b16 %v1910, %v1902
    %v2375 = vpack.c.b16 %v1911, %v1903
    %v2376 = vpack.c.b16 %v1912, %v1904
    %v2377 = vpack.c.b16 %v1921, %v1913
    %v2378 = vpack.c.b16 %v1922, %v1914
    %v2379 = vpack.c.b16 %v1923, %v1915
    %v2380 = vpack.c.b16 %v1924, %v1916
    %v2381 = vpack.c.b16 %v1925, %v1917
    %v2382 = vpack.c.b16 %v1926, %v1918
    %v2383 = vpack.c.b16 %v1927, %v1919
    %v2384 = vpack.c.b16 %v1928, %v1920
    %v2385 = vpack.c.b16 %v1937, %v1929
    %v2386 = vpack.c.b16 %v1938, %v1930
    %v2387 = vpack.c.b16 %v1939, %v1931
    %v2388 = vpack.c.b16 %v1940, %v1932
    %v2389 = vpack.c.b16 %v1941, %v1933
    %v2390 = vpack.c.b16 %v1942, %v1934
    %v2391 = vpack.c.b16 %v1943, %v1935
    %v2392 = vpack.c.b16 %v1944, %v1936
    %v2393 = vpack.c.b16 %v1953, %v1945
    %v2394 = vpack.c.b16 %v1954, %v1946
    %v2395 = vpack.c.b16 %v1955, %v1947
    %v2396 = vpack.c.b16 %v1956, %v1948
    %v2397 = vpack.c.b16 %v1957, %v1949
    %v2398 = vpack.c.b16 %v1958, %v1950
    %v2399 = vpack.c.b16 %v1959, %v1951
    %v2400 = vpack.c.b16 %v1960, %v1952
    %v2401 = vpack.c.b16 %v1969, %v1961
    %v2402 = vpack.c.b16 %v1970, %v1962
    %v2403 = vpack.c.b16 %v1971, %v1963
    %v2404 = vpack.c.b16 %v1972, %v1964
    %v2405 = vpack.c.b16 %v1973, %v1965
    %v2406 = vpack.c.b16 %v1974, %v1966
    %v2407 = vpack.c.b16 %v1975, %v1967
    %v2408 = vpack.c.b16 %v1976, %v1968
    %v2409 = vpack.c.b16 %v1985, %v1977
    %v2410 = vpack.c.b16 %v1986, %v1978
    %v2411 = vpack.c.b16 %v1987, %v1979
    %v2412 = vpack.c.b16 %v1988, %v1980
    %v2413 = vpack.c.b16 %v1989, %v1981
    %v2414 = vpack.c.b16 %v1990, %v1982
    %v2415 = vpack.c.b16 %v1991, %v1983
    %v2416 = vpack.c.b16 %v1992, %v1984
    %v2417 = vpack.c.b16 %v2001, %v1993
    %v2418 = vpack.c.b16 %v2002, %v1994
    %v2419 = vpack.c.b16 %v2003, %v1995
    %v2420 = vpack.c.b16 %v2004, %v1996
    %v2421 = vpack.c.b16 %v2005, %v1997
    %v2422 = vpack.c.b16 %v2006, %v1998
    %v2423 = vpack.c.b16 %v2007, %v1999
    %v2424 = vpack.c.b16 %v2008, %v2000
    %v2425 = vpack.c.b16 %v2017, %v2009
    %v2426 = vpack.c.b16 %v2018, %v2010
    %v2427 = vpack.c.b16 %v2019, %v2011
    %v2428 = vpack.c.b16 %v2020, %v2012
    %v2429 = vpack.c.b16 %v2021, %v2013
    %v2430 = vpack.c.b16 %v2022, %v2014
    %v2431 = vpack.c.b16 %v2023, %v2015
    %v2432 = vpack.c.b16 %v2024, %v2016
    %v2433 = vpack.c.b16 %v2033, %v2025
    %v2434 = vpack.c.b16 %v2034, %v2026
    %v2435 = vpack.c.b16 %v2035, %v2027
    %v2436 = vpack.c.b16 %v2036, %v2028
    %v2437 = vpack.c.b16 %v2037, %v2029
    %v2438 = vpack.c.b16 %v2038, %v2030
    %v2439 = vpack.c.b16 %v2039, %v2031
    %v2440 = vpack.c.b16 %v2040, %v2032
    %v2441 = vpack.c.b16 %v2049, %v2041
    %v2442 = vpack.c.b16 %v2050, %v2042
    %v2443 = vpack.c.b16 %v2051, %v2043
    %v2444 = vpack.c.b16 %v2052, %v2044
    %v2445 = vpack.c.b16 %v2053, %v2045
    %v2446 = vpack.c.b16 %v2054, %v2046
    %v2447 = vpack.c.b16 %v2055, %v2047
    %v2448 = vpack.c.b16 %v2056, %v2048
    %v2449 = vpack.c.b16 %v2065, %v2057
    %v2450 = vpack.c.b16 %v2066, %v2058
    %v2451 = vpack.c.b16 %v2067, %v2059
    %v2452 = vpack.c.b16 %v2068, %v2060
    %v2453 = vpack.c.b16 %v2069, %v2061
    %v2454 = vpack.c.b16 %v2070, %v2062
    %v2455 = vpack.c.b16 %v2071, %v2063
    %v2456 = vpack.c.b16 %v2072, %v2064
    %v2457 = vpack.c.b16 %v2081, %v2073
    %v2458 = vpack.c.b16 %v2082, %v2074
    %v2459 = vpack.c.b16 %v2083, %v2075
    %v2460 = vpack.c.b16 %v2084, %v2076
    %v2461 = vpack.c.b16 %v2085, %v2077
    %v2462 = vpack.c.b16 %v2086, %v2078
    %v2463 = vpack.c.b16 %v2087, %v2079
    %v2464 = vpack.c.b16 %v2088, %v2080
    %v2465 = vpack.c.b16 %v2097, %v2089
    %v2466 = vpack.c.b16 %v2098, %v2090
    %v2467 = vpack.c.b16 %v2099, %v2091
    %v2468 = vpack.c.b16 %v2100, %v2092
    %v2469 = vpack.c.b16 %v2101, %v2093
    %v2470 = vpack.c.b16 %v2102, %v2094
    %v2471 = vpack.c.b16 %v2103, %v2095
    %v2472 = vpack.c.b16 %v2104, %v2096
    %v2473 = vpack.c.b16 %v2113, %v2105
    %v2474 = vpack.c.b16 %v2114, %v2106
    %v2475 = vpack.c.b16 %v2115, %v2107
    %v2476 = vpack.c.b16 %v2116, %v2108
    %v2477 = vpack.c.b16 %v2117, %v2109
    %v2478 = vpack.c.b16 %v2118, %v2110
    %v2479 = vpack.c.b16 %v2119, %v2111
    %v2480 = vpack.c.b16 %v2120, %v2112
    %v2481 = vpack.c.b16 %v2129, %v2121
    %v2482 = vpack.c.b16 %v2130, %v2122
    %v2483 = vpack.c.b16 %v2131, %v2123
    %v2484 = vpack.c.b16 %v2132, %v2124
    %v2485 = vpack.c.b16 %v2133, %v2125
    %v2486 = vpack.c.b16 %v2134, %v2126
    %v2487 = vpack.c.b16 %v2135, %v2127
    %v2488 = vpack.c.b16 %v2136, %v2128
    %v2489 = vpack.c.b16 %v2145, %v2137
    %v2490 = vpack.c.b16 %v2146, %v2138
    %v2491 = vpack.c.b16 %v2147, %v2139
    %v2492 = vpack.c.b16 %v2148, %v2140
    %v2493 = vpack.c.b16 %v2149, %v2141
    %v2494 = vpack.c.b16 %v2150, %v2142
    %v2495 = vpack.c.b16 %v2151, %v2143
    %v2496 = vpack.c.b16 %v2152, %v2144
    %v2497 = vpack.c.b16 %v2161, %v2153
    %v2498 = vpack.c.b16 %v2162, %v2154
    %v2499 = vpack.c.b16 %v2163, %v2155
    %v2500 = vpack.c.b16 %v2164, %v2156
    %v2501 = vpack.c.b16 %v2165, %v2157
    %v2502 = vpack.c.b16 %v2166, %v2158
    %v2503 = vpack.c.b16 %v2167, %v2159
    %v2504 = vpack.c.b16 %v2168, %v2160
    %v2505 = vpack.c.b16 %v2177, %v2169
    %v2506 = vpack.c.b16 %v2178, %v2170
    %v2507 = vpack.c.b16 %v2179, %v2171
    %v2508 = vpack.c.b16 %v2180, %v2172
    %v2509 = vpack.c.b16 %v2181, %v2173
    %v2510 = vpack.c.b16 %v2182, %v2174
    %v2511 = vpack.c.b16 %v2183, %v2175
    %v2512 = vpack.c.b16 %v2184, %v2176
    %v2513 = vpack.c.b16 %v2193, %v2185
    %v2514 = vpack.c.b16 %v2194, %v2186
    %v2515 = vpack.c.b16 %v2195, %v2187
    %v2516 = vpack.c.b16 %v2196, %v2188
    %v2517 = vpack.c.b16 %v2197, %v2189
    %v2518 = vpack.c.b16 %v2198, %v2190
    %v2519 = vpack.c.b16 %v2199, %v2191
    %v2520 = vpack.c.b16 %v2200, %v2192
    %v2521 = vpack.c.b16 %v2209, %v2201
    %v2522 = vpack.c.b16 %v2210, %v2202
    %v2523 = vpack.c.b16 %v2211, %v2203
    %v2524 = vpack.c.b16 %v2212, %v2204
    %v2525 = vpack.c.b16 %v2213, %v2205
    %v2526 = vpack.c.b16 %v2214, %v2206
    %v2527 = vpack.c.b16 %v2215, %v2207
    %v2528 = vpack.c.b16 %v2216, %v2208
    %v2529 = vpack.c.b16 %v2225, %v2217
    %v2530 = vpack.c.b16 %v2226, %v2218
    %v2531 = vpack.c.b16 %v2227, %v2219
    %v2532 = vpack.c.b16 %v2228, %v2220
    %v2533 = vpack.c.b16 %v2229, %v2221
    %v2534 = vpack.c.b16 %v2230, %v2222
    %v2535 = vpack.c.b16 %v2231, %v2223
    %v2536 = vpack.c.b16 %v2232, %v2224
    %v2537 = vpack.c.b16 %v2241, %v2233
    %v2538 = vpack.c.b16 %v2242, %v2234
    %v2539 = vpack.c.b16 %v2243, %v2235
    %v2540 = vpack.c.b16 %v2244, %v2236
    %v2541 = vpack.c.b16 %v2245, %v2237
    %v2542 = vpack.c.b16 %v2246, %v2238
    %v2543 = vpack.c.b16 %v2247, %v2239
    %v2544 = vpack.c.b16 %v2248, %v2240
    %v2545 = vpack.c.b16 %v2257, %v2249
    %v2546 = vpack.c.b16 %v2258, %v2250
    %v2547 = vpack.c.b16 %v2259, %v2251
    %v2548 = vpack.c.b16 %v2260, %v2252
    %v2549 = vpack.c.b16 %v2261, %v2253
    %v2550 = vpack.c.b16 %v2262, %v2254
    %v2551 = vpack.c.b16 %v2263, %v2255
    %v2552 = vpack.c.b16 %v2264, %v2256
    %v2553 = vpack.c.b16 %v2273, %v2265
    %v2554 = vpack.c.b16 %v2274, %v2266
    %v2555 = vpack.c.b16 %v2275, %v2267
    %v2556 = vpack.c.b16 %v2276, %v2268
    %v2557 = vpack.c.b16 %v2277, %v2269
    %v2558 = vpack.c.b16 %v2278, %v2270
    %v2559 = vpack.c.b16 %v2279, %v2271
    %v2560 = vpack.c.b16 %v2280, %v2272
    %v2561 = vpack.c.b16 %v2289, %v2281
    %v2562 = vpack.c.b16 %v2290, %v2282
    %v2563 = vpack.c.b16 %v2291, %v2283
    %v2564 = vpack.c.b16 %v2292, %v2284
    %v2565 = vpack.c.b16 %v2293, %v2285
    %v2566 = vpack.c.b16 %v2294, %v2286
    %v2567 = vpack.c.b16 %v2295, %v2287
    %v2568 = vpack.c.b16 %v2296, %v2288
    %v2569 = vpack.c.b16 %v2305, %v2297
    %v2570 = vpack.c.b16 %v2306, %v2298
    %v2571 = vpack.c.b16 %v2307, %v2299
    %v2572 = vpack.c.b16 %v2308, %v2300
    %v2573 = vpack.c.b16 %v2309, %v2301
    %v2574 = vpack.c.b16 %v2310, %v2302
    %v2575 = vpack.c.b16 %v2311, %v2303
    %v2576 = vpack.c.b16 %v2312, %v2304
    %v2577 = vpack.c.b16 %v2321, %v2313
    %v2578 = vpack.c.b16 %v2322, %v2314
    %v2579 = vpack.c.b16 %v2323, %v2315
    %v2580 = vpack.c.b16 %v2324, %v2316
    %v2581 = vpack.c.b16 %v2325, %v2317
    %v2582 = vpack.c.b16 %v2326, %v2318
    %v2583 = vpack.c.b16 %v2327, %v2319
    %v2584 = vpack.c.b16 %v2328, %v2320
    %2841 = vmatprep.subr.bf16.mxu0 %v2386
    %2842 = vmatpush1.bf16.msra.mxu0 %v2385
    %2843 = vmatprep.subr.bf16.mxu0 %v2378
    %2844 = vmatpush1.bf16.msra.mxu0 %v2377
    %2845 = vmatprep.subr.bf16.mxu0 %v2370
    %2846 = vmatpush1.bf16.msra.mxu0 %v2369
    %2847 = vmatprep.subr.bf16.mxu0 %v2362
    %2848 = vmatpush1.bf16.msra.mxu0 %v2361
    %2849 = vmatprep.subr.bf16.mxu0 %v2354
    %2850 = vmatpush1.bf16.msra.mxu0 %v2353
    %2851 = vmatprep.subr.bf16.mxu0 %v2346
    %2852 = vmatpush1.bf16.msra.mxu0 %v2345
    %2853 = vmatprep.subr.bf16.mxu0 %v2338
    %2854 = vmatpush1.bf16.msra.mxu0 %v2337
    %2855 = vmatprep.subr.bf16.mxu0 %v2330
    %2856 = vmatpush1.bf16.msra.mxu0 %v2329
    %2857 = vmatprep.subr.bf16.mxu0 %v2450
    %2858 = vmatpush2.bf16.msra.mxu0 %v2449
    %2859 = vmatprep.subr.bf16.mxu0 %v2442
    %2860 = vmatpush2.bf16.msra.mxu0 %v2441
    %2861 = vmatprep.subr.bf16.mxu0 %v2434
    %2862 = vmatpush2.bf16.msra.mxu0 %v2433
    %2863 = vmatprep.subr.bf16.mxu0 %v2426
    %2864 = vmatpush2.bf16.msra.mxu0 %v2425
    %2865 = vmatprep.subr.bf16.mxu0 %v2418
    %2866 = vmatpush2.bf16.msra.mxu0 %v2417
    %2867 = vmatprep.subr.bf16.mxu0 %v2410
    %2868 = vmatpush2.bf16.msra.mxu0 %v2409
    %2869 = vmatprep.subr.bf16.mxu0 %v2402
    %2870 = vmatpush2.bf16.msra.mxu0 %v2401
    %2871 = vmatprep.subr.bf16.mxu0 %v2394
    %2872 = vmatpush2.bf16.msra.mxu0 %v2393
    %2873 = vmatprep.mubr.bf16.mxu0 %v1260
    %2874 = vmatmul.mubr.bf16.gmra.mxu0 %v1259
    %v2875 = vpop.f32.mrf.mxu0
    %v2876 = vadd.f32 %v1524, %v2875
    %v2877 = vpop.f32.mrf.mxu0
    %v2878 = vadd.f32 %v1528, %v2877
    %v2879 = vpop.f32.mrf.mxu0
    %v2880 = vpop.f32.mrf.mxu0
    %2881 = vdwg.mxu0
    %2882 = vmatprep.subr.bf16.mxu0 %v2514
    %2883 = vmatpush1.bf16.msra.mxu0 %v2513
    %2884 = vmatprep.subr.bf16.mxu0 %v2506
    %2885 = vmatpush1.bf16.msra.mxu0 %v2505
    %2886 = vmatprep.subr.bf16.mxu0 %v2498
    %2887 = vmatpush1.bf16.msra.mxu0 %v2497
    %2888 = vmatprep.subr.bf16.mxu0 %v2490
    %2889 = vmatpush1.bf16.msra.mxu0 %v2489
    %2890 = vmatprep.subr.bf16.mxu0 %v2482
    %2891 = vmatpush1.bf16.msra.mxu0 %v2481
    %2892 = vmatprep.subr.bf16.mxu0 %v2474
    %2893 = vmatpush1.bf16.msra.mxu0 %v2473
    %2894 = vmatprep.subr.bf16.mxu0 %v2466
    %2895 = vmatpush1.bf16.msra.mxu0 %v2465
    %2896 = vmatprep.subr.bf16.mxu0 %v2458
    %2897 = vmatpush1.bf16.msra.mxu0 %v2457
    %2898 = vmatprep.subr.bf16.mxu0 %v2578
    %2899 = vmatpush2.bf16.msra.mxu0 %v2577
    %2900 = vmatprep.subr.bf16.mxu0 %v2570
    %2901 = vmatpush2.bf16.msra.mxu0 %v2569
    %2902 = vmatprep.subr.bf16.mxu0 %v2562
    %2903 = vmatpush2.bf16.msra.mxu0 %v2561
    %2904 = vmatprep.subr.bf16.mxu0 %v2554
    %2905 = vmatpush2.bf16.msra.mxu0 %v2553
    %2906 = vmatprep.subr.bf16.mxu0 %v2546
    %2907 = vmatpush2.bf16.msra.mxu0 %v2545
    %2908 = vmatprep.subr.bf16.mxu0 %v2538
    %2909 = vmatpush2.bf16.msra.mxu0 %v2537
    %2910 = vmatprep.subr.bf16.mxu0 %v2530
    %2911 = vmatpush2.bf16.msra.mxu0 %v2529
    %2912 = vmatprep.subr.bf16.mxu0 %v2522
    %2913 = vmatpush2.bf16.msra.mxu0 %v2521
    %2914 = vmatprep.mubr.bf16.mxu0 %v1262
    %2915 = vmatmul.mubr.bf16.gmra.mxu0 %v1261
    %v2916 = vpop.f32.mrf.mxu0
    %v2917 = vadd.f32 %v2876, %v2916
    %v2918 = vpop.f32.mrf.mxu0
    %v2919 = vadd.f32 %v2878, %v2918
    %v2920 = vpop.f32.mrf.mxu0
    %v2921 = vpop.f32.mrf.mxu0
    %2922 = vdwg.mxu0
    %2923 = vmatprep.subr.bf16.mxu0 %v2388
    %2924 = vmatpush1.bf16.msra.mxu0 %v2387
    %2925 = vmatprep.subr.bf16.mxu0 %v2380
    %2926 = vmatpush1.bf16.msra.mxu0 %v2379
    %2927 = vmatprep.subr.bf16.mxu0 %v2372
    %2928 = vmatpush1.bf16.msra.mxu0 %v2371
    %2929 = vmatprep.subr.bf16.mxu0 %v2364
    %2930 = vmatpush1.bf16.msra.mxu0 %v2363
    %2931 = vmatprep.subr.bf16.mxu0 %v2356
    %2932 = vmatpush1.bf16.msra.mxu0 %v2355
    %2933 = vmatprep.subr.bf16.mxu0 %v2348
    %2934 = vmatpush1.bf16.msra.mxu0 %v2347
    %2935 = vmatprep.subr.bf16.mxu0 %v2340
    %2936 = vmatpush1.bf16.msra.mxu0 %v2339
    %2937 = vmatprep.subr.bf16.mxu0 %v2332
    %2938 = vmatpush1.bf16.msra.mxu0 %v2331
    %2939 = vmatprep.subr.bf16.mxu0 %v2452
    %2940 = vmatpush2.bf16.msra.mxu0 %v2451
    %2941 = vmatprep.subr.bf16.mxu0 %v2444
    %2942 = vmatpush2.bf16.msra.mxu0 %v2443
    %2943 = vmatprep.subr.bf16.mxu0 %v2436
    %2944 = vmatpush2.bf16.msra.mxu0 %v2435
    %2945 = vmatprep.subr.bf16.mxu0 %v2428
    %2946 = vmatpush2.bf16.msra.mxu0 %v2427
    %2947 = vmatprep.subr.bf16.mxu0 %v2420
    %2948 = vmatpush2.bf16.msra.mxu0 %v2419
    %2949 = vmatprep.subr.bf16.mxu0 %v2412
    %2950 = vmatpush2.bf16.msra.mxu0 %v2411
    %2951 = vmatprep.subr.bf16.mxu0 %v2404
    %2952 = vmatpush2.bf16.msra.mxu0 %v2403
    %2953 = vmatprep.subr.bf16.mxu0 %v2396
    %2954 = vmatpush2.bf16.msra.mxu0 %v2395
    %2955 = vmatprep.mubr.bf16.mxu0 %v1260
    %2956 = vmatmul.mubr.bf16.gmra.mxu0 %v1259
    %v2957 = vpop.f32.mrf.mxu0
    %v2958 = vadd.f32 %v1532, %v2957
    %v2959 = vpop.f32.mrf.mxu0
    %v2960 = vadd.f32 %v1536, %v2959
    %v2961 = vpop.f32.mrf.mxu0
    %v2962 = vpop.f32.mrf.mxu0
    %2963 = vdwg.mxu0
    %2964 = vmatprep.subr.bf16.mxu0 %v2516
    %2965 = vmatpush1.bf16.msra.mxu0 %v2515
    %2966 = vmatprep.subr.bf16.mxu0 %v2508
    %2967 = vmatpush1.bf16.msra.mxu0 %v2507
    %2968 = vmatprep.subr.bf16.mxu0 %v2500
    %2969 = vmatpush1.bf16.msra.mxu0 %v2499
    %2970 = vmatprep.subr.bf16.mxu0 %v2492
    %2971 = vmatpush1.bf16.msra.mxu0 %v2491
    %2972 = vmatprep.subr.bf16.mxu0 %v2484
    %2973 = vmatpush1.bf16.msra.mxu0 %v2483
    %2974 = vmatprep.subr.bf16.mxu0 %v2476
    %2975 = vmatpush1.bf16.msra.mxu0 %v2475
    %2976 = vmatprep.subr.bf16.mxu0 %v2468
    %2977 = vmatpush1.bf16.msra.mxu0 %v2467
    %2978 = vmatprep.subr.bf16.mxu0 %v2460
    %2979 = vmatpush1.bf16.msra.mxu0 %v2459
    %2980 = vmatprep.subr.bf16.mxu0 %v2580
    %2981 = vmatpush2.bf16.msra.mxu0 %v2579
    %2982 = vmatprep.subr.bf16.mxu0 %v2572
    %2983 = vmatpush2.bf16.msra.mxu0 %v2571
    %2984 = vmatprep.subr.bf16.mxu0 %v2564
    %2985 = vmatpush2.bf16.msra.mxu0 %v2563
    %2986 = vmatprep.subr.bf16.mxu0 %v2556
    %2987 = vmatpush2.bf16.msra.mxu0 %v2555
    %2988 = vmatprep.subr.bf16.mxu0 %v2548
    %2989 = vmatpush2.bf16.msra.mxu0 %v2547
    %2990 = vmatprep.subr.bf16.mxu0 %v2540
    %2991 = vmatpush2.bf16.msra.mxu0 %v2539
    %2992 = vmatprep.subr.bf16.mxu0 %v2532
    %2993 = vmatpush2.bf16.msra.mxu0 %v2531
    %2994 = vmatprep.subr.bf16.mxu0 %v2524
    %2995 = vmatpush2.bf16.msra.mxu0 %v2523
    %2996 = vmatprep.mubr.bf16.mxu0 %v1262
    %2997 = vmatmul.mubr.bf16.gmra.mxu0 %v1261
    %v2998 = vpop.f32.mrf.mxu0
    %v2999 = vadd.f32 %v2958, %v2998
    %v3000 = vpop.f32.mrf.mxu0
    %v3001 = vadd.f32 %v2960, %v3000
    %v3002 = vpop.f32.mrf.mxu0
    %v3003 = vpop.f32.mrf.mxu0
    %3004 = vdwg.mxu0
    %3005 = vmatprep.subr.bf16.mxu0 %v2390
    %3006 = vmatpush1.bf16.msra.mxu0 %v2389
    %3007 = vmatprep.subr.bf16.mxu0 %v2382
    %3008 = vmatpush1.bf16.msra.mxu0 %v2381
    %3009 = vmatprep.subr.bf16.mxu0 %v2374
    %3010 = vmatpush1.bf16.msra.mxu0 %v2373
    %3011 = vmatprep.subr.bf16.mxu0 %v2366
    %3012 = vmatpush1.bf16.msra.mxu0 %v2365
    %3013 = vmatprep.subr.bf16.mxu0 %v2358
    %3014 = vmatpush1.bf16.msra.mxu0 %v2357
    %3015 = vmatprep.subr.bf16.mxu0 %v2350
    %3016 = vmatpush1.bf16.msra.mxu0 %v2349
    %3017 = vmatprep.subr.bf16.mxu0 %v2342
    %3018 = vmatpush1.bf16.msra.mxu0 %v2341
    %3019 = vmatprep.subr.bf16.mxu0 %v2334
    %3020 = vmatpush1.bf16.msra.mxu0 %v2333
    %3021 = vmatprep.subr.bf16.mxu0 %v2454
    %3022 = vmatpush2.bf16.msra.mxu0 %v2453
    %3023 = vmatprep.subr.bf16.mxu0 %v2446
    %3024 = vmatpush2.bf16.msra.mxu0 %v2445
    %3025 = vmatprep.subr.bf16.mxu0 %v2438
    %3026 = vmatpush2.bf16.msra.mxu0 %v2437
    %3027 = vmatprep.subr.bf16.mxu0 %v2430
    %3028 = vmatpush2.bf16.msra.mxu0 %v2429
    %3029 = vmatprep.subr.bf16.mxu0 %v2422
    %3030 = vmatpush2.bf16.msra.mxu0 %v2421
    %3031 = vmatprep.subr.bf16.mxu0 %v2414
    %3032 = vmatpush2.bf16.msra.mxu0 %v2413
    %3033 = vmatprep.subr.bf16.mxu0 %v2406
    %3034 = vmatpush2.bf16.msra.mxu0 %v2405
    %3035 = vmatprep.subr.bf16.mxu0 %v2398
    %3036 = vmatpush2.bf16.msra.mxu0 %v2397
    %3037 = vmatprep.mubr.bf16.mxu0 %v1260
    %3038 = vmatmul.mubr.bf16.gmra.mxu0 %v1259
    %v3039 = vpop.f32.mrf.mxu0
    %v3040 = vadd.f32 %v1540, %v3039
    %v3041 = vpop.f32.mrf.mxu0
    %v3042 = vadd.f32 %v1544, %v3041
    %v3043 = vpop.f32.mrf.mxu0
    %v3044 = vpop.f32.mrf.mxu0
    %3045 = vdwg.mxu0
    %3046 = vmatprep.subr.bf16.mxu0 %v2518
    %3047 = vmatpush1.bf16.msra.mxu0 %v2517
    %3048 = vmatprep.subr.bf16.mxu0 %v2510
    %3049 = vmatpush1.bf16.msra.mxu0 %v2509
    %3050 = vmatprep.subr.bf16.mxu0 %v2502
    %3051 = vmatpush1.bf16.msra.mxu0 %v2501
    %3052 = vmatprep.subr.bf16.mxu0 %v2494
    %3053 = vmatpush1.bf16.msra.mxu0 %v2493
    %3054 = vmatprep.subr.bf16.mxu0 %v2486
    %3055 = vmatpush1.bf16.msra.mxu0 %v2485
    %3056 = vmatprep.subr.bf16.mxu0 %v2478
    %3057 = vmatpush1.bf16.msra.mxu0 %v2477
    %3058 = vmatprep.subr.bf16.mxu0 %v2470
    %3059 = vmatpush1.bf16.msra.mxu0 %v2469
    %3060 = vmatprep.subr.bf16.mxu0 %v2462
    %3061 = vmatpush1.bf16.msra.mxu0 %v2461
    %3062 = vmatprep.subr.bf16.mxu0 %v2582
    %3063 = vmatpush2.bf16.msra.mxu0 %v2581
    %3064 = vmatprep.subr.bf16.mxu0 %v2574
    %3065 = vmatpush2.bf16.msra.mxu0 %v2573
    %3066 = vmatprep.subr.bf16.mxu0 %v2566
    %3067 = vmatpush2.bf16.msra.mxu0 %v2565
    %3068 = vmatprep.subr.bf16.mxu0 %v2558
    %3069 = vmatpush2.bf16.msra.mxu0 %v2557
    %3070 = vmatprep.subr.bf16.mxu0 %v2550
    %3071 = vmatpush2.bf16.msra.mxu0 %v2549
    %3072 = vmatprep.subr.bf16.mxu0 %v2542
    %3073 = vmatpush2.bf16.msra.mxu0 %v2541
    %3074 = vmatprep.subr.bf16.mxu0 %v2534
    %3075 = vmatpush2.bf16.msra.mxu0 %v2533
    %3076 = vmatprep.subr.bf16.mxu0 %v2526
    %3077 = vmatpush2.bf16.msra.mxu0 %v2525
    %3078 = vmatprep.mubr.bf16.mxu0 %v1262
    %3079 = vmatmul.mubr.bf16.gmra.mxu0 %v1261
    %v3080 = vpop.f32.mrf.mxu0
    %v3081 = vadd.f32 %v3040, %v3080
    %v3082 = vpop.f32.mrf.mxu0
    %v3083 = vadd.f32 %v3042, %v3082
    %v3084 = vpop.f32.mrf.mxu0
    %v3085 = vpop.f32.mrf.mxu0
    %3086 = vdwg.mxu0
    %3087 = vmatprep.subr.bf16.mxu0 %v2392
    %3088 = vmatpush1.bf16.msra.mxu0 %v2391
    %3089 = vmatprep.subr.bf16.mxu0 %v2384
    %3090 = vmatpush1.bf16.msra.mxu0 %v2383
    %3091 = vmatprep.subr.bf16.mxu0 %v2376
    %3092 = vmatpush1.bf16.msra.mxu0 %v2375
    %3093 = vmatprep.subr.bf16.mxu0 %v2368
    %3094 = vmatpush1.bf16.msra.mxu0 %v2367
    %3095 = vmatprep.subr.bf16.mxu0 %v2360
    %3096 = vmatpush1.bf16.msra.mxu0 %v2359
    %3097 = vmatprep.subr.bf16.mxu0 %v2352
    %3098 = vmatpush1.bf16.msra.mxu0 %v2351
    %3099 = vmatprep.subr.bf16.mxu0 %v2344
    %3100 = vmatpush1.bf16.msra.mxu0 %v2343
    %3101 = vmatprep.subr.bf16.mxu0 %v2336
    %3102 = vmatpush1.bf16.msra.mxu0 %v2335
    %3103 = vmatprep.subr.bf16.mxu0 %v2456
    %3104 = vmatpush2.bf16.msra.mxu0 %v2455
    %3105 = vmatprep.subr.bf16.mxu0 %v2448
    %3106 = vmatpush2.bf16.msra.mxu0 %v2447
    %3107 = vmatprep.subr.bf16.mxu0 %v2440
    %3108 = vmatpush2.bf16.msra.mxu0 %v2439
    %3109 = vmatprep.subr.bf16.mxu0 %v2432
    %3110 = vmatpush2.bf16.msra.mxu0 %v2431
    %3111 = vmatprep.subr.bf16.mxu0 %v2424
    %3112 = vmatpush2.bf16.msra.mxu0 %v2423
    %3113 = vmatprep.subr.bf16.mxu0 %v2416
    %3114 = vmatpush2.bf16.msra.mxu0 %v2415
    %3115 = vmatprep.subr.bf16.mxu0 %v2408
    %3116 = vmatpush2.bf16.msra.mxu0 %v2407
    %3117 = vmatprep.subr.bf16.mxu0 %v2400
    %3118 = vmatpush2.bf16.msra.mxu0 %v2399
    %3119 = vmatprep.mubr.bf16.mxu0 %v1260
    %3120 = vmatmul.mubr.bf16.gmra.mxu0 %v1259
    %v3121 = vpop.f32.mrf.mxu0
    %v3122 = vadd.f32 %v1548, %v3121
    %v3123 = vpop.f32.mrf.mxu0
    %v3124 = vadd.f32 %v1552, %v3123
    %v3125 = vpop.f32.mrf.mxu0
    %v3126 = vpop.f32.mrf.mxu0
    %3127 = vdwg.mxu0
    %3128 = vmatprep.subr.bf16.mxu0 %v2520
    %3129 = vmatpush1.bf16.msra.mxu0 %v2519
    %3130 = vmatprep.subr.bf16.mxu0 %v2512
    %3131 = vmatpush1.bf16.msra.mxu0 %v2511
    %3132 = vmatprep.subr.bf16.mxu0 %v2504
    %3133 = vmatpush1.bf16.msra.mxu0 %v2503
    %3134 = vmatprep.subr.bf16.mxu0 %v2496
    %3135 = vmatpush1.bf16.msra.mxu0 %v2495
    %3136 = vmatprep.subr.bf16.mxu0 %v2488
    %3137 = vmatpush1.bf16.msra.mxu0 %v2487
    %3138 = vmatprep.subr.bf16.mxu0 %v2480
    %3139 = vmatpush1.bf16.msra.mxu0 %v2479
    %3140 = vmatprep.subr.bf16.mxu0 %v2472
    %3141 = vmatpush1.bf16.msra.mxu0 %v2471
    %3142 = vmatprep.subr.bf16.mxu0 %v2464
    %3143 = vmatpush1.bf16.msra.mxu0 %v2463
    %3144 = vmatprep.subr.bf16.mxu0 %v2584
    %3145 = vmatpush2.bf16.msra.mxu0 %v2583
    %3146 = vmatprep.subr.bf16.mxu0 %v2576
    %3147 = vmatpush2.bf16.msra.mxu0 %v2575
    %3148 = vmatprep.subr.bf16.mxu0 %v2568
    %3149 = vmatpush2.bf16.msra.mxu0 %v2567
    %3150 = vmatprep.subr.bf16.mxu0 %v2560
    %3151 = vmatpush2.bf16.msra.mxu0 %v2559
    %3152 = vmatprep.subr.bf16.mxu0 %v2552
    %3153 = vmatpush2.bf16.msra.mxu0 %v2551
    %3154 = vmatprep.subr.bf16.mxu0 %v2544
    %3155 = vmatpush2.bf16.msra.mxu0 %v2543
    %3156 = vmatprep.subr.bf16.mxu0 %v2536
    %3157 = vmatpush2.bf16.msra.mxu0 %v2535
    %3158 = vmatprep.subr.bf16.mxu0 %v2528
    %3159 = vmatpush2.bf16.msra.mxu0 %v2527
    %3160 = vmatprep.mubr.bf16.mxu0 %v1262
    %3161 = vmatmul.mubr.bf16.gmra.mxu0 %v1261
    %v3162 = vpop.f32.mrf.mxu0
    %v3163 = vadd.f32 %v3122, %v3162
    %v3164 = vpop.f32.mrf.mxu0
    %v3165 = vadd.f32 %v3124, %v3164
    %v3166 = vpop.f32.mrf.mxu0
    %v3167 = vpop.f32.mrf.mxu0
    %3168 = vdwg.mxu0
    %v3169 = vmul.f32 %v2917, %v231
    %v3170 = vmul.f32 %v2919, %v231
    %v3171 = vmul.f32 %v2999, %v231
    %v3172 = vmul.f32 %v3001, %v231
    %v3173 = vmul.f32 %v3081, %v231
    %v3174 = vmul.f32 %v3083, %v231
    %v3175 = vmul.f32 %v3163, %v231
    %v3176 = vmul.f32 %v3165, %v231
    %v3177 = vrot.slane %v3169, 4
    %v3178 = vadd.f32 %v3169, %v3177
    %v3179 = vrot.slane %v3178, 2
    %v3180 = vadd.f32 %v3178, %v3179
    %v3181 = vrot.slane %v3180, 1
    %v3182 = vadd.f32 %v3180, %v3181
    %v3183 = vrot.slane %v3170, 4
    %v3184 = vadd.f32 %v3170, %v3183
    %v3185 = vrot.slane %v3184, 2
    %v3186 = vadd.f32 %v3184, %v3185
    %v3187 = vrot.slane %v3186, 1
    %v3188 = vadd.f32 %v3186, %v3187
    %v3189 = vrot.slane %v3171, 4
    %v3190 = vadd.f32 %v3171, %v3189
    %v3191 = vrot.slane %v3190, 2
    %v3192 = vadd.f32 %v3190, %v3191
    %v3193 = vrot.slane %v3192, 1
    %v3194 = vadd.f32 %v3192, %v3193
    %v3195 = vrot.slane %v3172, 4
    %v3196 = vadd.f32 %v3172, %v3195
    %v3197 = vrot.slane %v3196, 2
    %v3198 = vadd.f32 %v3196, %v3197
    %v3199 = vrot.slane %v3198, 1
    %v3200 = vadd.f32 %v3198, %v3199
    %v3201 = vrot.slane %v3173, 4
    %v3202 = vadd.f32 %v3173, %v3201
    %v3203 = vrot.slane %v3202, 2
    %v3204 = vadd.f32 %v3202, %v3203
    %v3205 = vrot.slane %v3204, 1
    %v3206 = vadd.f32 %v3204, %v3205
    %v3207 = vrot.slane %v3174, 4
    %v3208 = vadd.f32 %v3174, %v3207
    %v3209 = vrot.slane %v3208, 2
    %v3210 = vadd.f32 %v3208, %v3209
    %v3211 = vrot.slane %v3210, 1
    %v3212 = vadd.f32 %v3210, %v3211
    %v3213 = vrot.slane %v3175, 4
    %v3214 = vadd.f32 %v3175, %v3213
    %v3215 = vrot.slane %v3214, 2
    %v3216 = vadd.f32 %v3214, %v3215
    %v3217 = vrot.slane %v3216, 1
    %v3218 = vadd.f32 %v3216, %v3217
    %v3219 = vrot.slane %v3176, 4
    %v3220 = vadd.f32 %v3176, %v3219
    %v3221 = vrot.slane %v3220, 2
    %v3222 = vadd.f32 %v3220, %v3221
    %v3223 = vrot.slane %v3222, 1
    %v3224 = vadd.f32 %v3222, %v3223
    %v3225 = vmul.f32 %v3169, %v2917
    %v3226 = vmul.f32 %v3170, %v2919
    %v3227 = vmul.f32 %v3171, %v2999
    %v3228 = vmul.f32 %v3172, %v3001
    %v3229 = vmul.f32 %v3173, %v3081
    %v3230 = vmul.f32 %v3174, %v3083
    %v3231 = vmul.f32 %v3175, %v3163
    %v3232 = vmul.f32 %v3176, %v3165
    %v3233 = vrot.slane %v3225, 4
    %v3234 = vadd.f32 %v3225, %v3233
    %v3235 = vrot.slane %v3234, 2
    %v3236 = vadd.f32 %v3234, %v3235
    %v3237 = vrot.slane %v3236, 1
    %v3238 = vadd.f32 %v3236, %v3237
    %v3239 = vrot.slane %v3226, 4
    %v3240 = vadd.f32 %v3226, %v3239
    %v3241 = vrot.slane %v3240, 2
    %v3242 = vadd.f32 %v3240, %v3241
    %v3243 = vrot.slane %v3242, 1
    %v3244 = vadd.f32 %v3242, %v3243
    %v3245 = vrot.slane %v3227, 4
    %v3246 = vadd.f32 %v3227, %v3245
    %v3247 = vrot.slane %v3246, 2
    %v3248 = vadd.f32 %v3246, %v3247
    %v3249 = vrot.slane %v3248, 1
    %v3250 = vadd.f32 %v3248, %v3249
    %v3251 = vrot.slane %v3228, 4
    %v3252 = vadd.f32 %v3228, %v3251
    %v3253 = vrot.slane %v3252, 2
    %v3254 = vadd.f32 %v3252, %v3253
    %v3255 = vrot.slane %v3254, 1
    %v3256 = vadd.f32 %v3254, %v3255
    %v3257 = vrot.slane %v3229, 4
    %v3258 = vadd.f32 %v3229, %v3257
    %v3259 = vrot.slane %v3258, 2
    %v3260 = vadd.f32 %v3258, %v3259
    %v3261 = vrot.slane %v3260, 1
    %v3262 = vadd.f32 %v3260, %v3261
    %v3263 = vrot.slane %v3230, 4
    %v3264 = vadd.f32 %v3230, %v3263
    %v3265 = vrot.slane %v3264, 2
    %v3266 = vadd.f32 %v3264, %v3265
    %v3267 = vrot.slane %v3266, 1
    %v3268 = vadd.f32 %v3266, %v3267
    %v3269 = vrot.slane %v3231, 4
    %v3270 = vadd.f32 %v3231, %v3269
    %v3271 = vrot.slane %v3270, 2
    %v3272 = vadd.f32 %v3270, %v3271
    %v3273 = vrot.slane %v3272, 1
    %v3274 = vadd.f32 %v3272, %v3273
    %v3275 = vrot.slane %v3232, 4
    %v3276 = vadd.f32 %v3232, %v3275
    %v3277 = vrot.slane %v3276, 2
    %v3278 = vadd.f32 %v3276, %v3277
    %v3279 = vrot.slane %v3278, 1
    %v3280 = vadd.f32 %v3278, %v3279
    %v3281 = vmul.f32 %v3182, 0.25
    %v3282 = vmul.f32 %v3188, 0.25
    %v3283 = vmul.f32 %v3194, 0.25
    %v3284 = vmul.f32 %v3200, 0.25
    %v3285 = vmul.f32 %v3206, 0.25
    %v3286 = vmul.f32 %v3212, 0.25
    %v3287 = vmul.f32 %v3218, 0.25
    %v3288 = vmul.f32 %v3224, 0.25
    %v3289 = vmul.f32 %v3238, 0.25
    %v3290 = vmul.f32 %v3244, 0.25
    %v3291 = vmul.f32 %v3250, 0.25
    %v3292 = vmul.f32 %v3256, 0.25
    %v3293 = vmul.f32 %v3262, 0.25
    %v3294 = vmul.f32 %v3268, 0.25
    %v3295 = vmul.f32 %v3274, 0.25
    %v3296 = vmul.f32 %v3280, 0.25
    %v3297 = vmul.f32 %v3281, %v3281
    %v3298 = vmul.f32 %v3282, %v3282
    %v3299 = vmul.f32 %v3283, %v3283
    %v3300 = vmul.f32 %v3284, %v3284
    %v3301 = vmul.f32 %v3285, %v3285
    %v3302 = vmul.f32 %v3286, %v3286
    %v3303 = vmul.f32 %v3287, %v3287
    %v3304 = vmul.f32 %v3288, %v3288
    %v3305 = vsub.f32 %v3289, %v3297
    %v3306 = vsub.f32 %v3290, %v3298
    %v3307 = vsub.f32 %v3291, %v3299
    %v3308 = vsub.f32 %v3292, %v3300
    %v3309 = vsub.f32 %v3293, %v3301
    %v3310 = vsub.f32 %v3294, %v3302
    %v3311 = vsub.f32 %v3295, %v3303
    %v3312 = vsub.f32 %v3296, %v3304
    %v3313 = vmax.f32 %v3305, 0.0
    %v3314 = vmax.f32 %v3306, 0.0
    %v3315 = vmax.f32 %v3307, 0.0
    %v3316 = vmax.f32 %v3308, 0.0
    %v3317 = vmax.f32 %v3309, 0.0
    %v3318 = vmax.f32 %v3310, 0.0
    %v3319 = vmax.f32 %v3311, 0.0
    %v3320 = vmax.f32 %v3312, 0.0
    %v3321 = vld [vmem:[#allocation18] sm:$0xff]
    %v3322 = vadd.f32 %v3313, 1e-05
    %v3323 = vadd.f32 %v3314, 1e-05
    %v3324 = vadd.f32 %v3315, 1e-05
    %v3325 = vadd.f32 %v3316, 1e-05
    %v3326 = vadd.f32 %v3317, 1e-05
    %v3327 = vadd.f32 %v3318, 1e-05
    %v3328 = vadd.f32 %v3319, 1e-05
    %v3329 = vadd.f32 %v3320, 1e-05
    %v3330 = vrsqrt.pop %v3322
    %v3331 = vrsqrt.pop %v3323
    %v3332 = vrsqrt.pop %v3324
    %v3333 = vrsqrt.pop %v3325
    %v3334 = vrsqrt.pop %v3326
    %v3335 = vrsqrt.pop %v3327
    %v3336 = vrsqrt.pop %v3328
    %v3337 = vrsqrt.pop %v3329
    %v3346 = vcombine.low %v3330, %v3331
    %v3347 = vcombine.low %v3332, %v3333
    %v3348 = vcombine.low %v3334, %v3335
    %v3349 = vcombine.low %v3336, %v3337
    %v3351 = vunpack.c.l.s4 1966171168
    %v3352 = vunpack.c.0.s8 %v3351
    %v3353 = vlaneseq
    %v3354 = vshrl.u32 %v3353, 7
    %v3355 = vsub.s32 %v3352, %v3354
    %v3356 = vrot.slane %v3346, %v3355
    %v3358 = vunpack.c.l.s4 1966171168
    %v3359 = vunpack.c.0.s8 %v3358
    %v3360 = vlaneseq
    %v3361 = vshrl.u32 %v3360, 7
    %v3362 = vsub.s32 %v3359, %v3361
    %v3363 = vrot.slane %v3347, %v3362
    %v3365 = vunpack.c.l.s4 1966171168
    %v3366 = vunpack.c.0.s8 %v3365
    %v3367 = vlaneseq
    %v3368 = vshrl.u32 %v3367, 7
    %v3369 = vsub.s32 %v3366, %v3368
    %v3370 = vrot.slane %v3348, %v3369
    %v3372 = vunpack.c.l.s4 1966171168
    %v3373 = vunpack.c.0.s8 %v3372
    %v3374 = vlaneseq
    %v3375 = vshrl.u32 %v3374, 7
    %v3376 = vsub.s32 %v3373, %v3375
    %v3377 = vrot.slane %v3349, %v3376
    %v3378 = vcombine.low %v3356, %v3363
    %v3379 = vcombine.low %v3370, %v3377
    %v3381 = vunpack.c.l.s4 1966171168
    %v3382 = vunpack.c.0.s8 %v3381
    %v3383 = vlaneseq
    %v3384 = vshrl.u32 %v3383, 7
    %v3385 = vsub.s32 %v3382, %v3384
    %v3386 = vrot.slane %v3378, %v3385
    %v3388 = vunpack.c.l.s4 1966171168
    %v3389 = vunpack.c.0.s8 %v3388
    %v3390 = vlaneseq
    %v3391 = vshrl.u32 %v3390, 7
    %v3392 = vsub.s32 %v3389, %v3391
    %v3393 = vrot.slane %v3379, %v3392
    %v3394 = vcombine.low %v3386, %v3393
    %v3396 = vmul.f32 %v3321, %v3394
    %v3397 = vsub.f32 %v2917, %v3281
    %v3398 = vsub.f32 %v2919, %v3282
    %v3399 = vsub.f32 %v2999, %v3283
    %v3400 = vsub.f32 %v3001, %v3284
    %v3401 = vsub.f32 %v3081, %v3285
    %v3402 = vsub.f32 %v3083, %v3286
    %v3403 = vsub.f32 %v3163, %v3287
    %v3404 = vsub.f32 %v3165, %v3288
    %v3406 = vlaneseq
    %v3407 = vshrl.u32 %v3406, 7
    %v3408 = vsub.s32 0, %v3407
    %v3409 = vrot.slane %v3396, %v3408
    %v3410 = vlaneseq
    %v3411 = vshrl.u32 %v3410, 7
    %v3412 = vsub.s32 1, %v3411
    %v3413 = vrot.slane %v3396, %v3412
    %v3414 = vlaneseq
    %v3415 = vshrl.u32 %v3414, 7
    %v3416 = vsub.s32 2, %v3415
    %v3417 = vrot.slane %v3396, %v3416
    %v3418 = vlaneseq
    %v3419 = vshrl.u32 %v3418, 7
    %v3420 = vsub.s32 3, %v3419
    %v3421 = vrot.slane %v3396, %v3420
    %v3422 = vlaneseq
    %v3423 = vshrl.u32 %v3422, 7
    %v3424 = vsub.s32 4, %v3423
    %v3425 = vrot.slane %v3396, %v3424
    %v3426 = vlaneseq
    %v3427 = vshrl.u32 %v3426, 7
    %v3428 = vsub.s32 5, %v3427
    %v3429 = vrot.slane %v3396, %v3428
    %v3430 = vlaneseq
    %v3431 = vshrl.u32 %v3430, 7
    %v3432 = vsub.s32 6, %v3431
    %v3433 = vrot.slane %v3396, %v3432
    %v3434 = vlaneseq
    %v3435 = vshrl.u32 %v3434, 7
    %v3436 = vsub.s32 7, %v3435
    %v3437 = vrot.slane %v3396, %v3436
    %v3446 = vmul.f32 %v3397, %v3409
    %v3447 = vmul.f32 %v3398, %v3413
    %v3448 = vmul.f32 %v3399, %v3417
    %v3449 = vmul.f32 %v3400, %v3421
    %v3450 = vmul.f32 %v3401, %v3425
    %v3451 = vmul.f32 %v3402, %v3429
    %v3452 = vmul.f32 %v3403, %v3433
    %v3453 = vmul.f32 %v3404, %v3437
    %v3454 = vld [vmem:[#allocation19] sm:$0xff]
    %v3456 = vlaneseq
    %v3457 = vshrl.u32 %v3456, 7
    %v3458 = vsub.s32 0, %v3457
    %v3459 = vrot.slane %v3454, %v3458
    %v3460 = vlaneseq
    %v3461 = vshrl.u32 %v3460, 7
    %v3462 = vsub.s32 1, %v3461
    %v3463 = vrot.slane %v3454, %v3462
    %v3464 = vlaneseq
    %v3465 = vshrl.u32 %v3464, 7
    %v3466 = vsub.s32 2, %v3465
    %v3467 = vrot.slane %v3454, %v3466
    %v3468 = vlaneseq
    %v3469 = vshrl.u32 %v3468, 7
    %v3470 = vsub.s32 3, %v3469
    %v3471 = vrot.slane %v3454, %v3470
    %v3472 = vlaneseq
    %v3473 = vshrl.u32 %v3472, 7
    %v3474 = vsub.s32 4, %v3473
    %v3475 = vrot.slane %v3454, %v3474
    %v3476 = vlaneseq
    %v3477 = vshrl.u32 %v3476, 7
    %v3478 = vsub.s32 5, %v3477
    %v3479 = vrot.slane %v3454, %v3478
    %v3480 = vlaneseq
    %v3481 = vshrl.u32 %v3480, 7
    %v3482 = vsub.s32 6, %v3481
    %v3483 = vrot.slane %v3454, %v3482
    %v3484 = vlaneseq
    %v3485 = vshrl.u32 %v3484, 7
    %v3486 = vsub.s32 7, %v3485
    %v3487 = vrot.slane %v3454, %v3486
    %v3496 = vadd.f32 %v3446, %v3459
    %v3497 = vadd.f32 %v3447, %v3463
    %v3498 = vadd.f32 %v3448, %v3467
    %v3499 = vadd.f32 %v3449, %v3471
    %v3500 = vadd.f32 %v3450, %v3475
    %v3501 = vadd.f32 %v3451, %v3479
    %v3502 = vadd.f32 %v3452, %v3483
    %v3503 = vadd.f32 %v3453, %v3487
    %v3504 = vmul.f32 %v3496, 0.2
    %v3505 = vmul.f32 %v3497, 0.2
    %v3506 = vmul.f32 %v3498, 0.2
    %v3507 = vmul.f32 %v3499, 0.2
    %v3508 = vmul.f32 %v3500, 0.2
    %v3509 = vmul.f32 %v3501, 0.2
    %v3510 = vmul.f32 %v3502, 0.2
    %v3511 = vmul.f32 %v3503, 0.2
    %v3512 = vmax.f32 %v3496, %v3504
    %v3513 = vmax.f32 %v3497, %v3505
    %v3514 = vmax.f32 %v3498, %v3506
    %v3515 = vmax.f32 %v3499, %v3507
    %v3516 = vmax.f32 %v3500, %v3508
    %v3517 = vmax.f32 %v3501, %v3509
    %v3518 = vmax.f32 %v3502, %v3510
    %v3519 = vmax.f32 %v3503, %v3511
    %v3520 = vpack.c.bf16 %v3512, %v3512
    %v3521 = vpack.c.bf16 %v3513, %v3513
    %v3522 = vpack.c.bf16 %v3514, %v3514
    %v3523 = vpack.c.bf16 %v3515, %v3515
    %v3524 = vpack.c.bf16 %v3516, %v3516
    %v3525 = vpack.c.bf16 %v3517, %v3517
    %v3526 = vpack.c.bf16 %v3518, %v3518
    %v3527 = vpack.c.bf16 %v3519, %v3519
    %v3528 = vld [vmem:[#allocation21] sm:$0xf]
    %v3529 = vld [vmem:[#allocation21 + $0x4] sm:$0xf]
    %v3530 = vld [vmem:[#allocation21 + $0x8] sm:$0xf]
    %v3531 = vld [vmem:[#allocation21 + $0xc] sm:$0xf]
    %v3532 = vld [vmem:[#allocation21 + $0x10] sm:$0xf]
    %v3533 = vld [vmem:[#allocation21 + $0x14] sm:$0xf]
    %v3534 = vld [vmem:[#allocation21 + $0x18] sm:$0xf]
    %v3535 = vld [vmem:[#allocation21 + $0x1c] sm:$0xf]
    %v3536 = vld [vmem:[#allocation21 + $0x20] sm:$0xf]
    %v3537 = vld [vmem:[#allocation21 + $0x24] sm:$0xf]
    %v3538 = vld [vmem:[#allocation21 + $0x28] sm:$0xf]
    %v3539 = vld [vmem:[#allocation21 + $0x2c] sm:$0xf]
    %v3540 = vld [vmem:[#allocation21 + $0x30] sm:$0xf]
    %v3541 = vld [vmem:[#allocation21 + $0x34] sm:$0xf]
    %v3542 = vld [vmem:[#allocation21 + $0x38] sm:$0xf]
    %v3543 = vld [vmem:[#allocation21 + $0x3c] sm:$0xf]
    %v3544 = vld [vmem:[#allocation21 + $0x40] sm:$0xf]
    %v3545 = vld [vmem:[#allocation21 + $0x44] sm:$0xf]
    %v3546 = vld [vmem:[#allocation21 + $0x48] sm:$0xf]
    %v3547 = vld [vmem:[#allocation21 + $0x4c] sm:$0xf]
    %v3548 = vld [vmem:[#allocation21 + $0x50] sm:$0xf]
    %v3549 = vld [vmem:[#allocation21 + $0x54] sm:$0xf]
    %v3550 = vld [vmem:[#allocation21 + $0x58] sm:$0xf]
    %v3551 = vld [vmem:[#allocation21 + $0x5c] sm:$0xf]
    %v3552 = vld [vmem:[#allocation21 + $0x60] sm:$0xf]
    %v3553 = vld [vmem:[#allocation21 + $0x64] sm:$0xf]
    %v3554 = vld [vmem:[#allocation21 + $0x68] sm:$0xf]
    %v3555 = vld [vmem:[#allocation21 + $0x6c] sm:$0xf]
    %v3556 = vld [vmem:[#allocation21 + $0x70] sm:$0xf]
    %v3557 = vld [vmem:[#allocation21 + $0x74] sm:$0xf]
    %v3558 = vld [vmem:[#allocation21 + $0x78] sm:$0xf]
    %v3559 = vld [vmem:[#allocation21 + $0x7c] sm:$0xf]
    %v3560 = vld [vmem:[#allocation21 + $0x80] sm:$0xf]
    %v3561 = vld [vmem:[#allocation21 + $0x84] sm:$0xf]
    %v3562 = vld [vmem:[#allocation21 + $0x88] sm:$0xf]
    %v3563 = vld [vmem:[#allocation21 + $0x8c] sm:$0xf]
    %v3564 = vld [vmem:[#allocation21 + $0x90] sm:$0xf]
    %v3565 = vld [vmem:[#allocation21 + $0x94] sm:$0xf]
    %v3566 = vld [vmem:[#allocation21 + $0x98] sm:$0xf]
    %v3567 = vld [vmem:[#allocation21 + $0x9c] sm:$0xf]
    %v3568 = vld [vmem:[#allocation21 + $0xa0] sm:$0xf]
    %v3569 = vld [vmem:[#allocation21 + $0xa4] sm:$0xf]
    %v3570 = vld [vmem:[#allocation21 + $0xa8] sm:$0xf]
    %v3571 = vld [vmem:[#allocation21 + $0xac] sm:$0xf]
    %v3572 = vld [vmem:[#allocation21 + $0xb0] sm:$0xf]
    %v3573 = vld [vmem:[#allocation21 + $0xb4] sm:$0xf]
    %v3574 = vld [vmem:[#allocation21 + $0xb8] sm:$0xf]
    %v3575 = vld [vmem:[#allocation21 + $0xbc] sm:$0xf]
    %v3576 = vld [vmem:[#allocation21 + $0xc0] sm:$0xf]
    %v3577 = vld [vmem:[#allocation21 + $0xc4] sm:$0xf]
    %v3578 = vld [vmem:[#allocation21 + $0xc8] sm:$0xf]
    %v3579 = vld [vmem:[#allocation21 + $0xcc] sm:$0xf]
    %v3580 = vld [vmem:[#allocation21 + $0xd0] sm:$0xf]
    %v3581 = vld [vmem:[#allocation21 + $0xd4] sm:$0xf]
    %v3582 = vld [vmem:[#allocation21 + $0xd8] sm:$0xf]
    %v3583 = vld [vmem:[#allocation21 + $0xdc] sm:$0xf]
    %v3584 = vld [vmem:[#allocation21 + $0xe0] sm:$0xf]
    %v3585 = vld [vmem:[#allocation21 + $0xe4] sm:$0xf]
    %v3586 = vld [vmem:[#allocation21 + $0xe8] sm:$0xf]
    %v3587 = vld [vmem:[#allocation21 + $0xec] sm:$0xf]
    %v3588 = vld [vmem:[#allocation21 + $0xf0] sm:$0xf]
    %v3589 = vld [vmem:[#allocation21 + $0xf4] sm:$0xf]
    %v3590 = vld [vmem:[#allocation21 + $0xf8] sm:$0xf]
    %v3591 = vld [vmem:[#allocation21 + $0xfc] sm:$0xf]
    %v3592 = vld [vmem:[#allocation21 + $0x100] sm:$0xf]
    %v3593 = vld [vmem:[#allocation21 + $0x104] sm:$0xf]
    %v3594 = vld [vmem:[#allocation21 + $0x108] sm:$0xf]
    %v3595 = vld [vmem:[#allocation21 + $0x10c] sm:$0xf]
    %v3596 = vld [vmem:[#allocation21 + $0x110] sm:$0xf]
    %v3597 = vld [vmem:[#allocation21 + $0x114] sm:$0xf]
    %v3598 = vld [vmem:[#allocation21 + $0x118] sm:$0xf]
    %v3599 = vld [vmem:[#allocation21 + $0x11c] sm:$0xf]
    %v3600 = vld [vmem:[#allocation21 + $0x120] sm:$0xf]
    %v3601 = vld [vmem:[#allocation21 + $0x124] sm:$0xf]
    %v3602 = vld [vmem:[#allocation21 + $0x128] sm:$0xf]
    %v3603 = vld [vmem:[#allocation21 + $0x12c] sm:$0xf]
    %v3604 = vld [vmem:[#allocation21 + $0x130] sm:$0xf]
    %v3605 = vld [vmem:[#allocation21 + $0x134] sm:$0xf]
    %v3606 = vld [vmem:[#allocation21 + $0x138] sm:$0xf]
    %v3607 = vld [vmem:[#allocation21 + $0x13c] sm:$0xf]
    %v3608 = vld [vmem:[#allocation21 + $0x140] sm:$0xf]
    %v3609 = vld [vmem:[#allocation21 + $0x144] sm:$0xf]
    %v3610 = vld [vmem:[#allocation21 + $0x148] sm:$0xf]
    %v3611 = vld [vmem:[#allocation21 + $0x14c] sm:$0xf]
    %v3612 = vld [vmem:[#allocation21 + $0x150] sm:$0xf]
    %v3613 = vld [vmem:[#allocation21 + $0x154] sm:$0xf]
    %v3614 = vld [vmem:[#allocation21 + $0x158] sm:$0xf]
    %v3615 = vld [vmem:[#allocation21 + $0x15c] sm:$0xf]
    %v3616 = vld [vmem:[#allocation21 + $0x160] sm:$0xf]
    %v3617 = vld [vmem:[#allocation21 + $0x164] sm:$0xf]
    %v3618 = vld [vmem:[#allocation21 + $0x168] sm:$0xf]
    %v3619 = vld [vmem:[#allocation21 + $0x16c] sm:$0xf]
    %v3620 = vld [vmem:[#allocation21 + $0x170] sm:$0xf]
    %v3621 = vld [vmem:[#allocation21 + $0x174] sm:$0xf]
    %v3622 = vld [vmem:[#allocation21 + $0x178] sm:$0xf]
    %v3623 = vld [vmem:[#allocation21 + $0x17c] sm:$0xf]
    %v3624 = vld [vmem:[#allocation21 + $0x180] sm:$0xf]
    %v3625 = vld [vmem:[#allocation21 + $0x184] sm:$0xf]
    %v3626 = vld [vmem:[#allocation21 + $0x188] sm:$0xf]
    %v3627 = vld [vmem:[#allocation21 + $0x18c] sm:$0xf]
    %v3628 = vld [vmem:[#allocation21 + $0x190] sm:$0xf]
    %v3629 = vld [vmem:[#allocation21 + $0x194] sm:$0xf]
    %v3630 = vld [vmem:[#allocation21 + $0x198] sm:$0xf]
    %v3631 = vld [vmem:[#allocation21 + $0x19c] sm:$0xf]
    %v3632 = vld [vmem:[#allocation21 + $0x1a0] sm:$0xf]
    %v3633 = vld [vmem:[#allocation21 + $0x1a4] sm:$0xf]
    %v3634 = vld [vmem:[#allocation21 + $0x1a8] sm:$0xf]
    %v3635 = vld [vmem:[#allocation21 + $0x1ac] sm:$0xf]
    %v3636 = vld [vmem:[#allocation21 + $0x1b0] sm:$0xf]
    %v3637 = vld [vmem:[#allocation21 + $0x1b4] sm:$0xf]
    %v3638 = vld [vmem:[#allocation21 + $0x1b8] sm:$0xf]
    %v3639 = vld [vmem:[#allocation21 + $0x1bc] sm:$0xf]
    %v3640 = vld [vmem:[#allocation21 + $0x1c0] sm:$0xf]
    %v3641 = vld [vmem:[#allocation21 + $0x1c4] sm:$0xf]
    %v3642 = vld [vmem:[#allocation21 + $0x1c8] sm:$0xf]
    %v3643 = vld [vmem:[#allocation21 + $0x1cc] sm:$0xf]
    %v3644 = vld [vmem:[#allocation21 + $0x1d0] sm:$0xf]
    %v3645 = vld [vmem:[#allocation21 + $0x1d4] sm:$0xf]
    %v3646 = vld [vmem:[#allocation21 + $0x1d8] sm:$0xf]
    %v3647 = vld [vmem:[#allocation21 + $0x1dc] sm:$0xf]
    %v3648 = vld [vmem:[#allocation21 + $0x1e0] sm:$0xf]
    %v3649 = vld [vmem:[#allocation21 + $0x1e4] sm:$0xf]
    %v3650 = vld [vmem:[#allocation21 + $0x1e8] sm:$0xf]
    %v3651 = vld [vmem:[#allocation21 + $0x1ec] sm:$0xf]
    %v3652 = vld [vmem:[#allocation21 + $0x1f0] sm:$0xf]
    %v3653 = vld [vmem:[#allocation21 + $0x1f4] sm:$0xf]
    %v3654 = vld [vmem:[#allocation21 + $0x1f8] sm:$0xf]
    %v3655 = vld [vmem:[#allocation21 + $0x1fc] sm:$0xf]
    %v3656 = vld [vmem:[#allocation22] sm:$0x1]
    %v3658 = vlaneseq
    %v3659 = vshrl.u32 %v3658, 7
    %v3660 = vsub.s32 0, %v3659
    %v3661 = vrot.slane %v3656, %v3660
    %v3791 = vunpack.c.l.b16 %v3528
    %v3792 = vunpack.c.l.b16 %v3529
    %v3793 = vunpack.c.l.b16 %v3530
    %v3794 = vunpack.c.l.b16 %v3531
    %v3795 = vunpack.c.l.b16 %v3532
    %v3796 = vunpack.c.l.b16 %v3533
    %v3797 = vunpack.c.l.b16 %v3534
    %v3798 = vunpack.c.l.b16 %v3535
    %v3799 = vunpack.c.l.b16 %v3536
    %v3800 = vunpack.c.l.b16 %v3537
    %v3801 = vunpack.c.l.b16 %v3538
    %v3802 = vunpack.c.l.b16 %v3539
    %v3803 = vunpack.c.l.b16 %v3540
    %v3804 = vunpack.c.l.b16 %v3541
    %v3805 = vunpack.c.l.b16 %v3542
    %v3806 = vunpack.c.l.b16 %v3543
    %v3807 = vunpack.c.l.b16 %v3544
    %v3808 = vunpack.c.l.b16 %v3545
    %v3809 = vunpack.c.l.b16 %v3546
    %v3810 = vunpack.c.l.b16 %v3547
    %v3811 = vunpack.c.l.b16 %v3548
    %v3812 = vunpack.c.l.b16 %v3549
    %v3813 = vunpack.c.l.b16 %v3550
    %v3814 = vunpack.c.l.b16 %v3551
    %v3815 = vunpack.c.l.b16 %v3552
    %v3816 = vunpack.c.l.b16 %v3553
    %v3817 = vunpack.c.l.b16 %v3554
    %v3818 = vunpack.c.l.b16 %v3555
    %v3819 = vunpack.c.l.b16 %v3556
    %v3820 = vunpack.c.l.b16 %v3557
    %v3821 = vunpack.c.l.b16 %v3558
    %v3822 = vunpack.c.l.b16 %v3559
    %v3823 = vunpack.c.l.b16 %v3560
    %v3824 = vunpack.c.l.b16 %v3561
    %v3825 = vunpack.c.l.b16 %v3562
    %v3826 = vunpack.c.l.b16 %v3563
    %v3827 = vunpack.c.l.b16 %v3564
    %v3828 = vunpack.c.l.b16 %v3565
    %v3829 = vunpack.c.l.b16 %v3566
    %v3830 = vunpack.c.l.b16 %v3567
    %v3831 = vunpack.c.l.b16 %v3568
    %v3832 = vunpack.c.l.b16 %v3569
    %v3833 = vunpack.c.l.b16 %v3570
    %v3834 = vunpack.c.l.b16 %v3571
    %v3835 = vunpack.c.l.b16 %v3572
    %v3836 = vunpack.c.l.b16 %v3573
    %v3837 = vunpack.c.l.b16 %v3574
    %v3838 = vunpack.c.l.b16 %v3575
    %v3839 = vunpack.c.l.b16 %v3576
    %v3840 = vunpack.c.l.b16 %v3577
    %v3841 = vunpack.c.l.b16 %v3578
    %v3842 = vunpack.c.l.b16 %v3579
    %v3843 = vunpack.c.l.b16 %v3580
    %v3844 = vunpack.c.l.b16 %v3581
    %v3845 = vunpack.c.l.b16 %v3582
    %v3846 = vunpack.c.l.b16 %v3583
    %v3847 = vunpack.c.l.b16 %v3584
    %v3848 = vunpack.c.l.b16 %v3585
    %v3849 = vunpack.c.l.b16 %v3586
    %v3850 = vunpack.c.l.b16 %v3587
    %v3851 = vunpack.c.l.b16 %v3588
    %v3852 = vunpack.c.l.b16 %v3589
    %v3853 = vunpack.c.l.b16 %v3590
    %v3854 = vunpack.c.l.b16 %v3591
    %v3855 = vunpack.c.l.b16 %v3592
    %v3856 = vunpack.c.l.b16 %v3593
    %v3857 = vunpack.c.l.b16 %v3594
    %v3858 = vunpack.c.l.b16 %v3595
    %v3859 = vunpack.c.l.b16 %v3596
    %v3860 = vunpack.c.l.b16 %v3597
    %v3861 = vunpack.c.l.b16 %v3598
    %v3862 = vunpack.c.l.b16 %v3599
    %v3863 = vunpack.c.l.b16 %v3600
    %v3864 = vunpack.c.l.b16 %v3601
    %v3865 = vunpack.c.l.b16 %v3602
    %v3866 = vunpack.c.l.b16 %v3603
    %v3867 = vunpack.c.l.b16 %v3604
    %v3868 = vunpack.c.l.b16 %v3605
    %v3869 = vunpack.c.l.b16 %v3606
    %v3870 = vunpack.c.l.b16 %v3607
    %v3871 = vunpack.c.l.b16 %v3608
    %v3872 = vunpack.c.l.b16 %v3609
    %v3873 = vunpack.c.l.b16 %v3610
    %v3874 = vunpack.c.l.b16 %v3611
    %v3875 = vunpack.c.l.b16 %v3612
    %v3876 = vunpack.c.l.b16 %v3613
    %v3877 = vunpack.c.l.b16 %v3614
    %v3878 = vunpack.c.l.b16 %v3615
    %v3879 = vunpack.c.l.b16 %v3616
    %v3880 = vunpack.c.l.b16 %v3617
    %v3881 = vunpack.c.l.b16 %v3618
    %v3882 = vunpack.c.l.b16 %v3619
    %v3883 = vunpack.c.l.b16 %v3620
    %v3884 = vunpack.c.l.b16 %v3621
    %v3885 = vunpack.c.l.b16 %v3622
    %v3886 = vunpack.c.l.b16 %v3623
    %v3887 = vunpack.c.l.b16 %v3624
    %v3888 = vunpack.c.l.b16 %v3625
    %v3889 = vunpack.c.l.b16 %v3626
    %v3890 = vunpack.c.l.b16 %v3627
    %v3891 = vunpack.c.l.b16 %v3628
    %v3892 = vunpack.c.l.b16 %v3629
    %v3893 = vunpack.c.l.b16 %v3630
    %v3894 = vunpack.c.l.b16 %v3631
    %v3895 = vunpack.c.l.b16 %v3632
    %v3896 = vunpack.c.l.b16 %v3633
    %v3897 = vunpack.c.l.b16 %v3634
    %v3898 = vunpack.c.l.b16 %v3635
    %v3899 = vunpack.c.l.b16 %v3636
    %v3900 = vunpack.c.l.b16 %v3637
    %v3901 = vunpack.c.l.b16 %v3638
    %v3902 = vunpack.c.l.b16 %v3639
    %v3903 = vunpack.c.l.b16 %v3640
    %v3904 = vunpack.c.l.b16 %v3641
    %v3905 = vunpack.c.l.b16 %v3642
    %v3906 = vunpack.c.l.b16 %v3643
    %v3907 = vunpack.c.l.b16 %v3644
    %v3908 = vunpack.c.l.b16 %v3645
    %v3909 = vunpack.c.l.b16 %v3646
    %v3910 = vunpack.c.l.b16 %v3647
    %v3911 = vunpack.c.l.b16 %v3648
    %v3912 = vunpack.c.l.b16 %v3649
    %v3913 = vunpack.c.l.b16 %v3650
    %v3914 = vunpack.c.l.b16 %v3651
    %v3915 = vunpack.c.l.b16 %v3652
    %v3916 = vunpack.c.l.b16 %v3653
    %v3917 = vunpack.c.l.b16 %v3654
    %v3918 = vunpack.c.l.b16 %v3655
    %v3919 = vpack.c.b16 %v3792, %v3791
    %v3920 = vpack.c.b16 %v3794, %v3793
    %v3921 = vpack.c.b16 %v3796, %v3795
    %v3922 = vpack.c.b16 %v3798, %v3797
    %v3923 = vpack.c.b16 %v3800, %v3799
    %v3924 = vpack.c.b16 %v3802, %v3801
    %v3925 = vpack.c.b16 %v3804, %v3803
    %v3926 = vpack.c.b16 %v3806, %v3805
    %v3927 = vpack.c.b16 %v3808, %v3807
    %v3928 = vpack.c.b16 %v3810, %v3809
    %v3929 = vpack.c.b16 %v3812, %v3811
    %v3930 = vpack.c.b16 %v3814, %v3813
    %v3931 = vpack.c.b16 %v3816, %v3815
    %v3932 = vpack.c.b16 %v3818, %v3817
    %v3933 = vpack.c.b16 %v3820, %v3819
    %v3934 = vpack.c.b16 %v3822, %v3821
    %v3935 = vpack.c.b16 %v3824, %v3823
    %v3936 = vpack.c.b16 %v3826, %v3825
    %v3937 = vpack.c.b16 %v3828, %v3827
    %v3938 = vpack.c.b16 %v3830, %v3829
    %v3939 = vpack.c.b16 %v3832, %v3831
    %v3940 = vpack.c.b16 %v3834, %v3833
    %v3941 = vpack.c.b16 %v3836, %v3835
    %v3942 = vpack.c.b16 %v3838, %v3837
    %v3943 = vpack.c.b16 %v3840, %v3839
    %v3944 = vpack.c.b16 %v3842, %v3841
    %v3945 = vpack.c.b16 %v3844, %v3843
    %v3946 = vpack.c.b16 %v3846, %v3845
    %v3947 = vpack.c.b16 %v3848, %v3847
    %v3948 = vpack.c.b16 %v3850, %v3849
    %v3949 = vpack.c.b16 %v3852, %v3851
    %v3950 = vpack.c.b16 %v3854, %v3853
    %v3951 = vpack.c.b16 %v3856, %v3855
    %v3952 = vpack.c.b16 %v3858, %v3857
    %v3953 = vpack.c.b16 %v3860, %v3859
    %v3954 = vpack.c.b16 %v3862, %v3861
    %v3955 = vpack.c.b16 %v3864, %v3863
    %v3956 = vpack.c.b16 %v3866, %v3865
    %v3957 = vpack.c.b16 %v3868, %v3867
    %v3958 = vpack.c.b16 %v3870, %v3869
    %v3959 = vpack.c.b16 %v3872, %v3871
    %v3960 = vpack.c.b16 %v3874, %v3873
    %v3961 = vpack.c.b16 %v3876, %v3875
    %v3962 = vpack.c.b16 %v3878, %v3877
    %v3963 = vpack.c.b16 %v3880, %v3879
    %v3964 = vpack.c.b16 %v3882, %v3881
    %v3965 = vpack.c.b16 %v3884, %v3883
    %v3966 = vpack.c.b16 %v3886, %v3885
    %v3967 = vpack.c.b16 %v3888, %v3887
    %v3968 = vpack.c.b16 %v3890, %v3889
    %v3969 = vpack.c.b16 %v3892, %v3891
    %v3970 = vpack.c.b16 %v3894, %v3893
    %v3971 = vpack.c.b16 %v3896, %v3895
    %v3972 = vpack.c.b16 %v3898, %v3897
    %v3973 = vpack.c.b16 %v3900, %v3899
    %v3974 = vpack.c.b16 %v3902, %v3901
    %v3975 = vpack.c.b16 %v3904, %v3903
    %v3976 = vpack.c.b16 %v3906, %v3905
    %v3977 = vpack.c.b16 %v3908, %v3907
    %v3978 = vpack.c.b16 %v3910, %v3909
    %v3979 = vpack.c.b16 %v3912, %v3911
    %v3980 = vpack.c.b16 %v3914, %v3913
    %v3981 = vpack.c.b16 %v3916, %v3915
    %v3982 = vpack.c.b16 %v3918, %v3917
    %4047 = vmatprep.subr.bf16.mxu0 0
    %4048 = vmatpush1.bf16.msra.mxu0 %v3926
    %4049 = vmatprep.subr.bf16.mxu0 0
    %4050 = vmatpush1.bf16.msra.mxu0 %v3925
    %4051 = vmatprep.subr.bf16.mxu0 0
    %4052 = vmatpush1.bf16.msra.mxu0 %v3924
    %4053 = vmatprep.subr.bf16.mxu0 0
    %4054 = vmatpush1.bf16.msra.mxu0 %v3923
    %4055 = vmatprep.subr.bf16.mxu0 0
    %4056 = vmatpush1.bf16.msra.mxu0 %v3922
    %4057 = vmatprep.subr.bf16.mxu0 0
    %4058 = vmatpush1.bf16.msra.mxu0 %v3921
    %4059 = vmatprep.subr.bf16.mxu0 0
    %4060 = vmatpush1.bf16.msra.mxu0 %v3920
    %4061 = vmatprep.subr.bf16.mxu0 0
    %4062 = vmatpush1.bf16.msra.mxu0 %v3919
    %4063 = vmatprep.subr.bf16.mxu0 0
    %4064 = vmatpush2.bf16.msra.mxu0 %v3934
    %4065 = vmatprep.subr.bf16.mxu0 0
    %4066 = vmatpush2.bf16.msra.mxu0 %v3933
    %4067 = vmatprep.subr.bf16.mxu0 0
    %4068 = vmatpush2.bf16.msra.mxu0 %v3932
    %4069 = vmatprep.subr.bf16.mxu0 0
    %4070 = vmatpush2.bf16.msra.mxu0 %v3931
    %4071 = vmatprep.subr.bf16.mxu0 0
    %4072 = vmatpush2.bf16.msra.mxu0 %v3930
    %4073 = vmatprep.subr.bf16.mxu0 0
    %4074 = vmatpush2.bf16.msra.mxu0 %v3929
    %4075 = vmatprep.subr.bf16.mxu0 0
    %4076 = vmatpush2.bf16.msra.mxu0 %v3928
    %4077 = vmatprep.subr.bf16.mxu0 0
    %4078 = vmatpush2.bf16.msra.mxu0 %v3927
    %4079 = vmatprep.mubr.bf16.mxu0 %v3521
    %4080 = vmatmul.mubr.bf16.gmra.mxu0 %v3520
    %v4081 = vpop.f32.mrf.mxu0
    %v4082 = vadd.f32 %v3661, %v4081
    %v4083 = vpop.f32.mrf.mxu0
    %v4084 = vpop.f32.mrf.mxu0
    %v4085 = vpop.f32.mrf.mxu0
    %4086 = vdwg.mxu0
    %4087 = vmatprep.subr.bf16.mxu0 0
    %4088 = vmatpush1.bf16.msra.mxu0 %v3942
    %4089 = vmatprep.subr.bf16.mxu0 0
    %4090 = vmatpush1.bf16.msra.mxu0 %v3941
    %4091 = vmatprep.subr.bf16.mxu0 0
    %4092 = vmatpush1.bf16.msra.mxu0 %v3940
    %4093 = vmatprep.subr.bf16.mxu0 0
    %4094 = vmatpush1.bf16.msra.mxu0 %v3939
    %4095 = vmatprep.subr.bf16.mxu0 0
    %4096 = vmatpush1.bf16.msra.mxu0 %v3938
    %4097 = vmatprep.subr.bf16.mxu0 0
    %4098 = vmatpush1.bf16.msra.mxu0 %v3937
    %4099 = vmatprep.subr.bf16.mxu0 0
    %4100 = vmatpush1.bf16.msra.mxu0 %v3936
    %4101 = vmatprep.subr.bf16.mxu0 0
    %4102 = vmatpush1.bf16.msra.mxu0 %v3935
    %4103 = vmatprep.subr.bf16.mxu0 0
    %4104 = vmatpush2.bf16.msra.mxu0 %v3950
    %4105 = vmatprep.subr.bf16.mxu0 0
    %4106 = vmatpush2.bf16.msra.mxu0 %v3949
    %4107 = vmatprep.subr.bf16.mxu0 0
    %4108 = vmatpush2.bf16.msra.mxu0 %v3948
    %4109 = vmatprep.subr.bf16.mxu0 0
    %4110 = vmatpush2.bf16.msra.mxu0 %v3947
    %4111 = vmatprep.subr.bf16.mxu0 0
    %4112 = vmatpush2.bf16.msra.mxu0 %v3946
    %4113 = vmatprep.subr.bf16.mxu0 0
    %4114 = vmatpush2.bf16.msra.mxu0 %v3945
    %4115 = vmatprep.subr.bf16.mxu0 0
    %4116 = vmatpush2.bf16.msra.mxu0 %v3944
    %4117 = vmatprep.subr.bf16.mxu0 0
    %4118 = vmatpush2.bf16.msra.mxu0 %v3943
    %4119 = vmatprep.mubr.bf16.mxu0 %v3523
    %4120 = vmatmul.mubr.bf16.gmra.mxu0 %v3522
    %v4121 = vpop.f32.mrf.mxu0
    %v4122 = vadd.f32 %v4082, %v4121
    %v4123 = vpop.f32.mrf.mxu0
    %v4124 = vpop.f32.mrf.mxu0
    %v4125 = vpop.f32.mrf.mxu0
    %4126 = vdwg.mxu0
    %4127 = vmatprep.subr.bf16.mxu0 0
    %4128 = vmatpush1.bf16.msra.mxu0 %v3958
    %4129 = vmatprep.subr.bf16.mxu0 0
    %4130 = vmatpush1.bf16.msra.mxu0 %v3957
    %4131 = vmatprep.subr.bf16.mxu0 0
    %4132 = vmatpush1.bf16.msra.mxu0 %v3956
    %4133 = vmatprep.subr.bf16.mxu0 0
    %4134 = vmatpush1.bf16.msra.mxu0 %v3955
    %4135 = vmatprep.subr.bf16.mxu0 0
    %4136 = vmatpush1.bf16.msra.mxu0 %v3954
    %4137 = vmatprep.subr.bf16.mxu0 0
    %4138 = vmatpush1.bf16.msra.mxu0 %v3953
    %4139 = vmatprep.subr.bf16.mxu0 0
    %4140 = vmatpush1.bf16.msra.mxu0 %v3952
    %4141 = vmatprep.subr.bf16.mxu0 0
    %4142 = vmatpush1.bf16.msra.mxu0 %v3951
    %4143 = vmatprep.subr.bf16.mxu0 0
    %4144 = vmatpush2.bf16.msra.mxu0 %v3966
    %4145 = vmatprep.subr.bf16.mxu0 0
    %4146 = vmatpush2.bf16.msra.mxu0 %v3965
    %4147 = vmatprep.subr.bf16.mxu0 0
    %4148 = vmatpush2.bf16.msra.mxu0 %v3964
    %4149 = vmatprep.subr.bf16.mxu0 0
    %4150 = vmatpush2.bf16.msra.mxu0 %v3963
    %4151 = vmatprep.subr.bf16.mxu0 0
    %4152 = vmatpush2.bf16.msra.mxu0 %v3962
    %4153 = vmatprep.subr.bf16.mxu0 0
    %4154 = vmatpush2.bf16.msra.mxu0 %v3961
    %4155 = vmatprep.subr.bf16.mxu0 0
    %4156 = vmatpush2.bf16.msra.mxu0 %v3960
    %4157 = vmatprep.subr.bf16.mxu0 0
    %4158 = vmatpush2.bf16.msra.mxu0 %v3959
    %4159 = vmatprep.mubr.bf16.mxu0 %v3525
    %4160 = vmatmul.mubr.bf16.gmra.mxu0 %v3524
    %v4161 = vpop.f32.mrf.mxu0
    %v4162 = vadd.f32 %v4122, %v4161
    %v4163 = vpop.f32.mrf.mxu0
    %v4164 = vpop.f32.mrf.mxu0
    %v4165 = vpop.f32.mrf.mxu0
    %4166 = vdwg.mxu0
    %4167 = vmatprep.subr.bf16.mxu0 0
    %4168 = vmatpush1.bf16.msra.mxu0 %v3974
    %4169 = vmatprep.subr.bf16.mxu0 0
    %4170 = vmatpush1.bf16.msra.mxu0 %v3973
    %4171 = vmatprep.subr.bf16.mxu0 0
    %4172 = vmatpush1.bf16.msra.mxu0 %v3972
    %4173 = vmatprep.subr.bf16.mxu0 0
    %4174 = vmatpush1.bf16.msra.mxu0 %v3971
    %4175 = vmatprep.subr.bf16.mxu0 0
    %4176 = vmatpush1.bf16.msra.mxu0 %v3970
    %4177 = vmatprep.subr.bf16.mxu0 0
    %4178 = vmatpush1.bf16.msra.mxu0 %v3969
    %4179 = vmatprep.subr.bf16.mxu0 0
    %4180 = vmatpush1.bf16.msra.mxu0 %v3968
    %4181 = vmatprep.subr.bf16.mxu0 0
    %4182 = vmatpush1.bf16.msra.mxu0 %v3967
    %4183 = vmatprep.subr.bf16.mxu0 0
    %4184 = vmatpush2.bf16.msra.mxu0 %v3982
    %4185 = vmatprep.subr.bf16.mxu0 0
    %4186 = vmatpush2.bf16.msra.mxu0 %v3981
    %4187 = vmatprep.subr.bf16.mxu0 0
    %4188 = vmatpush2.bf16.msra.mxu0 %v3980
    %4189 = vmatprep.subr.bf16.mxu0 0
    %4190 = vmatpush2.bf16.msra.mxu0 %v3979
    %4191 = vmatprep.subr.bf16.mxu0 0
    %4192 = vmatpush2.bf16.msra.mxu0 %v3978
    %4193 = vmatprep.subr.bf16.mxu0 0
    %4194 = vmatpush2.bf16.msra.mxu0 %v3977
    %4195 = vmatprep.subr.bf16.mxu0 0
    %4196 = vmatpush2.bf16.msra.mxu0 %v3976
    %4197 = vmatprep.subr.bf16.mxu0 0
    %4198 = vmatpush2.bf16.msra.mxu0 %v3975
    %4199 = vmatprep.mubr.bf16.mxu0 %v3527
    %4200 = vmatmul.mubr.bf16.gmra.mxu0 %v3526
    %v4201 = vpop.f32.mrf.mxu0
    %v4202 = vadd.f32 %v4162, %v4201
    %v4203 = vpop.f32.mrf.mxu0
    %v4204 = vpop.f32.mrf.mxu0
    %v4205 = vpop.f32.mrf.mxu0
    %4206 = vdwg.mxu0
    %v4207 = vsub.f32 0.0, %v4202
    %v4208 = vmul.f32 %v4207, 1.442695
    %v4209 = vpow.pop %v4208
    %v4210 = vadd.f32 %v4209, 1.0
    %v4211 = vrcp.pop %v4210
    %v4212 = vmul.f32 1.0, %v4211
    %4213 = vst [vmem:[%s17] sm:$0xff] %v4212
    // Predicated region
    $region126: #{generator_forward.1} parent=1 // pred_check
      _
    $region127: #{generator_forward.1} parent=1 // pred_check_branch
      %4215 = sbr.rel (0) target = $region129
    $region128: #{generator_forward.1} parent=1 // pred_region
      _
    $region129: #{generator_forward.1} parent=1 // pred_fallthru
      _
    // Predicated region
    $region130: #{generator_forward.1} parent=1 // pred_check
      _
    $region131: #{generator_forward.1} parent=1 // pred_check_branch
      %4217 = sbr.rel (0) target = $region133
    $region132: #{generator_forward.1} parent=1 // pred_region
      _
    $region133: #{generator_forward.1} parent=1 // pred_fallthru
      _
    %4218 = vsyncpa [#allocation3], 1
    %4219 = vsyncpa [#allocation5], 1
    %4220 = vsyncpa [#allocation8], 1
    %4221 = vsyncpa [#allocation11], 1
    %4222 = vsyncpa [#allocation14], 1
    %4223 = vsyncpa [#allocation17], 1
    %4224 = vsyncpa [#allocation20], 1
    %4225 = vsyncpa [#allocation23], 1

</llo_original>
